<compile_context>
chip_gen: v6e
topology: v6e:2x2x1
jax: 0.10.0
libtpu: 0.0.40
codegen_flags: <defaults>
</compile_context>

<pallas_src>
import functools
import math

import jax
import jax.numpy as jnp
from jax import lax
from jax.experimental import pallas as pl
from jax.experimental.pallas import tpu as pltpu

_NEG_INF = -1e30


# --------------------------------------------------------------------------- small helpers

def _round_up(x, m):
    return (x + m - 1) // m * m


def _nbytes(shape, dtype):
    n = 1
    for s in shape:
        n *= int(s)
    return n * jnp.dtype(dtype).itemsize


def _vmem_limit(block_bytes, scratch_bytes=0):
    # Explicit scoped-VMEM budget: double-buffered blocks + scratch + generous headroom,
    # clamped to [32 MiB, 64 MiB] (v7x physical VMEM is 64 MiB; raises v5e's 16 MiB default).
    need = 2 * block_bytes + scratch_bytes
    return int(min(max(2 * need + (8 << 20), 32 << 20), 64 << 20))


def _bf16(x):
    return x.astype(jnp.bfloat16)


def _layer_norm(x, gamma, beta, d, eps=1e-5):
    inv_d = 1.0 / d
    mu = jnp.sum(x, axis=-1, keepdims=True) * inv_d
    xc = x - mu
    var = jnp.sum(xc * xc, axis=-1, keepdims=True) * inv_d
    return xc * lax.rsqrt(var + eps) * gamma + beta


def _pick_tile(m):
    # Prefer a 128-aligned tile that yields >= 2 grid steps (feeds both v7x TensorCores).
    for t in (512, 256, 128):
        if m % t == 0 and m // t >= 2:
            return t
    for t in (512, 256, 128):
        if m % t == 0:
            return t
    return m


def _pick_b_tile(bs):
    # Batch elements per MHA grid step; keep >= 2 grid steps when possible.
    if bs % 2 == 0 and bs >= 4:
        return 2
    return 1


def _probe_buffered():
    """True iff BlockSpec(pipeline_mode=pl.Buffered(1)) compiles AND is numerically correct."""
    try:
        wspec = pl.BlockSpec((8, 128), lambda i: (0, 0), pipeline_mode=pl.Buffered(1))

        def k(x_ref, w_ref, o_ref):
            o_ref[...] = x_ref[...] + w_ref[...]

        x = jnp.arange(16 * 128, dtype=jnp.float32).reshape(16, 128)
        w = jnp.ones((8, 128), jnp.float32)
        y = pl.pallas_call(
            k, out_shape=jax.ShapeDtypeStruct((16, 128), jnp.float32), grid=(2,),
            in_specs=[pl.BlockSpec((8, 128), lambda i: (i, 0)), wspec],
            out_specs=pl.BlockSpec((8, 128), lambda i: (i, 0)))(x, w)
        return bool(jnp.allclose(y, x + 1.0))
    except Exception:
        return False


_HAS_BUFFERED1 = _probe_buffered()


def _const_spec(shape):
    """BlockSpec for a weight resident across all grid steps (single-buffered when supported)."""
    idx = lambda *args: (0,) * len(shape)
    if _HAS_BUFFERED1:
        return pl.BlockSpec(shape, idx, pipeline_mode=pl.Buffered(1))
    return pl.BlockSpec(shape, idx)


# --------------------------------------------------------------------------- fused MHA kernels

def _mha_core(q_in, k_in, v_in, bias_rows, res_int, res_layer,
              wq_ref, bq_ref, wk_ref, bk_ref, wv_ref, bv_ref, wo_ref, bo_ref,
              lni_g_ref, lni_b_ref, lnl_g_ref, lnl_b_ref, ctx_ref,
              *, h, d_k, d_v, scale, b_tile, nq_pad, nk_pad):
    """Shared MHA body: QKV proj + per-(batch,head) attention + out-proj + internal LN + layer LN."""
    dm = q_in.shape[-1]
    # Projections over the full (b_tile*n) slab -> one big MXU pass each (bf16 ops, f32 acc).
    q = jnp.dot(_bf16(q_in), wq_ref[...], preferred_element_type=jnp.float32) + bq_ref[...]
    k = jnp.dot(_bf16(k_in), wk_ref[...], preferred_element_type=jnp.float32) + bk_ref[...]
    v = jnp.dot(_bf16(v_in), wv_ref[...], preferred_element_type=jnp.float32) + bv_ref[...]

    for b in range(b_tile):                   # static unroll over the batch sub-tile
        qb = q[b * nq_pad:(b + 1) * nq_pad]
        kb = k[b * nk_pad:(b + 1) * nk_pad]
        vb = v[b * nk_pad:(b + 1) * nk_pad]
        bias = bias_rows[b]                   # (1, nk_pad) additive (0 or -1e30)
        for hh in range(h):                   # static unroll; scratch write bounds live ranges
            qh = _bf16(qb[:, hh * d_k:(hh + 1) * d_k])
            kh = _bf16(kb[:, hh * d_k:(hh + 1) * d_k])
            vh = _bf16(vb[:, hh * d_v:(hh + 1) * d_v])
            s = lax.dot_general(qh, kh, (((1,), (1,)), ((), ())),
                                preferred_element_type=jnp.float32) * scale + bias
            m = jnp.max(s, axis=-1, keepdims=True)
            e = jnp.exp(s - m)
            att = _bf16(e * pl.reciprocal(jnp.sum(e, axis=-1, keepdims=True), approx=True))
            # Per-head result goes straight into its ctx slice (no jnp.concatenate over heads).
            ctx_ref[b * nq_pad:(b + 1) * nq_pad, hh * d_v:(hh + 1) * d_v] = jnp.dot(
                att, vh, preferred_element_type=jnp.float32)

    out = jnp.dot(_bf16(ctx_ref[...]), wo_ref[...], preferred_element_type=jnp.float32) + bo_ref[...]
    y1 = _layer_norm(res_int + out, lni_g_ref[...], lni_b_ref[...], dm)     # MHA-internal LN
    y2 = _layer_norm(res_layer + y1, lnl_g_ref[...], lnl_b_ref[...], dm)    # decoder-layer LN
    return y2


def _self_mha_kernel(tgt_ref, pos_ref,
                     wq_ref, bq_ref, wk_ref, bk_ref, wv_ref, bv_ref, wo_ref, bo_ref,
                     lni_g_ref, lni_b_ref, lnl_g_ref, lnl_b_ref,
                     o_ref, ctx_ref, *, h, d_k, d_v, scale, b_tile, nq, nq_pad):
    dm = tgt_ref.shape[-1]
    tgt = tgt_ref[...].reshape(b_tile * nq_pad, dm)
    q_in = tgt + pos_ref[...].reshape(b_tile * nq_pad, dm)      # q = k = tgt + pos_emb (fused)
    # Key-padding mask built in-kernel: reference self-attention is unmasked over the real nq keys,
    # padded key rows must not contribute.
    key_idx = lax.broadcasted_iota(jnp.int32, (b_tile, 1, nq_pad), 2)
    bias_rows = jnp.where(key_idx < nq, 0.0, _NEG_INF).astype(jnp.float32)
    y = _mha_core(q_in, q_in, tgt, bias_rows, q_in, tgt,
                  wq_ref, bq_ref, wk_ref, bk_ref, wv_ref, bv_ref, wo_ref, bo_ref,
                  lni_g_ref, lni_b_ref, lnl_g_ref, lnl_b_ref, ctx_ref,
                  h=h, d_k=d_k, d_v=d_v, scale=scale, b_tile=b_tile,
                  nq_pad=nq_pad, nk_pad=nq_pad)
    o_ref[...] = y.reshape(b_tile, nq_pad, dm).astype(o_ref.dtype)


def _cross_mha_kernel(x_ref, pos_ref, k_ref, v_ref, m_ref,
                      wq_ref, bq_ref, wk_ref, bk_ref, wv_ref, bv_ref, wo_ref, bo_ref,
                      lni_g_ref, lni_b_ref, lnl_g_ref, lnl_b_ref,
                      o_ref, ctx_ref, *, h, d_k, d_v, scale, b_tile, nq_pad, nk_pad):
    dm = x_ref.shape[-1]
    x = x_ref[...].reshape(b_tile * nq_pad, dm)
    q_in = x + pos_ref[...].reshape(b_tile * nq_pad, dm)         # x1p = x1 + pos_emb (fused)
    k_in = k_ref[...].reshape(b_tile * nk_pad, dm)
    v_in = v_ref[...].reshape(b_tile * nk_pad, dm)
    y = _mha_core(q_in, k_in, v_in, m_ref[...], q_in, q_in,
                  wq_ref, bq_ref, wk_ref, bk_ref, wv_ref, bv_ref, wo_ref, bo_ref,
                  lni_g_ref, lni_b_ref, lnl_g_ref, lnl_b_ref, ctx_ref,
                  h=h, d_k=d_k, d_v=d_v, scale=scale, b_tile=b_tile,
                  nq_pad=nq_pad, nk_pad=nk_pad)
    o_ref[...] = y.reshape(b_tile, nq_pad, dm).astype(o_ref.dtype)


def fused_self_mha(p, tgt, pos_emb, ln_g, ln_b, *, h, d_k, d_v, nq, b_tile):
    """Self-attention: MHA(tgt+pos, tgt+pos, tgt) + out-proj + LN(q + .) + LN(tgt + .)."""
    bs, nq_pad, dm = tgt.shape
    hk, hv = h * d_k, h * d_v
    kernel = functools.partial(_self_mha_kernel, h=h, d_k=d_k, d_v=d_v,
                               scale=1.0 / math.sqrt(d_k), b_tile=b_tile, nq=nq, nq_pad=nq_pad)
    act = pl.BlockSpec((b_tile, nq_pad, dm), lambda b: (b, 0, 0))
    in_specs = [act, act,
                _const_spec((dm, hk)), _const_spec((1, hk)),
                _const_spec((dm, hk)), _const_spec((1, hk)),
                _const_spec((dm, hv)), _const_spec((1, hv)),
                _const_spec((hv, dm)), _const_spec((1, dm)),
                _const_spec((1, dm)), _const_spec((1, dm)),
                _const_spec((1, dm)), _const_spec((1, dm))]
    block_bytes = (3 * _nbytes((b_tile, nq_pad, dm), jnp.float32)
                   + 3 * _nbytes((dm, hk), jnp.bfloat16) + _nbytes((hv, dm), jnp.bfloat16)
                   + 8 * _nbytes((1, dm), jnp.float32))
    scratch_bytes = (_nbytes((b_tile * nq_pad, hv), jnp.float32)
                     + 6 * _nbytes((b_tile * nq_pad, max(hk, dm)), jnp.float32))
    return pl.pallas_call(
        kernel,
        out_shape=jax.ShapeDtypeStruct((bs, nq_pad, dm), tgt.dtype),
        grid=(bs // b_tile,),
        in_specs=in_specs,
        out_specs=act,
        scratch_shapes=[pltpu.VMEM((b_tile * nq_pad, hv), jnp.float32)],
        compiler_params=pltpu.CompilerParams(
            dimension_semantics=("parallel",),
            vmem_limit_bytes=_vmem_limit(block_bytes, scratch_bytes)),
    )(tgt, pos_emb,
      p["wq"], p["bq"], p["wk"], p["bk"], p["wv"], p["bv"], p["wo"], p["bo"],
      p["ln_g"], p["ln_b"], ln_g, ln_b)


def fused_cross_mha(p, x, pos_emb, keys, values, mask_bias, ln_g, ln_b, *, h, d_k, d_v, b_tile):
    """Cross-attention: MHA(x+pos_emb, keys, values, mask) + out-proj + LN(q + .) + LN(q + .)."""
    bs, nq_pad, dm = x.shape
    nk_pad = keys.shape[1]
    hk, hv = h * d_k, h * d_v
    kernel = functools.partial(_cross_mha_kernel, h=h, d_k=d_k, d_v=d_v,
                               scale=1.0 / math.sqrt(d_k), b_tile=b_tile,
                               nq_pad=nq_pad, nk_pad=nk_pad)
    q_spec = pl.BlockSpec((b_tile, nq_pad, dm), lambda b: (b, 0, 0))
    kv_spec = pl.BlockSpec((b_tile, nk_pad, dm), lambda b: (b, 0, 0))
    m_spec = pl.BlockSpec((b_tile, 1, nk_pad), lambda b: (b, 0, 0))
    in_specs = [q_spec, q_spec, kv_spec, kv_spec, m_spec,
                _const_spec((dm, hk)), _const_spec((1, hk)),
                _const_spec((dm, hk)), _const_spec((1, hk)),
                _const_spec((dm, hv)), _const_spec((1, hv)),
                _const_spec((hv, dm)), _const_spec((1, dm)),
                _const_spec((1, dm)), _const_spec((1, dm)),
                _const_spec((1, dm)), _const_spec((1, dm))]
    block_bytes = (3 * _nbytes((b_tile, nq_pad, dm), jnp.float32)
                   + 2 * _nbytes((b_tile, nk_pad, dm), jnp.float32)
                   + _nbytes((b_tile, 1, nk_pad), jnp.float32)
                   + 3 * _nbytes((dm, hk), jnp.bfloat16) + _nbytes((hv, dm), jnp.bfloat16)
                   + 8 * _nbytes((1, dm), jnp.float32))
    scratch_bytes = (_nbytes((b_tile * nq_pad, hv), jnp.float32)
                     + 4 * _nbytes((b_tile * nk_pad, max(hk, dm)), jnp.float32))
    return pl.pallas_call(
        kernel,
        out_shape=jax.ShapeDtypeStruct((bs, nq_pad, dm), x.dtype),
        grid=(bs // b_tile,),
        in_specs=in_specs,
        out_specs=q_spec,
        scratch_shapes=[pltpu.VMEM((b_tile * nq_pad, hv), jnp.float32)],
        compiler_params=pltpu.CompilerParams(
            dimension_semantics=("parallel",),
            vmem_limit_bytes=_vmem_limit(block_bytes, scratch_bytes)),
    )(x, pos_emb, keys, values, mask_bias,
      p["wq"], p["bq"], p["wk"], p["bk"], p["wv"], p["bv"], p["wo"], p["bo"],
      p["ln_g"], p["ln_b"], ln_g, ln_b)


# --------------------------------------------------------------------------- fused FFN kernel

def _pwff_kernel(x_ref, w1_ref, b1_ref, w2_ref, b2_ref, g_ref, be_ref, o_ref):
    x = x_ref[...]
    d = x.shape[-1]
    hid = jnp.maximum(
        jnp.dot(_bf16(x), w1_ref[...], preferred_element_type=jnp.float32) + b1_ref[...], 0.0)
    y = jnp.dot(_bf16(hid), w2_ref[...], preferred_element_type=jnp.float32) + b2_ref[...]
    o_ref[...] = _layer_norm(x + y, g_ref[...], be_ref[...], d).astype(o_ref.dtype)


def pallas_pwff(x, w1, b1, w2, b2, gamma, beta):
    """LayerNorm(x + fc2(relu(fc1(x)))).  x: (M, D) with M a multiple of 128."""
    M, D = x.shape
    Dff = w1.shape[1]
    tm = _pick_tile(M)
    block_bytes = (2 * _nbytes((tm, D), jnp.float32)
                   + _nbytes((D, Dff), jnp.bfloat16) + _nbytes((Dff, D), jnp.bfloat16)
                   + _nbytes((1, Dff), jnp.float32) + 3 * _nbytes((1, D), jnp.float32))
    scratch_bytes = 2 * _nbytes((tm, Dff), jnp.float32)
    return pl.pallas_call(
        _pwff_kernel,
        out_shape=jax.ShapeDtypeStruct((M, D), x.dtype),
        grid=(M // tm,),
        in_specs=[pl.BlockSpec((tm, D), lambda i: (i, 0)),
                  _const_spec((D, Dff)), _const_spec((1, Dff)),
                  _const_spec((Dff, D)), _const_spec((1, D)),
                  _const_spec((1, D)), _const_spec((1, D))],
        out_specs=pl.BlockSpec((tm, D), lambda i: (i, 0)),
        compiler_params=pltpu.CompilerParams(
            dimension_semantics=("parallel",),
            vmem_limit_bytes=_vmem_limit(block_bytes, scratch_bytes)),
    )(x, w1, b1, w2, b2, gamma, beta)


# --------------------------------------------------------------------------- fused heads kernel

def _heads_kernel(x_ref, wc_ref, bc_ref, w1_ref, b1_ref, w2_ref, b2_ref, w3_ref, b3_ref, o_ref):
    x = _bf16(x_ref[...])
    logits = jnp.dot(x, wc_ref[...], preferred_element_type=jnp.float32) + bc_ref[...]
    t = jnp.maximum(jnp.dot(x, w1_ref[...], preferred_element_type=jnp.float32) + b1_ref[...], 0.0)
    t = jnp.maximum(jnp.dot(_bf16(t), w2_ref[...], preferred_element_type=jnp.float32) + b2_ref[...], 0.0)
    boxes = jax.nn.sigmoid(jnp.dot(_bf16(t), w3_ref[...], preferred_element_type=jnp.float32) + b3_ref[...])
    o_ref[...] = jnp.concatenate([logits, boxes], axis=-1).astype(o_ref.dtype)   # lane-dense slab


def pallas_heads(x, class_w, class_b, bbox_w, bbox_b):
    """Fused class head + 3-layer bbox MLP (+sigmoid).  Returns (logits, boxes)."""
    M, D = x.shape
    n_cls = class_w.shape[1]
    out_pad = _round_up(n_cls + 4, 128)              # lane-dense 128-multiple output slab
    n_slab = out_pad - 4
    if n_slab > n_cls:                               # zero-pad class columns (sliced off below)
        class_w = jnp.pad(class_w, ((0, 0), (0, n_slab - n_cls)))
        class_b = jnp.pad(class_b, ((0, 0), (0, n_slab - n_cls)))
    dh1 = bbox_w[0].shape[1]
    dh2 = bbox_w[1].shape[1]
    tm = _pick_tile(M)
    block_bytes = (_nbytes((tm, D), jnp.float32) + _nbytes((tm, out_pad), jnp.float32)
                   + _nbytes((D, n_slab), jnp.bfloat16) + _nbytes((D, dh1), jnp.bfloat16)
                   + _nbytes((dh1, dh2), jnp.bfloat16) + _nbytes((dh2, 4), jnp.bfloat16)
                   + _nbytes((1, n_slab), jnp.float32) + 3 * _nbytes((1, max(dh1, dh2)), jnp.float32))
    scratch_bytes = 3 * _nbytes((tm, max(out_pad, dh1)), jnp.float32)
    out = pl.pallas_call(
        _heads_kernel,
        out_shape=jax.ShapeDtypeStruct((M, out_pad), x.dtype),
        grid=(M // tm,),
        in_specs=[pl.BlockSpec((tm, D), lambda i: (i, 0)),
                  _const_spec((D, n_slab)), _const_spec((1, n_slab)),
                  _const_spec((D, dh1)), _const_spec((1, dh1)),
                  _const_spec((dh1, dh2)), _const_spec((1, dh2)),
                  _const_spec((dh2, 4)), _const_spec((1, 4))],
        out_specs=pl.BlockSpec((tm, out_pad), lambda i: (i, 0)),
        compiler_params=pltpu.CompilerParams(
            dimension_semantics=("parallel",),
            vmem_limit_bytes=_vmem_limit(block_bytes, scratch_bytes)),
    )(x, class_w, class_b, bbox_w[0], bbox_b[0], bbox_w[1], bbox_b[1], bbox_w[2], bbox_b[2])
    return out[:, :n_cls], out[:, n_slab:]


# --------------------------------------------------------------------------- model glue

def decoder_layer(p, tgt, pos_emb, enc_plus_pos, enc_output, mask_bias_enc,
                  *, h, d_k, d_v, nq, b_tile):
    bs, nq_pad, dm = tgt.shape
    # self-attention (q = k = tgt + pos formed in-kernel), MHA-internal LN then lnorm1(tgt + .)
    x1 = fused_self_mha(p["self_att"], tgt, pos_emb, p["ln1_g"], p["ln1_b"],
                        h=h, d_k=d_k, d_v=d_v, nq=nq, b_tile=b_tile)
    # cross-attention (x1p = x1 + pos formed in-kernel), MHA-internal LN then lnorm2(x1p + .)
    x2 = fused_cross_mha(p["enc_att"], x1, pos_emb, enc_plus_pos, enc_output, mask_bias_enc,
                         p["ln2_g"], p["ln2_b"], h=h, d_k=d_k, d_v=d_v, b_tile=b_tile)
    ff = pallas_pwff(x2.reshape(-1, dm), p["ff_w1"], p["ff_b1"], p["ff_w2"], p["ff_b2"],
                     p["ff_ln_g"], p["ff_ln_b"]).reshape(bs, nq_pad, dm)
    return ff


def decoder_box_forward(params, encoder_output, mask_encoder, pos, *, h, d_k, d_v):
    """Forward of Decoder_Box (aux_outputs=False). Returns (out_dict, tgt, pos_emb)."""
    bs = pos.shape[0]
    num_queries, d_model = params["query_embed"].shape
    enc_len = encoder_output.shape[1]

    nq_pad = _round_up(num_queries, 128)        # (8,128)-aligned query count
    nk_pad = _round_up(enc_len, 128)            # (8,128)-aligned key count
    b_tile = _pick_b_tile(bs)

    # pos_emb = query_embed.weight.unsqueeze(0).repeat(bs, 1, 1), zero-padded to nq_pad rows
    qe = jnp.pad(params["query_embed"], ((0, nq_pad - num_queries), (0, 0)))
    pos_emb_pad = jnp.broadcast_to(qe[None], (bs, nq_pad, d_model))
    tgt = jnp.zeros((bs, nq_pad, d_model), jnp.float32)

    # additive encoder-attention mask; padded key positions absorb their -1e30 here
    if mask_encoder is not None:
        m2d = mask_encoder.reshape(bs, enc_len)
        bias = jnp.where(m2d, _NEG_INF, 0.0).astype(jnp.float32)
    else:
        bias = jnp.zeros((bs, enc_len), jnp.float32)
    mask_bias_enc = jnp.pad(bias, ((0, 0), (0, nk_pad - enc_len)),
                            constant_values=_NEG_INF)[:, None, :]

    enc_output_pad = jnp.pad(encoder_output, ((0, 0), (0, nk_pad - enc_len), (0, 0)))
    enc_plus_pos = enc_output_pad + jnp.pad(pos, ((0, 0), (0, nk_pad - enc_len), (0, 0)))  # hoisted

    for lp in params["layers"]:
        tgt = decoder_layer(lp, tgt, pos_emb_pad, enc_plus_pos, enc_output_pad, mask_bias_enc,
                            h=h, d_k=d_k, d_v=d_v, nq=num_queries, b_tile=b_tile)

    # aux_outputs=False -> class/bbox heads only on the final layer output.
    flat = tgt.reshape(-1, d_model)
    logits, boxes = pallas_heads(flat, params["class_w"], params["class_b"],
                                 params["bbox_w"], params["bbox_b"])
    n_cls = params["class_w"].shape[1]
    logits = logits.reshape(bs, nq_pad, n_cls)[:, :num_queries]
    boxes = boxes.reshape(bs, nq_pad, 4)[:, :num_queries]
    out = {"pred_logits": logits, "pred_boxes": boxes}
    return out, tgt[:, :num_queries], pos_emb_pad[:, :num_queries]


# --------------------------------------------------------------------------- param init

def _dense(key, din, dout, scale=0.02):
    kw, kb = jax.random.split(key)
    w = (scale * jax.random.normal(kw, (din, dout), jnp.float32)).astype(jnp.bfloat16)  # bf16 in HBM
    b = scale * jax.random.normal(kb, (1, dout), jnp.float32)
    return w, b


def init_mha(key, d_model, d_k, d_v, h):
    ks = jax.random.split(key, 4)
    wq, bq = _dense(ks[0], d_model, h * d_k)
    wk, bk = _dense(ks[1], d_model, h * d_k)
    wv, bv = _dense(ks[2], d_model, h * d_v)
    wo, bo = _dense(ks[3], h * d_v, d_model)
    return dict(wq=wq, bq=bq, wk=wk, bk=bk, wv=wv, bv=bv, wo=wo, bo=bo,
                ln_g=jnp.ones((1, d_model), jnp.float32),
                ln_b=jnp.zeros((1, d_model), jnp.float32))


def init_layer(key, d_model, d_k, d_v, h, d_ff):
    ks = jax.random.split(key, 4)
    w1, b1 = _dense(ks[2], d_model, d_ff)
    w2, b2 = _dense(ks[3], d_ff, d_model)
    return dict(
        self_att=init_mha(ks[0], d_model, d_k, d_v, h),
        enc_att=init_mha(ks[1], d_model, d_k, d_v, h),
        ln1_g=jnp.ones((1, d_model), jnp.float32), ln1_b=jnp.zeros((1, d_model), jnp.float32),
        ln2_g=jnp.ones((1, d_model), jnp.float32), ln2_b=jnp.zeros((1, d_model), jnp.float32),
        ff_w1=w1, ff_b1=b1, ff_w2=w2, ff_b2=b2,
        ff_ln_g=jnp.ones((1, d_model), jnp.float32),
        ff_ln_b=jnp.zeros((1, d_model), jnp.float32),
    )


def init_decoder_box(key, N_dec, d_model, d_k, d_v, h, d_ff, num_queries, num_classes):
    ks = jax.random.split(key, N_dec + 5)
    layers = [init_layer(ks[i], d_model, d_k, d_v, h, d_ff) for i in range(N_dec)]
    query_embed = 0.02 * jax.random.normal(ks[N_dec], (num_queries, d_model), jnp.float32)
    class_w, class_b = _dense(ks[N_dec + 1], d_model, num_classes + 1)
    bw1, bb1 = _dense(ks[N_dec + 2], d_model, d_model)
    bw2, bb2 = _dense(ks[N_dec + 3], d_model, d_model)
    bw3, bb3 = _dense(ks[N_dec + 4], d_model, 4)
    return dict(layers=layers, query_embed=query_embed,
                class_w=class_w, class_b=class_b,
                bbox_w=[bw1, bw2, bw3], bbox_b=[bb1, bb2, bb3])


# --------------------------------------------------------------------------- main

if __name__ == "__main__":
    # small, shape-consistent config (nq / enc_len are padded to 128 inside the wrapper)
    N_dec, d_model, d_k, d_v, h, d_ff = 2, 64, 16, 16, 4, 128
    num_queries, num_classes = 20, 10
    bs, enc_len = 2, 20

    key = jax.random.PRNGKey(0)
    kp, ke, kpos = jax.random.split(key, 3)

    params = init_decoder_box(kp, N_dec, d_model, d_k, d_v, h, d_ff, num_queries, num_classes)

    encoder_output = jax.random.normal(ke, (bs, enc_len, d_model), jnp.float32)
    pos = jax.random.normal(kpos, (bs, enc_len, d_model), jnp.float32)
    # boolean key-padding mask (bs, 1, 1, enc_len): True = masked; last 4 positions padded
    mask_encoder = (jnp.arange(enc_len)[None, None, None, :] >= (enc_len - 4))
    mask_encoder = jnp.broadcast_to(mask_encoder, (bs, 1, 1, enc_len))

    out, tgt, pos_emb = decoder_box_forward(params, encoder_output, mask_encoder, pos,
                                            h=h, d_k=d_k, d_v=d_v)

    jax.block_until_ready((out["pred_logits"], out["pred_boxes"], tgt, pos_emb))

    assert out["pred_logits"].shape == (bs, num_queries, num_classes + 1)
    assert out["pred_boxes"].shape == (bs, num_queries, 4)
    assert tgt.shape == (bs, num_queries, d_model)
    assert pos_emb.shape == (bs, num_queries, d_model)
    assert bool(jnp.all(jnp.isfinite(out["pred_logits"])))
    assert bool(jnp.all((out["pred_boxes"] >= 0) & (out["pred_boxes"] <= 1)))

    print("KERNEL_OK")
</pallas_src>

<mosaic_0001>
module attributes {stable_mosaic.version = 11 : i64} {
  func.func @k(%arg0: i32, %arg1: memref<8x128xf32, #tpu.memory_space<vmem>>, %arg2: memref<8x128xf32, #tpu.memory_space<vmem>>, %arg3: memref<8x128xf32, #tpu.memory_space<vmem>>) attributes {dimension_semantics = [#tpu.dimension_semantics<arbitrary>], iteration_bounds = array<i64: 2>, scalar_prefetch = 0 : i64, scratch_operands = 0 : i64, tpu.core_type = #tpu.core_type<tc>, window_params = [{transform_indices = @transform_0, window_bounds = array<i64: 8, 128>}, {pipeline_mode = #tpu.pipeline_mode<synchronous>, transform_indices = @transform_1, window_bounds = array<i64: 8, 128>}, {transform_indices = @transform_2, window_bounds = array<i64: 8, 128>}]} {
    %c0 = arith.constant 0 : index
    %c0_0 = arith.constant 0 : index
    %0 = vector.load %arg1[%c0, %c0_0] : memref<8x128xf32, #tpu.memory_space<vmem>>, vector<8x128xf32>
    %c0_1 = arith.constant 0 : index
    %c0_2 = arith.constant 0 : index
    %1 = vector.load %arg2[%c0_1, %c0_2] : memref<8x128xf32, #tpu.memory_space<vmem>>, vector<8x128xf32>
    %2 = arith.addf %0, %1 : vector<8x128xf32>
    %c0_3 = arith.constant 0 : index
    %c0_4 = arith.constant 0 : index
    %3 = vector.load %arg3[%c0_3, %c0_4] : memref<8x128xf32, #tpu.memory_space<vmem>>, vector<8x128xf32>
    tpu.vector_store %arg3[%c0_3, %c0_4], %2 {strides = array<i32>} : memref<8x128xf32, #tpu.memory_space<vmem>>, vector<8x128xf32>,
    return
  }
  func.func @transform_0(%arg0: i32) -> (i32, i32) {
    %c0_i32 = arith.constant 0 : i32
    %c0_i32_0 = arith.constant 0 : i32
    return %arg0, %c0_i32 : i32, i32
  }
  func.func @transform_1(%arg0: i32) -> (i32, i32) {
    %c0_i32 = arith.constant 0 : i32
    %c0_i32_0 = arith.constant 0 : i32
    %c0_i32_1 = arith.constant 0 : i32
    return %c0_i32, %c0_i32_0 : i32, i32
  }
  func.func @transform_2(%arg0: i32) -> (i32, i32) {
    %c0_i32 = arith.constant 0 : i32
    %c0_i32_0 = arith.constant 0 : i32
    return %arg0, %c0_i32 : i32, i32
  }
}

module attributes {stable_mosaic.version = 11 : i64} {
  func.func @_self_mha_kernel(%arg0: i32, %arg1: memref<1x128x64xf32, #tpu.memory_space<vmem>>, %arg2: memref<1x128x64xf32, #tpu.memory_space<vmem>>, %arg3: memref<64x64xbf16, #tpu.memory_space<vmem>>, %arg4: memref<1x64xf32, #tpu.memory_space<vmem>>, %arg5: memref<64x64xbf16, #tpu.memory_space<vmem>>, %arg6: memref<1x64xf32, #tpu.memory_space<vmem>>, %arg7: memref<64x64xbf16, #tpu.memory_space<vmem>>, %arg8: memref<1x64xf32, #tpu.memory_space<vmem>>, %arg9: memref<64x64xbf16, #tpu.memory_space<vmem>>, %arg10: memref<1x64xf32, #tpu.memory_space<vmem>>, %arg11: memref<1x64xf32, #tpu.memory_space<vmem>>, %arg12: memref<1x64xf32, #tpu.memory_space<vmem>>, %arg13: memref<1x64xf32, #tpu.memory_space<vmem>>, %arg14: memref<1x64xf32, #tpu.memory_space<vmem>>, %arg15: memref<1x128x64xf32, #tpu.memory_space<vmem>>, %arg16: memref<128x64xf32, #tpu.memory_space<vmem>>) attributes {dimension_semantics = [#tpu.dimension_semantics<parallel>], iteration_bounds = array<i64: 2>, scalar_prefetch = 0 : i64, scratch_operands = 1 : i64, tpu.core_type = #tpu.core_type<tc>, window_params = [{transform_indices = @transform_0, window_bounds = array<i64: 1, 128, 64>}, {transform_indices = @transform_1, window_bounds = array<i64: 1, 128, 64>}, {pipeline_mode = #tpu.pipeline_mode<synchronous>, transform_indices = @transform_2, window_bounds = array<i64: 64, 64>}, {pipeline_mode = #tpu.pipeline_mode<synchronous>, transform_indices = @transform_3, window_bounds = array<i64: 1, 64>}, {pipeline_mode = #tpu.pipeline_mode<synchronous>, transform_indices = @transform_4, window_bounds = array<i64: 64, 64>}, {pipeline_mode = #tpu.pipeline_mode<synchronous>, transform_indices = @transform_5, window_bounds = array<i64: 1, 64>}, {pipeline_mode = #tpu.pipeline_mode<synchronous>, transform_indices = @transform_6, window_bounds = array<i64: 64, 64>}, {pipeline_mode = #tpu.pipeline_mode<synchronous>, transform_indices = @transform_7, window_bounds = array<i64: 1, 64>}, {pipeline_mode = #tpu.pipeline_mode<synchronous>, transform_indices = @transform_8, window_bounds = array<i64: 64, 64>}, {pipeline_mode = #tpu.pipeline_mode<synchronous>, transform_indices = @transform_9, window_bounds = array<i64: 1, 64>}, {pipeline_mode = #tpu.pipeline_mode<synchronous>, transform_indices = @transform_10, window_bounds = array<i64: 1, 64>}, {pipeline_mode = #tpu.pipeline_mode<synchronous>, transform_indices = @transform_11, window_bounds = array<i64: 1, 64>}, {pipeline_mode = #tpu.pipeline_mode<synchronous>, transform_indices = @transform_12, window_bounds = array<i64: 1, 64>}, {pipeline_mode = #tpu.pipeline_mode<synchronous>, transform_indices = @transform_13, window_bounds = array<i64: 1, 64>}, {transform_indices = @transform_14, window_bounds = array<i64: 1, 128, 64>}]} {
    %c0 = arith.constant 0 : index
    %c0_0 = arith.constant 0 : index
    %c0_1 = arith.constant 0 : index
    %0 = vector.load %arg1[%c0, %c0_0, %c0_1] : memref<1x128x64xf32, #tpu.memory_space<vmem>>, vector<1x128x64xf32>
    %1 = vector.shape_cast %0 : vector<1x128x64xf32> to vector<128x64xf32>
    %c0_2 = arith.constant 0 : index
    %c0_3 = arith.constant 0 : index
    %c0_4 = arith.constant 0 : index
    %2 = vector.load %arg2[%c0_2, %c0_3, %c0_4] : memref<1x128x64xf32, #tpu.memory_space<vmem>>, vector<1x128x64xf32>
    %3 = vector.shape_cast %2 : vector<1x128x64xf32> to vector<128x64xf32>
    %4 = arith.addf %1, %3 : vector<128x64xf32>
    %5 = tpu.iota {dimensions = array<i32: 2>} : vector<1x1x128xi32>
    %c20_i32 = arith.constant 20 : i32
    %6 = vector.broadcast %c20_i32 : i32 to vector<1x1x128xi32>
    %7 = arith.cmpi slt, %5, %6 : vector<1x1x128xi32>
    %cst = arith.constant 0.000000e+00 : f32
    %cst_5 = arith.constant -1.000000e+30 : f32
    %8 = vector.broadcast %cst : f32 to vector<1x1x128xf32>
    %9 = vector.broadcast %cst_5 : f32 to vector<1x1x128xf32>
    %10 = arith.select %7, %8, %9 : vector<1x1x128xi1>, vector<1x1x128xf32>
    %11 = arith.truncf %4 : vector<128x64xf32> to vector<128x64xbf16>
    %c0_6 = arith.constant 0 : index
    %c0_7 = arith.constant 0 : index
    %12 = vector.load %arg3[%c0_6, %c0_7] : memref<64x64xbf16, #tpu.memory_space<vmem>>, vector<64x64xbf16>
    %cst_8 = arith.constant dense<0.000000e+00> : vector<128x64xf32>
    %13 = tpu.matmul %11, %12, %cst_8 {dimension_numbers = #tpu.dot_dimension_numbers<[1], [0], [0], [1], [0, 0, 1, 1], [], []>} : vector<128x64xbf16>, vector<64x64xbf16>, vector<128x64xf32> -> vector<128x64xf32>
    %c0_9 = arith.constant 0 : index
    %c0_10 = arith.constant 0 : index
    %14 = vector.load %arg4[%c0_9, %c0_10] : memref<1x64xf32, #tpu.memory_space<vmem>>, vector<1x64xf32>
    %15 = vector.broadcast %14 : vector<1x64xf32> to vector<128x64xf32>
    %16 = arith.addf %13, %15 : vector<128x64xf32>
    %17 = arith.truncf %4 : vector<128x64xf32> to vector<128x64xbf16>
    %c0_11 = arith.constant 0 : index
    %c0_12 = arith.constant 0 : index
    %18 = vector.load %arg5[%c0_11, %c0_12] : memref<64x64xbf16, #tpu.memory_space<vmem>>, vector<64x64xbf16>
    %cst_13 = arith.constant dense<0.000000e+00> : vector<128x64xf32>
    %19 = tpu.matmul %17, %18, %cst_13 {dimension_numbers = #tpu.dot_dimension_numbers<[1], [0], [0], [1], [0, 0, 1, 1], [], []>} : vector<128x64xbf16>, vector<64x64xbf16>, vector<128x64xf32> -> vector<128x64xf32>
    %c0_14 = arith.constant 0 : index
    %c0_15 = arith.constant 0 : index
    %20 = vector.load %arg6[%c0_14, %c0_15] : memref<1x64xf32, #tpu.memory_space<vmem>>, vector<1x64xf32>
    %21 = vector.broadcast %20 : vector<1x64xf32> to vector<128x64xf32>
    %22 = arith.addf %19, %21 : vector<128x64xf32>
    %23 = arith.truncf %1 : vector<128x64xf32> to vector<128x64xbf16>
    %c0_16 = arith.constant 0 : index
    %c0_17 = arith.constant 0 : index
    %24 = vector.load %arg7[%c0_16, %c0_17] : memref<64x64xbf16, #tpu.memory_space<vmem>>, vector<64x64xbf16>
    %cst_18 = arith.constant dense<0.000000e+00> : vector<128x64xf32>
    %25 = tpu.matmul %23, %24, %cst_18 {dimension_numbers = #tpu.dot_dimension_numbers<[1], [0], [0], [1], [0, 0, 1, 1], [], []>} : vector<128x64xbf16>, vector<64x64xbf16>, vector<128x64xf32> -> vector<128x64xf32>
    %c0_19 = arith.constant 0 : index
    %c0_20 = arith.constant 0 : index
    %26 = vector.load %arg8[%c0_19, %c0_20] : memref<1x64xf32, #tpu.memory_space<vmem>>, vector<1x64xf32>
    %27 = vector.broadcast %26 : vector<1x64xf32> to vector<128x64xf32>
    %28 = arith.addf %25, %27 : vector<128x64xf32>
    %29 = vector.shape_cast %10 : vector<1x1x128xf32> to vector<1x128xf32>
    %30 = vector.extract_strided_slice %16 {offsets = [0, 0], sizes = [128, 16], strides = [1, 1]} : vector<128x64xf32> to vector<128x16xf32>
    %31 = arith.truncf %30 : vector<128x16xf32> to vector<128x16xbf16>
    %32 = vector.extract_strided_slice %22 {offsets = [0, 0], sizes = [128, 16], strides = [1, 1]} : vector<128x64xf32> to vector<128x16xf32>
    %33 = arith.truncf %32 : vector<128x16xf32> to vector<128x16xbf16>
    %34 = vector.extract_strided_slice %28 {offsets = [0, 0], sizes = [128, 16], strides = [1, 1]} : vector<128x64xf32> to vector<128x16xf32>
    %35 = arith.truncf %34 : vector<128x16xf32> to vector<128x16xbf16>
    %cst_21 = arith.constant dense<0.000000e+00> : vector<128x128xf32>
    %36 = tpu.matmul %31, %33, %cst_21 {dimension_numbers = #tpu.dot_dimension_numbers<[1], [1], [0], [0], [0, 0, 1, 0], [], []>} : vector<128x16xbf16>, vector<128x16xbf16>, vector<128x128xf32> -> vector<128x128xf32>
    %cst_22 = arith.constant 2.500000e-01 : f32
    %37 = vector.broadcast %cst_22 : f32 to vector<128x128xf32>
    %38 = arith.mulf %36, %37 : vector<128x128xf32>
    %39 = vector.broadcast %29 : vector<1x128xf32> to vector<128x128xf32>
    %40 = arith.addf %38, %39 : vector<128x128xf32>
    %cst_23 = arith.constant dense<0xFF800000> : vector<128xf32>
    %41 = vector.multi_reduction <maximumf>, %40, %cst_23 [1] : vector<128x128xf32> to vector<128xf32>
    %42 = vector.shape_cast %41 : vector<128xf32> to vector<128x1xf32>
    %43 = vector.broadcast %42 : vector<128x1xf32> to vector<128x128xf32>
    %44 = arith.subf %40, %43 : vector<128x128xf32>
    %45 = math.exp %44 : vector<128x128xf32>
    %cst_24 = arith.constant dense<0.000000e+00> : vector<128xf32>
    %46 = vector.multi_reduction <add>, %45, %cst_24 [1] : vector<128x128xf32> to vector<128xf32>
    %47 = vector.shape_cast %46 : vector<128xf32> to vector<128x1xf32>
    %48 = tpu.reciprocal %47 {approx = true} : vector<128x1xf32> -> vector<128x1xf32>
    %49 = vector.broadcast %48 : vector<128x1xf32> to vector<128x128xf32>
    %50 = arith.mulf %45, %49 : vector<128x128xf32>
    %51 = arith.truncf %50 : vector<128x128xf32> to vector<128x128xbf16>
    %cst_25 = arith.constant dense<0.000000e+00> : vector<128x16xf32>
    %52 = tpu.matmul %51, %35, %cst_25 {dimension_numbers = #tpu.dot_dimension_numbers<[1], [0], [0], [1], [0, 0, 1, 1], [], []>} : vector<128x128xbf16>, vector<128x16xbf16>, vector<128x16xf32> -> vector<128x16xf32>
    %c0_26 = arith.constant 0 : index
    %c0_27 = arith.constant 0 : index
    %53 = vector.load %arg16[%c0_26, %c0_27] : memref<128x64xf32, #tpu.memory_space<vmem>>, vector<128x16xf32>
    tpu.vector_store %arg16[%c0_26, %c0_27], %52 {strides = array<i32>} : memref<128x64xf32, #tpu.memory_space<vmem>>, vector<128x16xf32>,
    %54 = vector.extract_strided_slice %16 {offsets = [0, 16], sizes = [128, 16], strides = [1, 1]} : vector<128x64xf32> to vector<128x16xf32>
    %55 = arith.truncf %54 : vector<128x16xf32> to vector<128x16xbf16>
    %56 = vector.extract_strided_slice %22 {offsets = [0, 16], sizes = [128, 16], strides = [1, 1]} : vector<128x64xf32> to vector<128x16xf32>
    %57 = arith.truncf %56 : vector<128x16xf32> to vector<128x16xbf16>
    %58 = vector.extract_strided_slice %28 {offsets = [0, 16], sizes = [128, 16], strides = [1, 1]} : vector<128x64xf32> to vector<128x16xf32>
    %59 = arith.truncf %58 : vector<128x16xf32> to vector<128x16xbf16>
    %cst_28 = arith.constant dense<0.000000e+00> : vector<128x128xf32>
    %60 = tpu.matmul %55, %57, %cst_28 {dimension_numbers = #tpu.dot_dimension_numbers<[1], [1], [0], [0], [0, 0, 1, 0], [], []>} : vector<128x16xbf16>, vector<128x16xbf16>, vector<128x128xf32> -> vector<128x128xf32>
    %cst_29 = arith.constant 2.500000e-01 : f32
    %61 = vector.broadcast %cst_29 : f32 to vector<128x128xf32>
    %62 = arith.mulf %60, %61 : vector<128x128xf32>
    %63 = vector.broadcast %29 : vector<1x128xf32> to vector<128x128xf32>
    %64 = arith.addf %62, %63 : vector<128x128xf32>
    %cst_30 = arith.constant dense<0xFF800000> : vector<128xf32>
    %65 = vector.multi_reduction <maximumf>, %64, %cst_30 [1] : vector<128x128xf32> to vector<128xf32>
    %66 = vector.shape_cast %65 : vector<128xf32> to vector<128x1xf32>
    %67 = vector.broadcast %66 : vector<128x1xf32> to vector<128x128xf32>
    %68 = arith.subf %64, %67 : vector<128x128xf32>
    %69 = math.exp %68 : vector<128x128xf32>
    %cst_31 = arith.constant dense<0.000000e+00> : vector<128xf32>
    %70 = vector.multi_reduction <add>, %69, %cst_31 [1] : vector<128x128xf32> to vector<128xf32>
    %71 = vector.shape_cast %70 : vector<128xf32> to vector<128x1xf32>
    %72 = tpu.reciprocal %71 {approx = true} : vector<128x1xf32> -> vector<128x1xf32>
    %73 = vector.broadcast %72 : vector<128x1xf32> to vector<128x128xf32>
    %74 = arith.mulf %69, %73 : vector<128x128xf32>
    %75 = arith.truncf %74 : vector<128x128xf32> to vector<128x128xbf16>
    %cst_32 = arith.constant dense<0.000000e+00> : vector<128x16xf32>
    %76 = tpu.matmul %75, %59, %cst_32 {dimension_numbers = #tpu.dot_dimension_numbers<[1], [0], [0], [1], [0, 0, 1, 1], [], []>} : vector<128x128xbf16>, vector<128x16xbf16>, vector<128x16xf32> -> vector<128x16xf32>
    %c0_33 = arith.constant 0 : index
    %c16 = arith.constant 16 : index
    %77 = vector.load %arg16[%c0_33, %c16] : memref<128x64xf32, #tpu.memory_space<vmem>>, vector<128x16xf32>
    tpu.vector_store %arg16[%c0_33, %c16], %76 {strides = array<i32>} : memref<128x64xf32, #tpu.memory_space<vmem>>, vector<128x16xf32>,
    %78 = vector.extract_strided_slice %16 {offsets = [0, 32], sizes = [128, 16], strides = [1, 1]} : vector<128x64xf32> to vector<128x16xf32>
    %79 = arith.truncf %78 : vector<128x16xf32> to vector<128x16xbf16>
    %80 = vector.extract_strided_slice %22 {offsets = [0, 32], sizes = [128, 16], strides = [1, 1]} : vector<128x64xf32> to vector<128x16xf32>
    %81 = arith.truncf %80 : vector<128x16xf32> to vector<128x16xbf16>
    %82 = vector.extract_strided_slice %28 {offsets = [0, 32], sizes = [128, 16], strides = [1, 1]} : vector<128x64xf32> to vector<128x16xf32>
    %83 = arith.truncf %82 : vector<128x16xf32> to vector<128x16xbf16>
    %cst_34 = arith.constant dense<0.000000e+00> : vector<128x128xf32>
    %84 = tpu.matmul %79, %81, %cst_34 {dimension_numbers = #tpu.dot_dimension_numbers<[1], [1], [0], [0], [0, 0, 1, 0], [], []>} : vector<128x16xbf16>, vector<128x16xbf16>, vector<128x128xf32> -> vector<128x128xf32>
    %cst_35 = arith.constant 2.500000e-01 : f32
    %85 = vector.broadcast %cst_35 : f32 to vector<128x128xf32>
    %86 = arith.mulf %84, %85 : vector<128x128xf32>
    %87 = vector.broadcast %29 : vector<1x128xf32> to vector<128x128xf32>
    %88 = arith.addf %86, %87 : vector<128x128xf32>
    %cst_36 = arith.constant dense<0xFF800000> : vector<128xf32>
    %89 = vector.multi_reduction <maximumf>, %88, %cst_36 [1] : vector<128x128xf32> to vector<128xf32>
    %90 = vector.shape_cast %89 : vector<128xf32> to vector<128x1xf32>
    %91 = vector.broadcast %90 : vector<128x1xf32> to vector<128x128xf32>
    %92 = arith.subf %88, %91 : vector<128x128xf32>
    %93 = math.exp %92 : vector<128x128xf32>
    %cst_37 = arith.constant dense<0.000000e+00> : vector<128xf32>
    %94 = vector.multi_reduction <add>, %93, %cst_37 [1] : vector<128x128xf32> to vector<128xf32>
    %95 = vector.shape_cast %94 : vector<128xf32> to vector<128x1xf32>
    %96 = tpu.reciprocal %95 {approx = true} : vector<128x1xf32> -> vector<128x1xf32>
    %97 = vector.broadcast %96 : vector<128x1xf32> to vector<128x128xf32>
    %98 = arith.mulf %93, %97 : vector<128x128xf32>
    %99 = arith.truncf %98 : vector<128x128xf32> to vector<128x128xbf16>
    %cst_38 = arith.constant dense<0.000000e+00> : vector<128x16xf32>
    %100 = tpu.matmul %99, %83, %cst_38 {dimension_numbers = #tpu.dot_dimension_numbers<[1], [0], [0], [1], [0, 0, 1, 1], [], []>} : vector<128x128xbf16>, vector<128x16xbf16>, vector<128x16xf32> -> vector<128x16xf32>
    %c0_39 = arith.constant 0 : index
    %c32 = arith.constant 32 : index
    %101 = vector.load %arg16[%c0_39, %c32] : memref<128x64xf32, #tpu.memory_space<vmem>>, vector<128x16xf32>
    tpu.vector_store %arg16[%c0_39, %c32], %100 {strides = array<i32>} : memref<128x64xf32, #tpu.memory_space<vmem>>, vector<128x16xf32>,
    %102 = vector.extract_strided_slice %16 {offsets = [0, 48], sizes = [128, 16], strides = [1, 1]} : vector<128x64xf32> to vector<128x16xf32>
    %103 = arith.truncf %102 : vector<128x16xf32> to vector<128x16xbf16>
    %104 = vector.extract_strided_slice %22 {offsets = [0, 48], sizes = [128, 16], strides = [1, 1]} : vector<128x64xf32> to vector<128x16xf32>
    %105 = arith.truncf %104 : vector<128x16xf32> to vector<128x16xbf16>
    %106 = vector.extract_strided_slice %28 {offsets = [0, 48], sizes = [128, 16], strides = [1, 1]} : vector<128x64xf32> to vector<128x16xf32>
    %107 = arith.truncf %106 : vector<128x16xf32> to vector<128x16xbf16>
    %cst_40 = arith.constant dense<0.000000e+00> : vector<128x128xf32>
    %108 = tpu.matmul %103, %105, %cst_40 {dimension_numbers = #tpu.dot_dimension_numbers<[1], [1], [0], [0], [0, 0, 1, 0], [], []>} : vector<128x16xbf16>, vector<128x16xbf16>, vector<128x128xf32> -> vector<128x128xf32>
    %cst_41 = arith.constant 2.500000e-01 : f32
    %109 = vector.broadcast %cst_41 : f32 to vector<128x128xf32>
    %110 = arith.mulf %108, %109 : vector<128x128xf32>
    %111 = vector.broadcast %29 : vector<1x128xf32> to vector<128x128xf32>
    %112 = arith.addf %110, %111 : vector<128x128xf32>
    %cst_42 = arith.constant dense<0xFF800000> : vector<128xf32>
    %113 = vector.multi_reduction <maximumf>, %112, %cst_42 [1] : vector<128x128xf32> to vector<128xf32>
    %114 = vector.shape_cast %113 : vector<128xf32> to vector<128x1xf32>
    %115 = vector.broadcast %114 : vector<128x1xf32> to vector<128x128xf32>
    %116 = arith.subf %112, %115 : vector<128x128xf32>
    %117 = math.exp %116 : vector<128x128xf32>
    %cst_43 = arith.constant dense<0.000000e+00> : vector<128xf32>
    %118 = vector.multi_reduction <add>, %117, %cst_43 [1] : vector<128x128xf32> to vector<128xf32>
    %119 = vector.shape_cast %118 : vector<128xf32> to vector<128x1xf32>
    %120 = tpu.reciprocal %119 {approx = true} : vector<128x1xf32> -> vector<128x1xf32>
    %121 = vector.broadcast %120 : vector<128x1xf32> to vector<128x128xf32>
    %122 = arith.mulf %117, %121 : vector<128x128xf32>
    %123 = arith.truncf %122 : vector<128x128xf32> to vector<128x128xbf16>
    %cst_44 = arith.constant dense<0.000000e+00> : vector<128x16xf32>
    %124 = tpu.matmul %123, %107, %cst_44 {dimension_numbers = #tpu.dot_dimension_numbers<[1], [0], [0], [1], [0, 0, 1, 1], [], []>} : vector<128x128xbf16>, vector<128x16xbf16>, vector<128x16xf32> -> vector<128x16xf32>
    %c0_45 = arith.constant 0 : index
    %c48 = arith.constant 48 : index
    %125 = vector.load %arg16[%c0_45, %c48] : memref<128x64xf32, #tpu.memory_space<vmem>>, vector<128x16xf32>
    tpu.vector_store %arg16[%c0_45, %c48], %124 {strides = array<i32>} : memref<128x64xf32, #tpu.memory_space<vmem>>, vector<128x16xf32>,
    %c0_46 = arith.constant 0 : index
    %c0_47 = arith.constant 0 : index
    %126 = vector.load %arg16[%c0_46, %c0_47] : memref<128x64xf32, #tpu.memory_space<vmem>>, vector<128x64xf32>
    %127 = arith.truncf %126 : vector<128x64xf32> to vector<128x64xbf16>
    %c0_48 = arith.constant 0 : index
    %c0_49 = arith.constant 0 : index
    %128 = vector.load %arg9[%c0_48, %c0_49] : memref<64x64xbf16, #tpu.memory_space<vmem>>, vector<64x64xbf16>
    %cst_50 = arith.constant dense<0.000000e+00> : vector<128x64xf32>
    %129 = tpu.matmul %127, %128, %cst_50 {dimension_numbers = #tpu.dot_dimension_numbers<[1], [0], [0], [1], [0, 0, 1, 1], [], []>} : vector<128x64xbf16>, vector<64x64xbf16>, vector<128x64xf32> -> vector<128x64xf32>
    %c0_51 = arith.constant 0 : index
    %c0_52 = arith.constant 0 : index
    %130 = vector.load %arg10[%c0_51, %c0_52] : memref<1x64xf32, #tpu.memory_space<vmem>>, vector<1x64xf32>
    %131 = vector.broadcast %130 : vector<1x64xf32> to vector<128x64xf32>
    %132 = arith.addf %129, %131 : vector<128x64xf32>
    %133 = arith.addf %4, %132 : vector<128x64xf32>
    %c0_53 = arith.constant 0 : index
    %c0_54 = arith.constant 0 : index
    %134 = vector.load %arg11[%c0_53, %c0_54] : memref<1x64xf32, #tpu.memory_space<vmem>>, vector<1x64xf32>
    %c0_55 = arith.constant 0 : index
    %c0_56 = arith.constant 0 : index
    %135 = vector.load %arg12[%c0_55, %c0_56] : memref<1x64xf32, #tpu.memory_space<vmem>>, vector<1x64xf32>
    %cst_57 = arith.constant dense<0.000000e+00> : vector<128xf32>
    %136 = vector.multi_reduction <add>, %133, %cst_57 [1] : vector<128x64xf32> to vector<128xf32>
    %137 = vector.shape_cast %136 : vector<128xf32> to vector<128x1xf32>
    %cst_58 = arith.constant 1.562500e-02 : f32
    %138 = vector.broadcast %cst_58 : f32 to vector<128x1xf32>
    %139 = arith.mulf %137, %138 : vector<128x1xf32>
    %140 = vector.broadcast %139 : vector<128x1xf32> to vector<128x64xf32>
    %141 = arith.subf %133, %140 : vector<128x64xf32>
    %142 = arith.mulf %141, %141 : vector<128x64xf32>
    %cst_59 = arith.constant dense<0.000000e+00> : vector<128xf32>
    %143 = vector.multi_reduction <add>, %142, %cst_59 [1] : vector<128x64xf32> to vector<128xf32>
    %144 = vector.shape_cast %143 : vector<128xf32> to vector<128x1xf32>
    %cst_60 = arith.constant 1.562500e-02 : f32
    %145 = vector.broadcast %cst_60 : f32 to vector<128x1xf32>
    %146 = arith.mulf %144, %145 : vector<128x1xf32>
    %cst_61 = arith.constant 9.99999974E-6 : f32
    %147 = vector.broadcast %cst_61 : f32 to vector<128x1xf32>
    %148 = arith.addf %146, %147 : vector<128x1xf32>
    %149 = math.rsqrt %148 : vector<128x1xf32>
    %150 = vector.broadcast %149 : vector<128x1xf32> to vector<128x64xf32>
    %151 = arith.mulf %141, %150 : vector<128x64xf32>
    %152 = vector.broadcast %134 : vector<1x64xf32> to vector<128x64xf32>
    %153 = arith.mulf %151, %152 : vector<128x64xf32>
    %154 = vector.broadcast %135 : vector<1x64xf32> to vector<128x64xf32>
    %155 = arith.addf %153, %154 : vector<128x64xf32>
    %156 = arith.addf %1, %155 : vector<128x64xf32>
    %c0_62 = arith.constant 0 : index
    %c0_63 = arith.constant 0 : index
    %157 = vector.load %arg13[%c0_62, %c0_63] : memref<1x64xf32, #tpu.memory_space<vmem>>, vector<1x64xf32>
    %c0_64 = arith.constant 0 : index
    %c0_65 = arith.constant 0 : index
    %158 = vector.load %arg14[%c0_64, %c0_65] : memref<1x64xf32, #tpu.memory_space<vmem>>, vector<1x64xf32>
    %cst_66 = arith.constant dense<0.000000e+00> : vector<128xf32>
    %159 = vector.multi_reduction <add>, %156, %cst_66 [1] : vector<128x64xf32> to vector<128xf32>
    %160 = vector.shape_cast %159 : vector<128xf32> to vector<128x1xf32>
    %cst_67 = arith.constant 1.562500e-02 : f32
    %161 = vector.broadcast %cst_67 : f32 to vector<128x1xf32>
    %162 = arith.mulf %160, %161 : vector<128x1xf32>
    %163 = vector.broadcast %162 : vector<128x1xf32> to vector<128x64xf32>
    %164 = arith.subf %156, %163 : vector<128x64xf32>
    %165 = arith.mulf %164, %164 : vector<128x64xf32>
    %cst_68 = arith.constant dense<0.000000e+00> : vector<128xf32>
    %166 = vector.multi_reduction <add>, %165, %cst_68 [1] : vector<128x64xf32> to vector<128xf32>
    %167 = vector.shape_cast %166 : vector<128xf32> to vector<128x1xf32>
    %cst_69 = arith.constant 1.562500e-02 : f32
    %168 = vector.broadcast %cst_69 : f32 to vector<128x1xf32>
    %169 = arith.mulf %167, %168 : vector<128x1xf32>
    %cst_70 = arith.constant 9.99999974E-6 : f32
    %170 = vector.broadcast %cst_70 : f32 to vector<128x1xf32>
    %171 = arith.addf %169, %170 : vector<128x1xf32>
    %172 = math.rsqrt %171 : vector<128x1xf32>
    %173 = vector.broadcast %172 : vector<128x1xf32> to vector<128x64xf32>
    %174 = arith.mulf %164, %173 : vector<128x64xf32>
    %175 = vector.broadcast %157 : vector<1x64xf32> to vector<128x64xf32>
    %176 = arith.mulf %174, %175 : vector<128x64xf32>
    %177 = vector.broadcast %158 : vector<1x64xf32> to vector<128x64xf32>
    %178 = arith.addf %176, %177 : vector<128x64xf32>
    %179 = vector.shape_cast %178 : vector<128x64xf32> to vector<1x128x64xf32>
    %c0_71 = arith.constant 0 : index
    %c0_72 = arith.constant 0 : index
    %c0_73 = arith.constant 0 : index
    %180 = vector.load %arg15[%c0_71, %c0_72, %c0_73] : memref<1x128x64xf32, #tpu.memory_space<vmem>>, vector<1x128x64xf32>
    tpu.vector_store %arg15[%c0_71, %c0_72, %c0_73], %179 {strides = array<i32>} : memref<1x128x64xf32, #tpu.memory_space<vmem>>, vector<1x128x64xf32>,
    return
  }
  func.func @transform_0(%arg0: i32) -> (i32, i32, i32) {
    %c0_i32 = arith.constant 0 : i32
    %c0_i32_0 = arith.constant 0 : i32
    %c0_i32_1 = arith.constant 0 : i32
    return %arg0, %c0_i32, %c0_i32_0 : i32, i32, i32
  }
  func.func @transform_1(%arg0: i32) -> (i32, i32, i32) {
    %c0_i32 = arith.constant 0 : i32
    %c0_i32_0 = arith.constant 0 : i32
    %c0_i32_1 = arith.constant 0 : i32
    return %arg0, %c0_i32, %c0_i32_0 : i32, i32, i32
  }
  func.func @transform_2(%arg0: i32) -> (i32, i32) {
    %c0_i32 = arith.constant 0 : i32
    %c0_i32_0 = arith.constant 0 : i32
    %c0_i32_1 = arith.constant 0 : i32
    return %c0_i32, %c0_i32_0 : i32, i32
  }
  func.func @transform_3(%arg0: i32) -> (i32, i32) {
    %c0_i32 = arith.constant 0 : i32
    %c0_i32_0 = arith.constant 0 : i32
    %c0_i32_1 = arith.constant 0 : i32
    return %c0_i32, %c0_i32_0 : i32, i32
  }
  func.func @transform_4(%arg0: i32) -> (i32, i32) {
    %c0_i32 = arith.constant 0 : i32
    %c0_i32_0 = arith.constant 0 : i32
    %c0_i32_1 = arith.constant 0 : i32
    return %c0_i32, %c0_i32_0 : i32, i32
  }
  func.func @transform_5(%arg0: i32) -> (i32, i32) {
    %c0_i32 = arith.constant 0 : i32
    %c0_i32_0 = arith.constant 0 : i32
    %c0_i32_1 = arith.constant 0 : i32
    return %c0_i32, %c0_i32_0 : i32, i32
  }
  func.func @transform_6(%arg0: i32) -> (i32, i32) {
    %c0_i32 = arith.constant 0 : i32
    %c0_i32_0 = arith.constant 0 : i32
    %c0_i32_1 = arith.constant 0 : i32
    return %c0_i32, %c0_i32_0 : i32, i32
  }
  func.func @transform_7(%arg0: i32) -> (i32, i32) {
    %c0_i32 = arith.constant 0 : i32
    %c0_i32_0 = arith.constant 0 : i32
    %c0_i32_1 = arith.constant 0 : i32
    return %c0_i32, %c0_i32_0 : i32, i32
  }
  func.func @transform_8(%arg0: i32) -> (i32, i32) {
    %c0_i32 = arith.constant 0 : i32
    %c0_i32_0 = arith.constant 0 : i32
    %c0_i32_1 = arith.constant 0 : i32
    return %c0_i32, %c0_i32_0 : i32, i32
  }
  func.func @transform_9(%arg0: i32) -> (i32, i32) {
    %c0_i32 = arith.constant 0 : i32
    %c0_i32_0 = arith.constant 0 : i32
    %c0_i32_1 = arith.constant 0 : i32
    return %c0_i32, %c0_i32_0 : i32, i32
  }
  func.func @transform_10(%arg0: i32) -> (i32, i32) {
    %c0_i32 = arith.constant 0 : i32
    %c0_i32_0 = arith.constant 0 : i32
    %c0_i32_1 = arith.constant 0 : i32
    return %c0_i32, %c0_i32_0 : i32, i32
  }
  func.func @transform_11(%arg0: i32) -> (i32, i32) {
    %c0_i32 = arith.constant 0 : i32
    %c0_i32_0 = arith.constant 0 : i32
    %c0_i32_1 = arith.constant 0 : i32
    return %c0_i32, %c0_i32_0 : i32, i32
  }
  func.func @transform_12(%arg0: i32) -> (i32, i32) {
    %c0_i32 = arith.constant 0 : i32
    %c0_i32_0 = arith.constant 0 : i32
    %c0_i32_1 = arith.constant 0 : i32
    return %c0_i32, %c0_i32_0 : i32, i32
  }
  func.func @transform_13(%arg0: i32) -> (i32, i32) {
    %c0_i32 = arith.constant 0 : i32
    %c0_i32_0 = arith.constant 0 : i32
    %c0_i32_1 = arith.constant 0 : i32
    return %c0_i32, %c0_i32_0 : i32, i32
  }
  func.func @transform_14(%arg0: i32) -> (i32, i32, i32) {
    %c0_i32 = arith.constant 0 : i32
    %c0_i32_0 = arith.constant 0 : i32
    %c0_i32_1 = arith.constant 0 : i32
    return %arg0, %c0_i32, %c0_i32_0 : i32, i32, i32
  }
}

</mosaic_0001>

<llo_original>
// kernel: tpu_custom_call.1
$region0: #{tpu_custom_call.1}
  #allocation0 [shape = 'u32[]', space=smem, size = 0x4, offset = 0x4, fixed_abs, tag = 'smem constant byte address 0x4 - core index']
  #allocation1 [shape = 'u32[144,128]{1,0:T(1,128)}', space=vmem, size = 0x12000, scoped, tag = 'internal scratch']
  %s0 = inlined_call_operand.hbm [shape: f32[16,128], index: 0, kind: input, shape index: {}]
  %s1 = inlined_call_operand.hbm [shape: f32[8,128], index: 1, kind: input, shape index: {}]
  %s2 = inlined_call_operand.hbm [shape: f32[16,128], index: 2, kind: output, shape index: {}]
  %s3 = sld [smem:[#allocation0]]
  $region49: #{tpu_custom_call.1} parent=0
    _
  %s5 = ssub.s32 1, %s3
  %s6 = scalar_select 0, %s5, %s3
  $region1: #{tpu_custom_call.1} parent=0
    #allocation2 [shape = 'u8[8192]{0}', space=vmem, size = 0x2000, scoped, tag = 'input window, operand 0']
    #allocation3 [shape = 's32[2]{0}', space=sflag, size = 0x8, scoped, tag = 'scoped memory for tpu_custom_call.1']
    #allocation4 [shape = 's32[2]{0}', space=sflag, size = 0x8, scoped, tag = 'scoped memory for tpu_custom_call.1']
    #allocation5 [shape = 'u8[4096]{0}', space=vmem, size = 0x1000, scoped, tag = 'input window, operand 1, single buffered']
    #allocation6 [shape = 's32[1]{0}', space=sflag, size = 0x4, scoped, tag = 'scoped memory for tpu_custom_call.1']
    #allocation7 [shape = 'u8[8192]{0}', space=vmem, size = 0x2000, scoped, tag = 'output window, operand 0']
    %7 = vsyncpa [#allocation3], 0
    %s8 = scalar_lea.sflag [#allocation3], 1
    %9 = vsyncpa %s8, 0
    %10 = vsyncpa [#allocation6], 0
    %11 = vsyncpa [#allocation4], 0
    %s12 = scalar_lea.sflag [#allocation4], 1
    %13 = vsyncpa %s12, 0
    loop: start=0, step=1, limit=4
    $region2: #{tpu_custom_call.1} parent=1 // loop_pre_header
      _
    $region3: #{tpu_custom_call.1} parent=1 // loop_header
      %s15 = sphi 0, %s19
      %p16 = scmp.ge.s32.totalorder %s15, 4
      %s25 = sphi 0, %s27
      %s28 = sphi 0, %s25
      %s29 = sphi 0, %s28
      %s45 = sphi 0, %s29
      %s49 = sphi 0, %s49
      %s51 = sphi 0, %s49
      %s52 = sphi 0, %s51
      %s66 = sphi 0, %s52
      %s72 = sphi 0, %s74
      %s75 = sphi 0, %s72
      %s76 = sphi 0, %s75
      %s92 = sphi 0, %s76
    $region4: #{tpu_custom_call.1} parent=1 // loop_header_branch
      %18 = sbr.rel (%p16) target = $region8
    $region5: #{tpu_custom_call.1} parent=1 // loop_body
      %s20 = ssub.s32 %s15, 1
      %s21 = ssub.s32 %s15, 2
      %s22 = sadd.s32 %s15, 1
      %s23 = ssub.s32 %s15, %s22
      %p24 = scmp.eq.s32.totalorder %s23, 0
      %s26 = sadd.s32 %s25, 1
      %s27 = scalar_select %p24, %s25, %s26
      %p30 = pneg %p24
      %p31 = scmp.eq.s32.totalorder %s15, 1
      %p32 = por %p30, %p31
      %p33 = scmp.ne.s32.totalorder %s25, %s28
      %p34 = scmp.eq.s32.totalorder %s15, 0
      %p35 = por %p33, %p34
      %p36 = scmp.ne.s32.totalorder %s25, %s28
      %p37 = scmp.eq.s32.totalorder %s20, 1
      %p38 = por %p36, %p37
      %p39 = scmp.ne.s32.totalorder %s28, %s29
      %p40 = scmp.eq.s32.totalorder %s20, 0
      %p41 = por %p39, %p40
      %p42 = scmp.ne.s32.totalorder %s28, %s29
      %p43 = scmp.eq.s32.totalorder %s21, 1
      %p44 = por %p42, %p43
      %p46 = scmp.ne.s32.totalorder %s29, %s45
      %p47 = scmp.eq.s32.totalorder %s21, 0
      %p48 = por %p46, %p47
      %s50 = sadd.s32 %s49, 1
      %p53 = scmp.eq.s32.totalorder %s15, 1
      %p54 = scmp.ne.s32.totalorder %s49, %s51
      %p55 = scmp.eq.s32.totalorder %s15, 0
      %p56 = por %p54, %p55
      %p57 = scmp.ne.s32.totalorder %s49, %s51
      %p58 = scmp.eq.s32.totalorder %s20, 1
      %p59 = por %p57, %p58
      %p60 = scmp.ne.s32.totalorder %s51, %s52
      %p61 = scmp.eq.s32.totalorder %s20, 0
      %p62 = por %p60, %p61
      %p63 = scmp.ne.s32.totalorder %s51, %s52
      %p64 = scmp.eq.s32.totalorder %s21, 1
      %p65 = por %p63, %p64
      %p67 = scmp.ne.s32.totalorder %s52, %s66
      %p68 = scmp.eq.s32.totalorder %s21, 0
      %p69 = por %p67, %p68
      %s70 = ssub.s32 %s15, %s22
      %p71 = scmp.eq.s32.totalorder %s70, 0
      %s73 = sadd.s32 %s72, 1
      %s74 = scalar_select %p71, %s72, %s73
      %p77 = pneg %p71
      %p78 = scmp.eq.s32.totalorder %s15, 1
      %p79 = por %p77, %p78
      %p80 = scmp.ne.s32.totalorder %s72, %s75
      %p81 = scmp.eq.s32.totalorder %s15, 0
      %p82 = por %p80, %p81
      %p83 = scmp.ne.s32.totalorder %s72, %s75
      %p84 = scmp.eq.s32.totalorder %s20, 1
      %p85 = por %p83, %p84
      %p86 = scmp.ne.s32.totalorder %s75, %s76
      %p87 = scmp.eq.s32.totalorder %s20, 0
      %p88 = por %p86, %p87
      %p89 = scmp.ne.s32.totalorder %s75, %s76
      %p90 = scmp.eq.s32.totalorder %s21, 1
      %p91 = por %p89, %p90
      %p93 = scmp.ne.s32.totalorder %s76, %s92
      %p94 = scmp.eq.s32.totalorder %s21, 0
      %p95 = por %p93, %p94
      %p96 = scmp.le.s32.totalorder 1, %s15
      %p97 = scmp.lt.s32.totalorder %s15, 3
      %p98 = pnand %p96, %p97
      %p99 = pneg %p98
      // Predicated region
      $region9: #{tpu_custom_call.1} parent=5 // pred_check
        _
      $region10: #{tpu_custom_call.1} parent=5 // pred_check_branch
        %101 = sbr.rel (%p98) target = $region12
      $region11: #{tpu_custom_call.1} parent=5 // pred_region
        %s102 = ssub.s32 %s15, 1
        // Predicated region
        $region13: #{tpu_custom_call.1} parent=11 // pred_check
          %p103 = pneg %p62
        $region14: #{tpu_custom_call.1} parent=11 // pred_check_branch
          %105 = sbr.rel (%p103) target = $region16
        $region15: #{tpu_custom_call.1} parent=11 // pred_region
          %s107 = ssub.s32 128, 128
          %108 = vsyncadd [#allocation6], %s107
          %s110 = sshll.u32 [#allocation5], 4
          %s111 = int_to_ptr.vmem [resolvable:$true] %s110
          %113 = dma.hbm_to_vmem [thread:$0]  %s1, 128, %s111, [#allocation6]
        $region16: #{tpu_custom_call.1} parent=11 // pred_fallthru
          _
      $region12: #{tpu_custom_call.1} parent=5 // pred_fallthru
        _
      %p114 = scmp.lt.s32.totalorder %s15, 2
      // Predicated region
      $region17: #{tpu_custom_call.1} parent=5 // pred_check
        %p115 = pneg %p114
      $region18: #{tpu_custom_call.1} parent=5 // pred_check_branch
        %117 = sbr.rel (%p115) target = $region20
      $region19: #{tpu_custom_call.1} parent=5 // pred_region
        // Predicated region
        $region21: #{tpu_custom_call.1} parent=19 // pred_check
          %p118 = pneg %p35
        $region22: #{tpu_custom_call.1} parent=19 // pred_check_branch
          %120 = sbr.rel (%p118) target = $region24
        $region23: #{tpu_custom_call.1} parent=19 // pred_region
          %s121 = sand.u32 %s25, 1
          %s122 = scalar_lea.sflag [#allocation3], %s121
          %s123 = sand.u32 %s25, 1
          %s124 = smul.addr %s123, 8
          %s125 = scalar_lea.vmem [#allocation2], %s124
          %s127 = ssub.s32 128, 128
          %128 = vsyncadd %s122, %s127
          %s129 = smul.addr %s15, 128
          %s130 = scalar_lea.hbm %s0, %s129
          %s132 = sshll.u32 %s125, 4
          %s133 = int_to_ptr.vmem [resolvable:$true] %s132
          %135 = dma.hbm_to_vmem [thread:$0]  %s130, 128, %s133, %s122
        $region24: #{tpu_custom_call.1} parent=19 // pred_fallthru
          _
      $region20: #{tpu_custom_call.1} parent=5 // pred_fallthru
        _
      %p136 = scmp.le.s32.totalorder 1, %s15
      %p137 = scmp.lt.s32.totalorder %s15, 3
      %p138 = pnand %p136, %p137
      %p139 = pneg %p138
      // Predicated region
      $region25: #{tpu_custom_call.1} parent=5 // pred_check
        _
      $region26: #{tpu_custom_call.1} parent=5 // pred_check_branch
        %141 = sbr.rel (%p138) target = $region28
      $region27: #{tpu_custom_call.1} parent=5 // pred_region
        %s142 = ssub.s32 %s15, 1
        %s143 = sand.u32 %s28, 1
        %s144 = scalar_lea.sflag [#allocation3], %s143
        %s145 = sand.u32 %s28, 1
        %s146 = smul.addr %s145, 8
        %s147 = scalar_lea.vmem [#allocation2], %s146
        // Predicated region
        $region29: #{tpu_custom_call.1} parent=27 // pred_check
          %p148 = pneg %p41
        $region30: #{tpu_custom_call.1} parent=27 // pred_check_branch
          %150 = sbr.rel (%p148) target = $region32
        $region31: #{tpu_custom_call.1} parent=27 // pred_region
          %151 = dma.done %s144, 128
        $region32: #{tpu_custom_call.1} parent=27 // pred_fallthru
          _
        // Predicated region
        $region33: #{tpu_custom_call.1} parent=27 // pred_check
          %p152 = pneg %p62
        $region34: #{tpu_custom_call.1} parent=27 // pred_check_branch
          %154 = sbr.rel (%p152) target = $region36
        $region35: #{tpu_custom_call.1} parent=27 // pred_region
          %155 = dma.done [#allocation6], 128
        $region36: #{tpu_custom_call.1} parent=27 // pred_fallthru
          _
        %s156 = sand.u32 %s28, 1
        %s157 = scalar_lea.sflag [#allocation3], %s156
        %s158 = sand.u32 %s28, 1
        %s159 = smul.addr %s158, 8
        %s160 = scalar_lea.vmem [#allocation2], %s159
        %p161 = pneg %p41
        %p162 = pneg %p38
        %p163 = pneg %p62
        %p164 = pneg %p59
        %p165 = pneg %p88
        %p166 = pneg %p85
        %s167 = sand.u32 %s75, 1
        %s168 = scalar_lea.sflag [#allocation4], %s167
        %s169 = sand.u32 %s75, 1
        %s170 = smul.addr %s169, 8
        %s171 = scalar_lea.vmem [#allocation7], %s170
        %v172 = vld [vmem:[%s147] sm:$0xff]
        %v173 = vld [vmem:[#allocation5] sm:$0xff]
        %v174 = vadd.f32 %v172, %v173
        %175 = vst [vmem:[%s171] sm:$0xff] %v174
        %s176 = sand.u32 %s75, 1
        %s177 = scalar_lea.sflag [#allocation4], %s176
        %s178 = sand.u32 %s75, 1
        %s179 = smul.addr %s178, 8
        %s180 = scalar_lea.vmem [#allocation7], %s179
        // Predicated region
        $region37: #{tpu_custom_call.1} parent=27 // pred_check
          %p181 = pneg %p85
        $region38: #{tpu_custom_call.1} parent=27 // pred_check_branch
          %183 = sbr.rel (%p181) target = $region40
        $region39: #{tpu_custom_call.1} parent=27 // pred_region
          %s185 = ssub.s32 128, 128
          %186 = vsyncadd %s177, %s185
          %s187 = smul.addr %s20, 128
          %s188 = scalar_lea.hbm %s2, %s187
          %s190 = sshll.u32 %s180, 4
          %s191 = int_to_ptr.vmem [resolvable:$true] %s190
          %193 = dma.vmem_to_hbm [thread:$0]  %s191, 128, %s188, %s177
        $region40: #{tpu_custom_call.1} parent=27 // pred_fallthru
          _
      $region28: #{tpu_custom_call.1} parent=5 // pred_fallthru
        _
      %p194 = scmp.le.s32.totalorder 2, %s15
      // Predicated region
      $region41: #{tpu_custom_call.1} parent=5 // pred_check
        %p195 = pneg %p194
      $region42: #{tpu_custom_call.1} parent=5 // pred_check_branch
        %197 = sbr.rel (%p195) target = $region44
      $region43: #{tpu_custom_call.1} parent=5 // pred_region
        %s198 = ssub.s32 %s15, 2
        // Predicated region
        $region45: #{tpu_custom_call.1} parent=43 // pred_check
          %p199 = pneg %p91
        $region46: #{tpu_custom_call.1} parent=43 // pred_check_branch
          %201 = sbr.rel (%p199) target = $region48
        $region47: #{tpu_custom_call.1} parent=43 // pred_region
          %s202 = sand.u32 %s76, 1
          %s203 = scalar_lea.sflag [#allocation4], %s202
          %s204 = sand.u32 %s76, 1
          %s205 = smul.addr %s204, 8
          %s206 = scalar_lea.vmem [#allocation7], %s205
          %207 = dma.done %s203, 128
        $region48: #{tpu_custom_call.1} parent=43 // pred_fallthru
          _
      $region44: #{tpu_custom_call.1} parent=5 // pred_fallthru
        _
    $region6: #{tpu_custom_call.1} parent=1 // loop_footer
      %s19 = sadd.s32 1, %s15
    $region7: #{tpu_custom_call.1} parent=1 // loop_footer_branch
      %14 = sbr.rel target = $region3
    $region8: #{tpu_custom_call.1} parent=1 // loop_exit
      _
    %208 = vsyncpa [#allocation3], 1
    %s209 = scalar_lea.sflag [#allocation3], 1
    %210 = vsyncpa %s209, 1
    %211 = vsyncpa [#allocation6], 1
    %212 = vsyncpa [#allocation4], 1
    %s213 = scalar_lea.sflag [#allocation4], 1
    %214 = vsyncpa %s213, 1

// kernel: tpu_custom_call.1
$region0: #{tpu_custom_call.1}
  #allocation0 [shape = 'u32[]', space=smem, size = 0x4, offset = 0x4, fixed_abs, tag = 'smem constant byte address 0x4 - core index']
  #allocation1 [shape = 'u32[144,128]{1,0:T(1,128)}', space=vmem, size = 0x12000, scoped, tag = 'internal scratch']
  #allocation2 [shape = 'f32[128,64]{1,0:T(8,128)}', space=vmem, size = 0x10000, scoped, tag = 'scratch operand']
  %s0 = inlined_call_operand.vmem [shape: f32[2,128,64], index: 0, kind: input, shape index: {}]
  %s1 = inlined_call_operand.vmem [shape: f32[2,128,64], index: 1, kind: input, shape index: {}]
  %s2 = inlined_call_operand.vmem [shape: bf16[64,64], index: 2, kind: input, shape index: {}]
  %s3 = inlined_call_operand.vmem [shape: f32[1,64], index: 3, kind: input, shape index: {}]
  %s4 = inlined_call_operand.vmem [shape: bf16[64,64], index: 4, kind: input, shape index: {}]
  %s5 = inlined_call_operand.vmem [shape: f32[1,64], index: 5, kind: input, shape index: {}]
  %s6 = inlined_call_operand.vmem [shape: bf16[64,64], index: 6, kind: input, shape index: {}]
  %s7 = inlined_call_operand.vmem [shape: f32[1,64], index: 7, kind: input, shape index: {}]
  %s8 = inlined_call_operand.vmem [shape: bf16[64,64], index: 8, kind: input, shape index: {}]
  %s9 = inlined_call_operand.vmem [shape: f32[1,64], index: 9, kind: input, shape index: {}]
  %s10 = inlined_call_operand.vmem [shape: f32[1,64], index: 10, kind: input, shape index: {}]
  %s11 = inlined_call_operand.vmem [shape: f32[1,64], index: 11, kind: input, shape index: {}]
  %s12 = inlined_call_operand.vmem [shape: f32[1,64], index: 12, kind: input, shape index: {}]
  %s13 = inlined_call_operand.vmem [shape: f32[1,64], index: 13, kind: input, shape index: {}]
  %s14 = inlined_call_operand.vmem [shape: f32[2,128,64], index: 14, kind: output, shape index: {}]
  %s15 = sld [smem:[#allocation0]]
  $region89: #{tpu_custom_call.1} parent=0
    _
  %s17 = ssub.s32 1, %s15
  %s18 = scalar_select 0, %s17, %s15
  loop: start=0, step=1, limit=4
  $region2: #{tpu_custom_call.1} parent=0 // loop_pre_header
    _
  $region3: #{tpu_custom_call.1} parent=0 // loop_header
    %s20 = sphi 0, %s24
    %p21 = scmp.ge.s32.totalorder %s20, 4
    %s30 = sphi 0, %s32
    %s33 = sphi 0, %s30
    %s34 = sphi 0, %s33
    %s50 = sphi 0, %s34
    %s56 = sphi 0, %s58
    %s59 = sphi 0, %s56
    %s60 = sphi 0, %s59
    %s76 = sphi 0, %s60
    %s80 = sphi 0, %s80
    %s82 = sphi 0, %s80
    %s83 = sphi 0, %s82
    %s97 = sphi 0, %s83
    %s101 = sphi 0, %s101
    %s103 = sphi 0, %s101
    %s104 = sphi 0, %s103
    %s118 = sphi 0, %s104
    %s122 = sphi 0, %s122
    %s124 = sphi 0, %s122
    %s125 = sphi 0, %s124
    %s139 = sphi 0, %s125
    %s143 = sphi 0, %s143
    %s145 = sphi 0, %s143
    %s146 = sphi 0, %s145
    %s160 = sphi 0, %s146
    %s164 = sphi 0, %s164
    %s166 = sphi 0, %s164
    %s167 = sphi 0, %s166
    %s181 = sphi 0, %s167
    %s185 = sphi 0, %s185
    %s187 = sphi 0, %s185
    %s188 = sphi 0, %s187
    %s202 = sphi 0, %s188
    %s206 = sphi 0, %s206
    %s208 = sphi 0, %s206
    %s209 = sphi 0, %s208
    %s223 = sphi 0, %s209
    %s227 = sphi 0, %s227
    %s229 = sphi 0, %s227
    %s230 = sphi 0, %s229
    %s244 = sphi 0, %s230
    %s248 = sphi 0, %s248
    %s250 = sphi 0, %s248
    %s251 = sphi 0, %s250
    %s265 = sphi 0, %s251
    %s269 = sphi 0, %s269
    %s271 = sphi 0, %s269
    %s272 = sphi 0, %s271
    %s286 = sphi 0, %s272
    %s290 = sphi 0, %s290
    %s292 = sphi 0, %s290
    %s293 = sphi 0, %s292
    %s307 = sphi 0, %s293
    %s311 = sphi 0, %s311
    %s313 = sphi 0, %s311
    %s314 = sphi 0, %s313
    %s328 = sphi 0, %s314
    %s334 = sphi 0, %s336
    %s337 = sphi 0, %s334
    %s338 = sphi 0, %s337
    %s354 = sphi 0, %s338
  $region4: #{tpu_custom_call.1} parent=0 // loop_header_branch
    %23 = sbr.rel (%p21) target = $region8
  $region5: #{tpu_custom_call.1} parent=0 // loop_body
    %s25 = ssub.s32 %s20, 1
    %s26 = ssub.s32 %s20, 2
    %s27 = sadd.s32 %s20, 1
    %s28 = ssub.s32 %s20, %s27
    %p29 = scmp.eq.s32.totalorder %s28, 0
    %s31 = sadd.s32 %s30, 1
    %s32 = scalar_select %p29, %s30, %s31
    %p35 = pneg %p29
    %p36 = scmp.eq.s32.totalorder %s20, 1
    %p37 = por %p35, %p36
    %p38 = scmp.ne.s32.totalorder %s30, %s33
    %p39 = scmp.eq.s32.totalorder %s20, 0
    %p40 = por %p38, %p39
    %p41 = scmp.ne.s32.totalorder %s30, %s33
    %p42 = scmp.eq.s32.totalorder %s25, 1
    %p43 = por %p41, %p42
    %p44 = scmp.ne.s32.totalorder %s33, %s34
    %p45 = scmp.eq.s32.totalorder %s25, 0
    %p46 = por %p44, %p45
    %p47 = scmp.ne.s32.totalorder %s33, %s34
    %p48 = scmp.eq.s32.totalorder %s26, 1
    %p49 = por %p47, %p48
    %p51 = scmp.ne.s32.totalorder %s34, %s50
    %p52 = scmp.eq.s32.totalorder %s26, 0
    %p53 = por %p51, %p52
    %s54 = ssub.s32 %s20, %s27
    %p55 = scmp.eq.s32.totalorder %s54, 0
    %s57 = sadd.s32 %s56, 1
    %s58 = scalar_select %p55, %s56, %s57
    %p61 = pneg %p55
    %p62 = scmp.eq.s32.totalorder %s20, 1
    %p63 = por %p61, %p62
    %p64 = scmp.ne.s32.totalorder %s56, %s59
    %p65 = scmp.eq.s32.totalorder %s20, 0
    %p66 = por %p64, %p65
    %p67 = scmp.ne.s32.totalorder %s56, %s59
    %p68 = scmp.eq.s32.totalorder %s25, 1
    %p69 = por %p67, %p68
    %p70 = scmp.ne.s32.totalorder %s59, %s60
    %p71 = scmp.eq.s32.totalorder %s25, 0
    %p72 = por %p70, %p71
    %p73 = scmp.ne.s32.totalorder %s59, %s60
    %p74 = scmp.eq.s32.totalorder %s26, 1
    %p75 = por %p73, %p74
    %p77 = scmp.ne.s32.totalorder %s60, %s76
    %p78 = scmp.eq.s32.totalorder %s26, 0
    %p79 = por %p77, %p78
    %s81 = sadd.s32 %s80, 1
    %p84 = scmp.eq.s32.totalorder %s20, 1
    %p85 = scmp.ne.s32.totalorder %s80, %s82
    %p86 = scmp.eq.s32.totalorder %s20, 0
    %p87 = por %p85, %p86
    %p88 = scmp.ne.s32.totalorder %s80, %s82
    %p89 = scmp.eq.s32.totalorder %s25, 1
    %p90 = por %p88, %p89
    %p91 = scmp.ne.s32.totalorder %s82, %s83
    %p92 = scmp.eq.s32.totalorder %s25, 0
    %p93 = por %p91, %p92
    %p94 = scmp.ne.s32.totalorder %s82, %s83
    %p95 = scmp.eq.s32.totalorder %s26, 1
    %p96 = por %p94, %p95
    %p98 = scmp.ne.s32.totalorder %s83, %s97
    %p99 = scmp.eq.s32.totalorder %s26, 0
    %p100 = por %p98, %p99
    %s102 = sadd.s32 %s101, 1
    %p105 = scmp.eq.s32.totalorder %s20, 1
    %p106 = scmp.ne.s32.totalorder %s101, %s103
    %p107 = scmp.eq.s32.totalorder %s20, 0
    %p108 = por %p106, %p107
    %p109 = scmp.ne.s32.totalorder %s101, %s103
    %p110 = scmp.eq.s32.totalorder %s25, 1
    %p111 = por %p109, %p110
    %p112 = scmp.ne.s32.totalorder %s103, %s104
    %p113 = scmp.eq.s32.totalorder %s25, 0
    %p114 = por %p112, %p113
    %p115 = scmp.ne.s32.totalorder %s103, %s104
    %p116 = scmp.eq.s32.totalorder %s26, 1
    %p117 = por %p115, %p116
    %p119 = scmp.ne.s32.totalorder %s104, %s118
    %p120 = scmp.eq.s32.totalorder %s26, 0
    %p121 = por %p119, %p120
    %s123 = sadd.s32 %s122, 1
    %p126 = scmp.eq.s32.totalorder %s20, 1
    %p127 = scmp.ne.s32.totalorder %s122, %s124
    %p128 = scmp.eq.s32.totalorder %s20, 0
    %p129 = por %p127, %p128
    %p130 = scmp.ne.s32.totalorder %s122, %s124
    %p131 = scmp.eq.s32.totalorder %s25, 1
    %p132 = por %p130, %p131
    %p133 = scmp.ne.s32.totalorder %s124, %s125
    %p134 = scmp.eq.s32.totalorder %s25, 0
    %p135 = por %p133, %p134
    %p136 = scmp.ne.s32.totalorder %s124, %s125
    %p137 = scmp.eq.s32.totalorder %s26, 1
    %p138 = por %p136, %p137
    %p140 = scmp.ne.s32.totalorder %s125, %s139
    %p141 = scmp.eq.s32.totalorder %s26, 0
    %p142 = por %p140, %p141
    %s144 = sadd.s32 %s143, 1
    %p147 = scmp.eq.s32.totalorder %s20, 1
    %p148 = scmp.ne.s32.totalorder %s143, %s145
    %p149 = scmp.eq.s32.totalorder %s20, 0
    %p150 = por %p148, %p149
    %p151 = scmp.ne.s32.totalorder %s143, %s145
    %p152 = scmp.eq.s32.totalorder %s25, 1
    %p153 = por %p151, %p152
    %p154 = scmp.ne.s32.totalorder %s145, %s146
    %p155 = scmp.eq.s32.totalorder %s25, 0
    %p156 = por %p154, %p155
    %p157 = scmp.ne.s32.totalorder %s145, %s146
    %p158 = scmp.eq.s32.totalorder %s26, 1
    %p159 = por %p157, %p158
    %p161 = scmp.ne.s32.totalorder %s146, %s160
    %p162 = scmp.eq.s32.totalorder %s26, 0
    %p163 = por %p161, %p162
    %s165 = sadd.s32 %s164, 1
    %p168 = scmp.eq.s32.totalorder %s20, 1
    %p169 = scmp.ne.s32.totalorder %s164, %s166
    %p170 = scmp.eq.s32.totalorder %s20, 0
    %p171 = por %p169, %p170
    %p172 = scmp.ne.s32.totalorder %s164, %s166
    %p173 = scmp.eq.s32.totalorder %s25, 1
    %p174 = por %p172, %p173
    %p175 = scmp.ne.s32.totalorder %s166, %s167
    %p176 = scmp.eq.s32.totalorder %s25, 0
    %p177 = por %p175, %p176
    %p178 = scmp.ne.s32.totalorder %s166, %s167
    %p179 = scmp.eq.s32.totalorder %s26, 1
    %p180 = por %p178, %p179
    %p182 = scmp.ne.s32.totalorder %s167, %s181
    %p183 = scmp.eq.s32.totalorder %s26, 0
    %p184 = por %p182, %p183
    %s186 = sadd.s32 %s185, 1
    %p189 = scmp.eq.s32.totalorder %s20, 1
    %p190 = scmp.ne.s32.totalorder %s185, %s187
    %p191 = scmp.eq.s32.totalorder %s20, 0
    %p192 = por %p190, %p191
    %p193 = scmp.ne.s32.totalorder %s185, %s187
    %p194 = scmp.eq.s32.totalorder %s25, 1
    %p195 = por %p193, %p194
    %p196 = scmp.ne.s32.totalorder %s187, %s188
    %p197 = scmp.eq.s32.totalorder %s25, 0
    %p198 = por %p196, %p197
    %p199 = scmp.ne.s32.totalorder %s187, %s188
    %p200 = scmp.eq.s32.totalorder %s26, 1
    %p201 = por %p199, %p200
    %p203 = scmp.ne.s32.totalorder %s188, %s202
    %p204 = scmp.eq.s32.totalorder %s26, 0
    %p205 = por %p203, %p204
    %s207 = sadd.s32 %s206, 1
    %p210 = scmp.eq.s32.totalorder %s20, 1
    %p211 = scmp.ne.s32.totalorder %s206, %s208
    %p212 = scmp.eq.s32.totalorder %s20, 0
    %p213 = por %p211, %p212
    %p214 = scmp.ne.s32.totalorder %s206, %s208
    %p215 = scmp.eq.s32.totalorder %s25, 1
    %p216 = por %p214, %p215
    %p217 = scmp.ne.s32.totalorder %s208, %s209
    %p218 = scmp.eq.s32.totalorder %s25, 0
    %p219 = por %p217, %p218
    %p220 = scmp.ne.s32.totalorder %s208, %s209
    %p221 = scmp.eq.s32.totalorder %s26, 1
    %p222 = por %p220, %p221
    %p224 = scmp.ne.s32.totalorder %s209, %s223
    %p225 = scmp.eq.s32.totalorder %s26, 0
    %p226 = por %p224, %p225
    %s228 = sadd.s32 %s227, 1
    %p231 = scmp.eq.s32.totalorder %s20, 1
    %p232 = scmp.ne.s32.totalorder %s227, %s229
    %p233 = scmp.eq.s32.totalorder %s20, 0
    %p234 = por %p232, %p233
    %p235 = scmp.ne.s32.totalorder %s227, %s229
    %p236 = scmp.eq.s32.totalorder %s25, 1
    %p237 = por %p235, %p236
    %p238 = scmp.ne.s32.totalorder %s229, %s230
    %p239 = scmp.eq.s32.totalorder %s25, 0
    %p240 = por %p238, %p239
    %p241 = scmp.ne.s32.totalorder %s229, %s230
    %p242 = scmp.eq.s32.totalorder %s26, 1
    %p243 = por %p241, %p242
    %p245 = scmp.ne.s32.totalorder %s230, %s244
    %p246 = scmp.eq.s32.totalorder %s26, 0
    %p247 = por %p245, %p246
    %s249 = sadd.s32 %s248, 1
    %p252 = scmp.eq.s32.totalorder %s20, 1
    %p253 = scmp.ne.s32.totalorder %s248, %s250
    %p254 = scmp.eq.s32.totalorder %s20, 0
    %p255 = por %p253, %p254
    %p256 = scmp.ne.s32.totalorder %s248, %s250
    %p257 = scmp.eq.s32.totalorder %s25, 1
    %p258 = por %p256, %p257
    %p259 = scmp.ne.s32.totalorder %s250, %s251
    %p260 = scmp.eq.s32.totalorder %s25, 0
    %p261 = por %p259, %p260
    %p262 = scmp.ne.s32.totalorder %s250, %s251
    %p263 = scmp.eq.s32.totalorder %s26, 1
    %p264 = por %p262, %p263
    %p266 = scmp.ne.s32.totalorder %s251, %s265
    %p267 = scmp.eq.s32.totalorder %s26, 0
    %p268 = por %p266, %p267
    %s270 = sadd.s32 %s269, 1
    %p273 = scmp.eq.s32.totalorder %s20, 1
    %p274 = scmp.ne.s32.totalorder %s269, %s271
    %p275 = scmp.eq.s32.totalorder %s20, 0
    %p276 = por %p274, %p275
    %p277 = scmp.ne.s32.totalorder %s269, %s271
    %p278 = scmp.eq.s32.totalorder %s25, 1
    %p279 = por %p277, %p278
    %p280 = scmp.ne.s32.totalorder %s271, %s272
    %p281 = scmp.eq.s32.totalorder %s25, 0
    %p282 = por %p280, %p281
    %p283 = scmp.ne.s32.totalorder %s271, %s272
    %p284 = scmp.eq.s32.totalorder %s26, 1
    %p285 = por %p283, %p284
    %p287 = scmp.ne.s32.totalorder %s272, %s286
    %p288 = scmp.eq.s32.totalorder %s26, 0
    %p289 = por %p287, %p288
    %s291 = sadd.s32 %s290, 1
    %p294 = scmp.eq.s32.totalorder %s20, 1
    %p295 = scmp.ne.s32.totalorder %s290, %s292
    %p296 = scmp.eq.s32.totalorder %s20, 0
    %p297 = por %p295, %p296
    %p298 = scmp.ne.s32.totalorder %s290, %s292
    %p299 = scmp.eq.s32.totalorder %s25, 1
    %p300 = por %p298, %p299
    %p301 = scmp.ne.s32.totalorder %s292, %s293
    %p302 = scmp.eq.s32.totalorder %s25, 0
    %p303 = por %p301, %p302
    %p304 = scmp.ne.s32.totalorder %s292, %s293
    %p305 = scmp.eq.s32.totalorder %s26, 1
    %p306 = por %p304, %p305
    %p308 = scmp.ne.s32.totalorder %s293, %s307
    %p309 = scmp.eq.s32.totalorder %s26, 0
    %p310 = por %p308, %p309
    %s312 = sadd.s32 %s311, 1
    %p315 = scmp.eq.s32.totalorder %s20, 1
    %p316 = scmp.ne.s32.totalorder %s311, %s313
    %p317 = scmp.eq.s32.totalorder %s20, 0
    %p318 = por %p316, %p317
    %p319 = scmp.ne.s32.totalorder %s311, %s313
    %p320 = scmp.eq.s32.totalorder %s25, 1
    %p321 = por %p319, %p320
    %p322 = scmp.ne.s32.totalorder %s313, %s314
    %p323 = scmp.eq.s32.totalorder %s25, 0
    %p324 = por %p322, %p323
    %p325 = scmp.ne.s32.totalorder %s313, %s314
    %p326 = scmp.eq.s32.totalorder %s26, 1
    %p327 = por %p325, %p326
    %p329 = scmp.ne.s32.totalorder %s314, %s328
    %p330 = scmp.eq.s32.totalorder %s26, 0
    %p331 = por %p329, %p330
    %s332 = ssub.s32 %s20, %s27
    %p333 = scmp.eq.s32.totalorder %s332, 0
    %s335 = sadd.s32 %s334, 1
    %s336 = scalar_select %p333, %s334, %s335
    %p339 = pneg %p333
    %p340 = scmp.eq.s32.totalorder %s20, 1
    %p341 = por %p339, %p340
    %p342 = scmp.ne.s32.totalorder %s334, %s337
    %p343 = scmp.eq.s32.totalorder %s20, 0
    %p344 = por %p342, %p343
    %p345 = scmp.ne.s32.totalorder %s334, %s337
    %p346 = scmp.eq.s32.totalorder %s25, 1
    %p347 = por %p345, %p346
    %p348 = scmp.ne.s32.totalorder %s337, %s338
    %p349 = scmp.eq.s32.totalorder %s25, 0
    %p350 = por %p348, %p349
    %p351 = scmp.ne.s32.totalorder %s337, %s338
    %p352 = scmp.eq.s32.totalorder %s26, 1
    %p353 = por %p351, %p352
    %p355 = scmp.ne.s32.totalorder %s338, %s354
    %p356 = scmp.eq.s32.totalorder %s26, 0
    %p357 = por %p355, %p356
    %p358 = scmp.le.s32.totalorder 1, %s20
    %p359 = scmp.lt.s32.totalorder %s20, 3
    %p360 = pnand %p358, %p359
    %p361 = pneg %p360
    // Predicated region
    $region9: #{tpu_custom_call.1} parent=5 // pred_check
      _
    $region10: #{tpu_custom_call.1} parent=5 // pred_check_branch
      %363 = sbr.rel (%p360) target = $region12
    $region11: #{tpu_custom_call.1} parent=5 // pred_region
      %s364 = ssub.s32 %s20, 1
      // Predicated region
      $region13: #{tpu_custom_call.1} parent=11 // pred_check
        %p365 = pneg %p93
      $region14: #{tpu_custom_call.1} parent=11 // pred_check_branch
        %367 = sbr.rel (%p365) target = $region16
      $region15: #{tpu_custom_call.1} parent=11 // pred_region
        _
      $region16: #{tpu_custom_call.1} parent=11 // pred_fallthru
        _
      // Predicated region
      $region17: #{tpu_custom_call.1} parent=11 // pred_check
        %p368 = pneg %p114
      $region18: #{tpu_custom_call.1} parent=11 // pred_check_branch
        %370 = sbr.rel (%p368) target = $region20
      $region19: #{tpu_custom_call.1} parent=11 // pred_region
        _
      $region20: #{tpu_custom_call.1} parent=11 // pred_fallthru
        _
      // Predicated region
      $region21: #{tpu_custom_call.1} parent=11 // pred_check
        %p371 = pneg %p135
      $region22: #{tpu_custom_call.1} parent=11 // pred_check_branch
        %373 = sbr.rel (%p371) target = $region24
      $region23: #{tpu_custom_call.1} parent=11 // pred_region
        _
      $region24: #{tpu_custom_call.1} parent=11 // pred_fallthru
        _
      // Predicated region
      $region25: #{tpu_custom_call.1} parent=11 // pred_check
        %p374 = pneg %p156
      $region26: #{tpu_custom_call.1} parent=11 // pred_check_branch
        %376 = sbr.rel (%p374) target = $region28
      $region27: #{tpu_custom_call.1} parent=11 // pred_region
        _
      $region28: #{tpu_custom_call.1} parent=11 // pred_fallthru
        _
      // Predicated region
      $region29: #{tpu_custom_call.1} parent=11 // pred_check
        %p377 = pneg %p177
      $region30: #{tpu_custom_call.1} parent=11 // pred_check_branch
        %379 = sbr.rel (%p377) target = $region32
      $region31: #{tpu_custom_call.1} parent=11 // pred_region
        _
      $region32: #{tpu_custom_call.1} parent=11 // pred_fallthru
        _
      // Predicated region
      $region33: #{tpu_custom_call.1} parent=11 // pred_check
        %p380 = pneg %p198
      $region34: #{tpu_custom_call.1} parent=11 // pred_check_branch
        %382 = sbr.rel (%p380) target = $region36
      $region35: #{tpu_custom_call.1} parent=11 // pred_region
        _
      $region36: #{tpu_custom_call.1} parent=11 // pred_fallthru
        _
      // Predicated region
      $region37: #{tpu_custom_call.1} parent=11 // pred_check
        %p383 = pneg %p219
      $region38: #{tpu_custom_call.1} parent=11 // pred_check_branch
        %385 = sbr.rel (%p383) target = $region40
      $region39: #{tpu_custom_call.1} parent=11 // pred_region
        _
      $region40: #{tpu_custom_call.1} parent=11 // pred_fallthru
        _
      // Predicated region
      $region41: #{tpu_custom_call.1} parent=11 // pred_check
        %p386 = pneg %p240
      $region42: #{tpu_custom_call.1} parent=11 // pred_check_branch
        %388 = sbr.rel (%p386) target = $region44
      $region43: #{tpu_custom_call.1} parent=11 // pred_region
        _
      $region44: #{tpu_custom_call.1} parent=11 // pred_fallthru
        _
      // Predicated region
      $region45: #{tpu_custom_call.1} parent=11 // pred_check
        %p389 = pneg %p261
      $region46: #{tpu_custom_call.1} parent=11 // pred_check_branch
        %391 = sbr.rel (%p389) target = $region48
      $region47: #{tpu_custom_call.1} parent=11 // pred_region
        _
      $region48: #{tpu_custom_call.1} parent=11 // pred_fallthru
        _
      // Predicated region
      $region49: #{tpu_custom_call.1} parent=11 // pred_check
        %p392 = pneg %p282
      $region50: #{tpu_custom_call.1} parent=11 // pred_check_branch
        %394 = sbr.rel (%p392) target = $region52
      $region51: #{tpu_custom_call.1} parent=11 // pred_region
        _
      $region52: #{tpu_custom_call.1} parent=11 // pred_fallthru
        _
      // Predicated region
      $region53: #{tpu_custom_call.1} parent=11 // pred_check
        %p395 = pneg %p303
      $region54: #{tpu_custom_call.1} parent=11 // pred_check_branch
        %397 = sbr.rel (%p395) target = $region56
      $region55: #{tpu_custom_call.1} parent=11 // pred_region
        _
      $region56: #{tpu_custom_call.1} parent=11 // pred_fallthru
        _
      // Predicated region
      $region57: #{tpu_custom_call.1} parent=11 // pred_check
        %p398 = pneg %p324
      $region58: #{tpu_custom_call.1} parent=11 // pred_check_branch
        %400 = sbr.rel (%p398) target = $region60
      $region59: #{tpu_custom_call.1} parent=11 // pred_region
        _
      $region60: #{tpu_custom_call.1} parent=11 // pred_fallthru
        _
    $region12: #{tpu_custom_call.1} parent=5 // pred_fallthru
      _
    %p401 = scmp.lt.s32.totalorder %s20, 2
    // Predicated region
    $region61: #{tpu_custom_call.1} parent=5 // pred_check
      %p402 = pneg %p401
    $region62: #{tpu_custom_call.1} parent=5 // pred_check_branch
      %404 = sbr.rel (%p402) target = $region64
    $region63: #{tpu_custom_call.1} parent=5 // pred_region
      // Predicated region
      $region65: #{tpu_custom_call.1} parent=63 // pred_check
        %p405 = pneg %p40
      $region66: #{tpu_custom_call.1} parent=63 // pred_check_branch
        %407 = sbr.rel (%p405) target = $region68
      $region67: #{tpu_custom_call.1} parent=63 // pred_region
        %p408 = scmp.lt.s32.totalorder %s20, 1
        %s409 = scalar_select %p408, %s20, 1
        %s410 = smul.addr %s409, 16
        %s411 = smul.addr %s410, 8
        %s412 = scalar_lea.vmem %s0, %s411
      $region68: #{tpu_custom_call.1} parent=63 // pred_fallthru
        _
      // Predicated region
      $region69: #{tpu_custom_call.1} parent=63 // pred_check
        %p413 = pneg %p66
      $region70: #{tpu_custom_call.1} parent=63 // pred_check_branch
        %415 = sbr.rel (%p413) target = $region72
      $region71: #{tpu_custom_call.1} parent=63 // pred_region
        %p416 = scmp.lt.s32.totalorder %s20, 1
        %s417 = scalar_select %p416, %s20, 1
        %s418 = smul.addr %s417, 16
        %s419 = smul.addr %s418, 8
        %s420 = scalar_lea.vmem %s1, %s419
      $region72: #{tpu_custom_call.1} parent=63 // pred_fallthru
        _
    $region64: #{tpu_custom_call.1} parent=5 // pred_fallthru
      _
    %p421 = scmp.le.s32.totalorder 1, %s20
    %p422 = scmp.lt.s32.totalorder %s20, 3
    %p423 = pnand %p421, %p422
    %p424 = pneg %p423
    // Predicated region
    $region73: #{tpu_custom_call.1} parent=5 // pred_check
      _
    $region74: #{tpu_custom_call.1} parent=5 // pred_check_branch
      %426 = sbr.rel (%p423) target = $region76
    $region75: #{tpu_custom_call.1} parent=5 // pred_region
      %s427 = ssub.s32 %s20, 1
      %p428 = scmp.lt.s32.totalorder %s25, 1
      %s429 = scalar_select %p428, %s25, 1
      %s430 = smul.addr %s429, 16
      %s431 = smul.addr %s430, 8
      %s432 = scalar_lea.vmem %s0, %s431
      %p433 = pneg %p46
      %p434 = pneg %p43
      %p435 = scmp.lt.s32.totalorder %s25, 1
      %s436 = scalar_select %p435, %s25, 1
      %s437 = smul.addr %s436, 16
      %s438 = smul.addr %s437, 8
      %s439 = scalar_lea.vmem %s1, %s438
      %p440 = pneg %p72
      %p441 = pneg %p69
      %p442 = pneg %p93
      %p443 = pneg %p90
      %p444 = pneg %p114
      %p445 = pneg %p111
      %p446 = pneg %p135
      %p447 = pneg %p132
      %p448 = pneg %p156
      %p449 = pneg %p153
      %p450 = pneg %p177
      %p451 = pneg %p174
      %p452 = pneg %p198
      %p453 = pneg %p195
      %p454 = pneg %p219
      %p455 = pneg %p216
      %p456 = pneg %p240
      %p457 = pneg %p237
      %p458 = pneg %p261
      %p459 = pneg %p258
      %p460 = pneg %p282
      %p461 = pneg %p279
      %p462 = pneg %p303
      %p463 = pneg %p300
      %p464 = pneg %p324
      %p465 = pneg %p321
      %p466 = pneg %p350
      %p467 = pneg %p347
      %p468 = scmp.lt.s32.totalorder %s25, 1
      %s469 = scalar_select %p468, %s25, 1
      %s470 = smul.addr %s469, 16
      %s471 = smul.addr %s470, 8
      %s472 = scalar_lea.vmem %s14, %s471
      %p473 = scmp.lt.s32.totalorder %s25, 1
      %s474 = scalar_select %p473, %s25, 1
      %s475 = smul.addr %s474, 16
      %s476 = smul.addr %s475, 8
      %s477 = scalar_lea.vmem %s0, %s476
      %p478 = scmp.lt.s32.totalorder %s25, 1
      %s479 = scalar_select %p478, %s25, 1
      %s480 = smul.addr %s479, 16
      %s481 = smul.addr %s480, 8
      %s482 = scalar_lea.vmem %s1, %s481
      %p483 = scmp.lt.s32.totalorder %s25, 1
      %s484 = scalar_select %p483, %s25, 1
      %s485 = smul.addr %s484, 16
      %s486 = smul.addr %s485, 8
      %s487 = scalar_lea.vmem %s14, %s486
      %v489 = vld [vmem:[%s477] sm:$0xff]
      %v490 = vld [vmem:[%s477 + $0x8] sm:$0xff]
      %v491 = vld [vmem:[%s477 + $0x10] sm:$0xff]
      %v492 = vld [vmem:[%s477 + $0x18] sm:$0xff]
      %v493 = vld [vmem:[%s477 + $0x20] sm:$0xff]
      %v494 = vld [vmem:[%s477 + $0x28] sm:$0xff]
      %v495 = vld [vmem:[%s477 + $0x30] sm:$0xff]
      %v496 = vld [vmem:[%s477 + $0x38] sm:$0xff]
      %v497 = vld [vmem:[%s477 + $0x40] sm:$0xff]
      %v498 = vld [vmem:[%s477 + $0x48] sm:$0xff]
      %v499 = vld [vmem:[%s477 + $0x50] sm:$0xff]
      %v500 = vld [vmem:[%s477 + $0x58] sm:$0xff]
      %v501 = vld [vmem:[%s477 + $0x60] sm:$0xff]
      %v502 = vld [vmem:[%s477 + $0x68] sm:$0xff]
      %v503 = vld [vmem:[%s477 + $0x70] sm:$0xff]
      %v504 = vld [vmem:[%s477 + $0x78] sm:$0xff]
      %v505 = vld [vmem:[%s482] sm:$0xff]
      %v506 = vld [vmem:[%s482 + $0x8] sm:$0xff]
      %v507 = vld [vmem:[%s482 + $0x10] sm:$0xff]
      %v508 = vld [vmem:[%s482 + $0x18] sm:$0xff]
      %v509 = vld [vmem:[%s482 + $0x20] sm:$0xff]
      %v510 = vld [vmem:[%s482 + $0x28] sm:$0xff]
      %v511 = vld [vmem:[%s482 + $0x30] sm:$0xff]
      %v512 = vld [vmem:[%s482 + $0x38] sm:$0xff]
      %v513 = vld [vmem:[%s482 + $0x40] sm:$0xff]
      %v514 = vld [vmem:[%s482 + $0x48] sm:$0xff]
      %v515 = vld [vmem:[%s482 + $0x50] sm:$0xff]
      %v516 = vld [vmem:[%s482 + $0x58] sm:$0xff]
      %v517 = vld [vmem:[%s482 + $0x60] sm:$0xff]
      %v518 = vld [vmem:[%s482 + $0x68] sm:$0xff]
      %v519 = vld [vmem:[%s482 + $0x70] sm:$0xff]
      %v520 = vld [vmem:[%s482 + $0x78] sm:$0xff]
      %v521 = vadd.f32 %v489, %v505
      %v522 = vadd.f32 %v490, %v506
      %v523 = vadd.f32 %v491, %v507
      %v524 = vadd.f32 %v492, %v508
      %v525 = vadd.f32 %v493, %v509
      %v526 = vadd.f32 %v494, %v510
      %v527 = vadd.f32 %v495, %v511
      %v528 = vadd.f32 %v496, %v512
      %v529 = vadd.f32 %v497, %v513
      %v530 = vadd.f32 %v498, %v514
      %v531 = vadd.f32 %v499, %v515
      %v532 = vadd.f32 %v500, %v516
      %v533 = vadd.f32 %v501, %v517
      %v534 = vadd.f32 %v502, %v518
      %v535 = vadd.f32 %v503, %v519
      %v536 = vadd.f32 %v504, %v520
      %v537 = vlaneseq
      %v538 = vand.u32 %v537, 127
      %vm539 = vcmp.lt.s32.totalorder %v538, 20
      %v540 = vsel %vm539, 0.0, -1e+30
      %v541 = vpack.c.bf16 %v522, %v521
      %v542 = vpack.c.bf16 %v524, %v523
      %v543 = vpack.c.bf16 %v526, %v525
      %v544 = vpack.c.bf16 %v528, %v527
      %v545 = vpack.c.bf16 %v530, %v529
      %v546 = vpack.c.bf16 %v532, %v531
      %v547 = vpack.c.bf16 %v534, %v533
      %v548 = vpack.c.bf16 %v536, %v535
      %v549 = vld [vmem:[%s2] sm:$0xf]
      %v550 = vld [vmem:[%s2 + $0x4] sm:$0xf]
      %v551 = vld [vmem:[%s2 + $0x8] sm:$0xf]
      %v552 = vld [vmem:[%s2 + $0xc] sm:$0xf]
      %v553 = vld [vmem:[%s2 + $0x10] sm:$0xf]
      %v554 = vld [vmem:[%s2 + $0x14] sm:$0xf]
      %v555 = vld [vmem:[%s2 + $0x18] sm:$0xf]
      %v556 = vld [vmem:[%s2 + $0x1c] sm:$0xf]
      %v557 = vld [vmem:[%s3] sm:$0x1]
      %v559 = vlaneseq
      %v560 = vshrl.u32 %v559, 7
      %v561 = vsub.s32 0, %v560
      %v562 = vrot.slane %v557, %v561
      %v572 = vunpack.c.l.b16 %v549
      %v573 = vunpack.c.l.b16 %v550
      %v574 = vunpack.c.l.b16 %v551
      %v575 = vunpack.c.l.b16 %v552
      %v576 = vunpack.c.l.b16 %v553
      %v577 = vunpack.c.l.b16 %v554
      %v578 = vunpack.c.l.b16 %v555
      %v579 = vunpack.c.l.b16 %v556
      %v580 = vpack.c.b16 %v573, %v572
      %v581 = vpack.c.b16 %v575, %v574
      %v582 = vpack.c.b16 %v577, %v576
      %v583 = vpack.c.b16 %v579, %v578
      %vm588 = vcmask 523264
      %v590 = vsel %vm588, %v541, 0
      %v593 = vsel %vm588, %v542, 0
      %v596 = vsel %vm588, %v543, 0
      %v599 = vsel %vm588, %v544, 0
      %v602 = vsel %vm588, %v545, 0
      %v605 = vsel %vm588, %v546, 0
      %v608 = vsel %vm588, %v547, 0
      %v611 = vsel %vm588, %v548, 0
      %613 = vmatprep.subr.bf16.mxu0 0
      %614 = vmatpush1.bf16.msra.mxu0 0
      %615 = vmatprep.subr.bf16.mxu0 0
      %616 = vmatpush1.bf16.msra.mxu0 0
      %617 = vmatprep.subr.bf16.mxu0 0
      %618 = vmatpush1.bf16.msra.mxu0 0
      %619 = vmatprep.subr.bf16.mxu0 0
      %620 = vmatpush1.bf16.msra.mxu0 0
      %621 = vmatprep.subr.bf16.mxu0 0
      %622 = vmatpush1.bf16.msra.mxu0 %v583
      %623 = vmatprep.subr.bf16.mxu0 0
      %624 = vmatpush1.bf16.msra.mxu0 %v582
      %625 = vmatprep.subr.bf16.mxu0 0
      %626 = vmatpush1.bf16.msra.mxu0 %v581
      %627 = vmatprep.subr.bf16.mxu0 0
      %628 = vmatpush1.bf16.msra.mxu0 %v580
      %629 = vmatprep.subr.bf16.mxu0 0
      %630 = vmatpush2.bf16.msra.mxu0 0
      %631 = vmatprep.subr.bf16.mxu0 0
      %632 = vmatpush2.bf16.msra.mxu0 0
      %633 = vmatprep.subr.bf16.mxu0 0
      %634 = vmatpush2.bf16.msra.mxu0 0
      %635 = vmatprep.subr.bf16.mxu0 0
      %636 = vmatpush2.bf16.msra.mxu0 0
      %637 = vmatprep.subr.bf16.mxu0 0
      %638 = vmatpush2.bf16.msra.mxu0 0
      %639 = vmatprep.subr.bf16.mxu0 0
      %640 = vmatpush2.bf16.msra.mxu0 0
      %641 = vmatprep.subr.bf16.mxu0 0
      %642 = vmatpush2.bf16.msra.mxu0 0
      %643 = vmatprep.subr.bf16.mxu0 0
      %644 = vmatpush2.bf16.msra.mxu0 0
      %645 = vmatprep.mubr.bf16.mxu0 0
      %646 = vmatmul.mubr.bf16.gmra.mxu0 %v590
      %v647 = vpop.f32.mrf.mxu0
      %v648 = vadd.f32 %v562, %v647
      %v649 = vpop.f32.mrf.mxu0
      %v650 = vpop.f32.mrf.mxu0
      %v651 = vadd.f32 %v562, %v650
      %v652 = vpop.f32.mrf.mxu0
      %653 = vmatprep.mubr.bf16.mxu0 0
      %654 = vmatmul.mubr.bf16.gmra.mxu0 %v593
      %v655 = vpop.f32.mrf.mxu0
      %v656 = vadd.f32 %v562, %v655
      %v657 = vpop.f32.mrf.mxu0
      %v658 = vpop.f32.mrf.mxu0
      %v659 = vadd.f32 %v562, %v658
      %v660 = vpop.f32.mrf.mxu0
      %661 = vmatprep.mubr.bf16.mxu0 0
      %662 = vmatmul.mubr.bf16.gmra.mxu0 %v596
      %v663 = vpop.f32.mrf.mxu0
      %v664 = vadd.f32 %v562, %v663
      %v665 = vpop.f32.mrf.mxu0
      %v666 = vpop.f32.mrf.mxu0
      %v667 = vadd.f32 %v562, %v666
      %v668 = vpop.f32.mrf.mxu0
      %669 = vmatprep.mubr.bf16.mxu0 0
      %670 = vmatmul.mubr.bf16.gmra.mxu0 %v599
      %v671 = vpop.f32.mrf.mxu0
      %v672 = vadd.f32 %v562, %v671
      %v673 = vpop.f32.mrf.mxu0
      %v674 = vpop.f32.mrf.mxu0
      %v675 = vadd.f32 %v562, %v674
      %v676 = vpop.f32.mrf.mxu0
      %677 = vmatprep.mubr.bf16.mxu0 0
      %678 = vmatmul.mubr.bf16.gmra.mxu0 %v602
      %v679 = vpop.f32.mrf.mxu0
      %v680 = vadd.f32 %v562, %v679
      %v681 = vpop.f32.mrf.mxu0
      %v682 = vpop.f32.mrf.mxu0
      %v683 = vadd.f32 %v562, %v682
      %v684 = vpop.f32.mrf.mxu0
      %685 = vmatprep.mubr.bf16.mxu0 0
      %686 = vmatmul.mubr.bf16.gmra.mxu0 %v605
      %v687 = vpop.f32.mrf.mxu0
      %v688 = vadd.f32 %v562, %v687
      %v689 = vpop.f32.mrf.mxu0
      %v690 = vpop.f32.mrf.mxu0
      %v691 = vadd.f32 %v562, %v690
      %v692 = vpop.f32.mrf.mxu0
      %693 = vmatprep.mubr.bf16.mxu0 0
      %694 = vmatmul.mubr.bf16.gmra.mxu0 %v608
      %v695 = vpop.f32.mrf.mxu0
      %v696 = vadd.f32 %v562, %v695
      %v697 = vpop.f32.mrf.mxu0
      %v698 = vpop.f32.mrf.mxu0
      %v699 = vadd.f32 %v562, %v698
      %v700 = vpop.f32.mrf.mxu0
      %701 = vmatprep.mubr.bf16.mxu0 0
      %702 = vmatmul.mubr.bf16.gmra.mxu0 %v611
      %v703 = vpop.f32.mrf.mxu0
      %v704 = vadd.f32 %v562, %v703
      %v705 = vpop.f32.mrf.mxu0
      %v706 = vpop.f32.mrf.mxu0
      %v707 = vadd.f32 %v562, %v706
      %v708 = vpop.f32.mrf.mxu0
      %709 = vdwg.mxu0
      %v710 = vld [vmem:[%s4] sm:$0xf]
      %v711 = vld [vmem:[%s4 + $0x4] sm:$0xf]
      %v712 = vld [vmem:[%s4 + $0x8] sm:$0xf]
      %v713 = vld [vmem:[%s4 + $0xc] sm:$0xf]
      %v714 = vld [vmem:[%s4 + $0x10] sm:$0xf]
      %v715 = vld [vmem:[%s4 + $0x14] sm:$0xf]
      %v716 = vld [vmem:[%s4 + $0x18] sm:$0xf]
      %v717 = vld [vmem:[%s4 + $0x1c] sm:$0xf]
      %v718 = vld [vmem:[%s5] sm:$0x1]
      %v720 = vlaneseq
      %v721 = vshrl.u32 %v720, 7
      %v722 = vsub.s32 0, %v721
      %v723 = vrot.slane %v718, %v722
      %v733 = vunpack.c.l.b16 %v710
      %v734 = vunpack.c.l.b16 %v711
      %v735 = vunpack.c.l.b16 %v712
      %v736 = vunpack.c.l.b16 %v713
      %v737 = vunpack.c.l.b16 %v714
      %v738 = vunpack.c.l.b16 %v715
      %v739 = vunpack.c.l.b16 %v716
      %v740 = vunpack.c.l.b16 %v717
      %v741 = vpack.c.b16 %v734, %v733
      %v742 = vpack.c.b16 %v736, %v735
      %v743 = vpack.c.b16 %v738, %v737
      %v744 = vpack.c.b16 %v740, %v739
      %749 = vmatprep.subr.bf16.mxu0 0
      %750 = vmatpush1.bf16.msra.mxu0 0
      %751 = vmatprep.subr.bf16.mxu0 0
      %752 = vmatpush1.bf16.msra.mxu0 0
      %753 = vmatprep.subr.bf16.mxu0 0
      %754 = vmatpush1.bf16.msra.mxu0 0
      %755 = vmatprep.subr.bf16.mxu0 0
      %756 = vmatpush1.bf16.msra.mxu0 0
      %757 = vmatprep.subr.bf16.mxu0 0
      %758 = vmatpush1.bf16.msra.mxu0 %v744
      %759 = vmatprep.subr.bf16.mxu0 0
      %760 = vmatpush1.bf16.msra.mxu0 %v743
      %761 = vmatprep.subr.bf16.mxu0 0
      %762 = vmatpush1.bf16.msra.mxu0 %v742
      %763 = vmatprep.subr.bf16.mxu0 0
      %764 = vmatpush1.bf16.msra.mxu0 %v741
      %765 = vmatprep.subr.bf16.mxu0 0
      %766 = vmatpush2.bf16.msra.mxu0 0
      %767 = vmatprep.subr.bf16.mxu0 0
      %768 = vmatpush2.bf16.msra.mxu0 0
      %769 = vmatprep.subr.bf16.mxu0 0
      %770 = vmatpush2.bf16.msra.mxu0 0
      %771 = vmatprep.subr.bf16.mxu0 0
      %772 = vmatpush2.bf16.msra.mxu0 0
      %773 = vmatprep.subr.bf16.mxu0 0
      %774 = vmatpush2.bf16.msra.mxu0 0
      %775 = vmatprep.subr.bf16.mxu0 0
      %776 = vmatpush2.bf16.msra.mxu0 0
      %777 = vmatprep.subr.bf16.mxu0 0
      %778 = vmatpush2.bf16.msra.mxu0 0
      %779 = vmatprep.subr.bf16.mxu0 0
      %780 = vmatpush2.bf16.msra.mxu0 0
      %781 = vmatprep.mubr.bf16.mxu0 0
      %782 = vmatmul.mubr.bf16.gmra.mxu0 %v590
      %v783 = vpop.f32.mrf.mxu0
      %v784 = vadd.f32 %v723, %v783
      %v785 = vpop.f32.mrf.mxu0
      %v786 = vpop.f32.mrf.mxu0
      %v787 = vadd.f32 %v723, %v786
      %v788 = vpop.f32.mrf.mxu0
      %789 = vmatprep.mubr.bf16.mxu0 0
      %790 = vmatmul.mubr.bf16.gmra.mxu0 %v593
      %v791 = vpop.f32.mrf.mxu0
      %v792 = vadd.f32 %v723, %v791
      %v793 = vpop.f32.mrf.mxu0
      %v794 = vpop.f32.mrf.mxu0
      %v795 = vadd.f32 %v723, %v794
      %v796 = vpop.f32.mrf.mxu0
      %797 = vmatprep.mubr.bf16.mxu0 0
      %798 = vmatmul.mubr.bf16.gmra.mxu0 %v596
      %v799 = vpop.f32.mrf.mxu0
      %v800 = vadd.f32 %v723, %v799
      %v801 = vpop.f32.mrf.mxu0
      %v802 = vpop.f32.mrf.mxu0
      %v803 = vadd.f32 %v723, %v802
      %v804 = vpop.f32.mrf.mxu0
      %805 = vmatprep.mubr.bf16.mxu0 0
      %806 = vmatmul.mubr.bf16.gmra.mxu0 %v599
      %v807 = vpop.f32.mrf.mxu0
      %v808 = vadd.f32 %v723, %v807
      %v809 = vpop.f32.mrf.mxu0
      %v810 = vpop.f32.mrf.mxu0
      %v811 = vadd.f32 %v723, %v810
      %v812 = vpop.f32.mrf.mxu0
      %813 = vmatprep.mubr.bf16.mxu0 0
      %814 = vmatmul.mubr.bf16.gmra.mxu0 %v602
      %v815 = vpop.f32.mrf.mxu0
      %v816 = vadd.f32 %v723, %v815
      %v817 = vpop.f32.mrf.mxu0
      %v818 = vpop.f32.mrf.mxu0
      %v819 = vadd.f32 %v723, %v818
      %v820 = vpop.f32.mrf.mxu0
      %821 = vmatprep.mubr.bf16.mxu0 0
      %822 = vmatmul.mubr.bf16.gmra.mxu0 %v605
      %v823 = vpop.f32.mrf.mxu0
      %v824 = vadd.f32 %v723, %v823
      %v825 = vpop.f32.mrf.mxu0
      %v826 = vpop.f32.mrf.mxu0
      %v827 = vadd.f32 %v723, %v826
      %v828 = vpop.f32.mrf.mxu0
      %829 = vmatprep.mubr.bf16.mxu0 0
      %830 = vmatmul.mubr.bf16.gmra.mxu0 %v608
      %v831 = vpop.f32.mrf.mxu0
      %v832 = vadd.f32 %v723, %v831
      %v833 = vpop.f32.mrf.mxu0
      %v834 = vpop.f32.mrf.mxu0
      %v835 = vadd.f32 %v723, %v834
      %v836 = vpop.f32.mrf.mxu0
      %837 = vmatprep.mubr.bf16.mxu0 0
      %838 = vmatmul.mubr.bf16.gmra.mxu0 %v611
      %v839 = vpop.f32.mrf.mxu0
      %v840 = vadd.f32 %v723, %v839
      %v841 = vpop.f32.mrf.mxu0
      %v842 = vpop.f32.mrf.mxu0
      %v843 = vadd.f32 %v723, %v842
      %v844 = vpop.f32.mrf.mxu0
      %845 = vdwg.mxu0
      %v846 = vpack.c.bf16 %v490, %v489
      %v847 = vpack.c.bf16 %v492, %v491
      %v848 = vpack.c.bf16 %v494, %v493
      %v849 = vpack.c.bf16 %v496, %v495
      %v850 = vpack.c.bf16 %v498, %v497
      %v851 = vpack.c.bf16 %v500, %v499
      %v852 = vpack.c.bf16 %v502, %v501
      %v853 = vpack.c.bf16 %v504, %v503
      %v854 = vld [vmem:[%s6] sm:$0xf]
      %v855 = vld [vmem:[%s6 + $0x4] sm:$0xf]
      %v856 = vld [vmem:[%s6 + $0x8] sm:$0xf]
      %v857 = vld [vmem:[%s6 + $0xc] sm:$0xf]
      %v858 = vld [vmem:[%s6 + $0x10] sm:$0xf]
      %v859 = vld [vmem:[%s6 + $0x14] sm:$0xf]
      %v860 = vld [vmem:[%s6 + $0x18] sm:$0xf]
      %v861 = vld [vmem:[%s6 + $0x1c] sm:$0xf]
      %v862 = vld [vmem:[%s7] sm:$0x1]
      %v864 = vlaneseq
      %v865 = vshrl.u32 %v864, 7
      %v866 = vsub.s32 0, %v865
      %v867 = vrot.slane %v862, %v866
      %v877 = vunpack.c.l.b16 %v854
      %v878 = vunpack.c.l.b16 %v855
      %v879 = vunpack.c.l.b16 %v856
      %v880 = vunpack.c.l.b16 %v857
      %v881 = vunpack.c.l.b16 %v858
      %v882 = vunpack.c.l.b16 %v859
      %v883 = vunpack.c.l.b16 %v860
      %v884 = vunpack.c.l.b16 %v861
      %v885 = vpack.c.b16 %v878, %v877
      %v886 = vpack.c.b16 %v880, %v879
      %v887 = vpack.c.b16 %v882, %v881
      %v888 = vpack.c.b16 %v884, %v883
      %v894 = vsel %vm588, %v846, 0
      %v897 = vsel %vm588, %v847, 0
      %v900 = vsel %vm588, %v848, 0
      %v903 = vsel %vm588, %v849, 0
      %v906 = vsel %vm588, %v850, 0
      %v909 = vsel %vm588, %v851, 0
      %v912 = vsel %vm588, %v852, 0
      %v915 = vsel %vm588, %v853, 0
      %917 = vmatprep.subr.bf16.mxu0 0
      %918 = vmatpush1.bf16.msra.mxu0 0
      %919 = vmatprep.subr.bf16.mxu0 0
      %920 = vmatpush1.bf16.msra.mxu0 0
      %921 = vmatprep.subr.bf16.mxu0 0
      %922 = vmatpush1.bf16.msra.mxu0 0
      %923 = vmatprep.subr.bf16.mxu0 0
      %924 = vmatpush1.bf16.msra.mxu0 0
      %925 = vmatprep.subr.bf16.mxu0 0
      %926 = vmatpush1.bf16.msra.mxu0 %v888
      %927 = vmatprep.subr.bf16.mxu0 0
      %928 = vmatpush1.bf16.msra.mxu0 %v887
      %929 = vmatprep.subr.bf16.mxu0 0
      %930 = vmatpush1.bf16.msra.mxu0 %v886
      %931 = vmatprep.subr.bf16.mxu0 0
      %932 = vmatpush1.bf16.msra.mxu0 %v885
      %933 = vmatprep.subr.bf16.mxu0 0
      %934 = vmatpush2.bf16.msra.mxu0 0
      %935 = vmatprep.subr.bf16.mxu0 0
      %936 = vmatpush2.bf16.msra.mxu0 0
      %937 = vmatprep.subr.bf16.mxu0 0
      %938 = vmatpush2.bf16.msra.mxu0 0
      %939 = vmatprep.subr.bf16.mxu0 0
      %940 = vmatpush2.bf16.msra.mxu0 0
      %941 = vmatprep.subr.bf16.mxu0 0
      %942 = vmatpush2.bf16.msra.mxu0 0
      %943 = vmatprep.subr.bf16.mxu0 0
      %944 = vmatpush2.bf16.msra.mxu0 0
      %945 = vmatprep.subr.bf16.mxu0 0
      %946 = vmatpush2.bf16.msra.mxu0 0
      %947 = vmatprep.subr.bf16.mxu0 0
      %948 = vmatpush2.bf16.msra.mxu0 0
      %949 = vmatprep.mubr.bf16.mxu0 0
      %950 = vmatmul.mubr.bf16.gmra.mxu0 %v894
      %v951 = vpop.f32.mrf.mxu0
      %v952 = vadd.f32 %v867, %v951
      %v953 = vpop.f32.mrf.mxu0
      %v954 = vpop.f32.mrf.mxu0
      %v955 = vadd.f32 %v867, %v954
      %v956 = vpop.f32.mrf.mxu0
      %957 = vmatprep.mubr.bf16.mxu0 0
      %958 = vmatmul.mubr.bf16.gmra.mxu0 %v897
      %v959 = vpop.f32.mrf.mxu0
      %v960 = vadd.f32 %v867, %v959
      %v961 = vpop.f32.mrf.mxu0
      %v962 = vpop.f32.mrf.mxu0
      %v963 = vadd.f32 %v867, %v962
      %v964 = vpop.f32.mrf.mxu0
      %965 = vmatprep.mubr.bf16.mxu0 0
      %966 = vmatmul.mubr.bf16.gmra.mxu0 %v900
      %v967 = vpop.f32.mrf.mxu0
      %v968 = vadd.f32 %v867, %v967
      %v969 = vpop.f32.mrf.mxu0
      %v970 = vpop.f32.mrf.mxu0
      %v971 = vadd.f32 %v867, %v970
      %v972 = vpop.f32.mrf.mxu0
      %973 = vmatprep.mubr.bf16.mxu0 0
      %974 = vmatmul.mubr.bf16.gmra.mxu0 %v903
      %v975 = vpop.f32.mrf.mxu0
      %v976 = vadd.f32 %v867, %v975
      %v977 = vpop.f32.mrf.mxu0
      %v978 = vpop.f32.mrf.mxu0
      %v979 = vadd.f32 %v867, %v978
      %v980 = vpop.f32.mrf.mxu0
      %981 = vmatprep.mubr.bf16.mxu0 0
      %982 = vmatmul.mubr.bf16.gmra.mxu0 %v906
      %v983 = vpop.f32.mrf.mxu0
      %v984 = vadd.f32 %v867, %v983
      %v985 = vpop.f32.mrf.mxu0
      %v986 = vpop.f32.mrf.mxu0
      %v987 = vadd.f32 %v867, %v986
      %v988 = vpop.f32.mrf.mxu0
      %989 = vmatprep.mubr.bf16.mxu0 0
      %990 = vmatmul.mubr.bf16.gmra.mxu0 %v909
      %v991 = vpop.f32.mrf.mxu0
      %v992 = vadd.f32 %v867, %v991
      %v993 = vpop.f32.mrf.mxu0
      %v994 = vpop.f32.mrf.mxu0
      %v995 = vadd.f32 %v867, %v994
      %v996 = vpop.f32.mrf.mxu0
      %997 = vmatprep.mubr.bf16.mxu0 0
      %998 = vmatmul.mubr.bf16.gmra.mxu0 %v912
      %v999 = vpop.f32.mrf.mxu0
      %v1000 = vadd.f32 %v867, %v999
      %v1001 = vpop.f32.mrf.mxu0
      %v1002 = vpop.f32.mrf.mxu0
      %v1003 = vadd.f32 %v867, %v1002
      %v1004 = vpop.f32.mrf.mxu0
      %1005 = vmatprep.mubr.bf16.mxu0 0
      %1006 = vmatmul.mubr.bf16.gmra.mxu0 %v915
      %v1007 = vpop.f32.mrf.mxu0
      %v1008 = vadd.f32 %v867, %v1007
      %v1009 = vpop.f32.mrf.mxu0
      %v1010 = vpop.f32.mrf.mxu0
      %v1011 = vadd.f32 %v867, %v1010
      %v1012 = vpop.f32.mrf.mxu0
      %1013 = vdwg.mxu0
      %v1014 = vpack.c.bf16 %v651, %v648
      %v1015 = vpack.c.bf16 %v659, %v656
      %v1016 = vpack.c.bf16 %v667, %v664
      %v1017 = vpack.c.bf16 %v675, %v672
      %v1018 = vpack.c.bf16 %v683, %v680
      %v1019 = vpack.c.bf16 %v691, %v688
      %v1020 = vpack.c.bf16 %v699, %v696
      %v1021 = vpack.c.bf16 %v707, %v704
      %v1022 = vpack.c.bf16 %v787, %v784
      %v1023 = vpack.c.bf16 %v795, %v792
      %v1024 = vpack.c.bf16 %v803, %v800
      %v1025 = vpack.c.bf16 %v811, %v808
      %v1026 = vpack.c.bf16 %v819, %v816
      %v1027 = vpack.c.bf16 %v827, %v824
      %v1028 = vpack.c.bf16 %v835, %v832
      %v1029 = vpack.c.bf16 %v843, %v840
      %v1030 = vpack.c.bf16 %v955, %v952
      %v1031 = vpack.c.bf16 %v963, %v960
      %v1032 = vpack.c.bf16 %v971, %v968
      %v1033 = vpack.c.bf16 %v979, %v976
      %v1034 = vpack.c.bf16 %v987, %v984
      %v1035 = vpack.c.bf16 %v995, %v992
      %v1036 = vpack.c.bf16 %v1003, %v1000
      %v1037 = vpack.c.bf16 %v1011, %v1008
      %vm1038 = vcmask 130048
      %v1040 = vsel %vm1038, %v1014, 0
      %v1043 = vsel %vm1038, %v1015, 0
      %v1046 = vsel %vm1038, %v1016, 0
      %v1049 = vsel %vm1038, %v1017, 0
      %v1052 = vsel %vm1038, %v1018, 0
      %v1055 = vsel %vm1038, %v1019, 0
      %v1058 = vsel %vm1038, %v1020, 0
      %v1061 = vsel %vm1038, %v1021, 0
      %v1064 = vsel %vm1038, %v1022, 0
      %v1067 = vsel %vm1038, %v1023, 0
      %v1070 = vsel %vm1038, %v1024, 0
      %v1073 = vsel %vm1038, %v1025, 0
      %v1076 = vsel %vm1038, %v1026, 0
      %v1079 = vsel %vm1038, %v1027, 0
      %v1082 = vsel %vm1038, %v1028, 0
      %v1085 = vsel %vm1038, %v1029, 0
      %1087 = vmatprep.subr.bf16.mxu0 0
      %1088 = vmatpush1.bf16.xpose.msra.mxu0 %v1085
      %1089 = vmatprep.subr.bf16.mxu0 0
      %1090 = vmatpush1.bf16.xpose.msra.mxu0 %v1082
      %1091 = vmatprep.subr.bf16.mxu0 0
      %1092 = vmatpush1.bf16.xpose.msra.mxu0 %v1079
      %1093 = vmatprep.subr.bf16.mxu0 0
      %1094 = vmatpush1.bf16.xpose.msra.mxu0 %v1076
      %1095 = vmatprep.subr.bf16.mxu0 0
      %1096 = vmatpush1.bf16.xpose.msra.mxu0 %v1073
      %1097 = vmatprep.subr.bf16.mxu0 0
      %1098 = vmatpush1.bf16.xpose.msra.mxu0 %v1070
      %1099 = vmatprep.subr.bf16.mxu0 0
      %1100 = vmatpush1.bf16.xpose.msra.mxu0 %v1067
      %1101 = vmatprep.subr.bf16.mxu0 0
      %1102 = vmatpush1.bf16.xpose.msra.mxu0 %v1064
      %1103 = vmatprep.subr.bf16.mxu0 0
      %1104 = vmatpush2.bf16.xpose.msra.mxu0 0
      %1105 = vmatprep.subr.bf16.mxu0 0
      %1106 = vmatpush2.bf16.xpose.msra.mxu0 0
      %1107 = vmatprep.subr.bf16.mxu0 0
      %1108 = vmatpush2.bf16.xpose.msra.mxu0 0
      %1109 = vmatprep.subr.bf16.mxu0 0
      %1110 = vmatpush2.bf16.xpose.msra.mxu0 0
      %1111 = vmatprep.subr.bf16.mxu0 0
      %1112 = vmatpush2.bf16.xpose.msra.mxu0 0
      %1113 = vmatprep.subr.bf16.mxu0 0
      %1114 = vmatpush2.bf16.xpose.msra.mxu0 0
      %1115 = vmatprep.subr.bf16.mxu0 0
      %1116 = vmatpush2.bf16.xpose.msra.mxu0 0
      %1117 = vmatprep.subr.bf16.mxu0 0
      %1118 = vmatpush2.bf16.xpose.msra.mxu0 0
      %1119 = vmatprep.mubr.bf16.mxu0 0
      %1120 = vmatmul.mubr.bf16.gmra.mxu0 %v1040
      %v1121 = vpop.f32.mrf.mxu0
      %v1122 = vadd.f32 0.0, %v1121
      %v1123 = vpop.f32.mrf.mxu0
      %v1124 = vpop.f32.mrf.mxu0
      %v1125 = vadd.f32 0.0, %v1124
      %v1126 = vpop.f32.mrf.mxu0
      %1127 = vmatprep.mubr.bf16.mxu0 0
      %1128 = vmatmul.mubr.bf16.gmra.mxu0 %v1043
      %v1129 = vpop.f32.mrf.mxu0
      %v1130 = vadd.f32 0.0, %v1129
      %v1131 = vpop.f32.mrf.mxu0
      %v1132 = vpop.f32.mrf.mxu0
      %v1133 = vadd.f32 0.0, %v1132
      %v1134 = vpop.f32.mrf.mxu0
      %1135 = vmatprep.mubr.bf16.mxu0 0
      %1136 = vmatmul.mubr.bf16.gmra.mxu0 %v1046
      %v1137 = vpop.f32.mrf.mxu0
      %v1138 = vadd.f32 0.0, %v1137
      %v1139 = vpop.f32.mrf.mxu0
      %v1140 = vpop.f32.mrf.mxu0
      %v1141 = vadd.f32 0.0, %v1140
      %v1142 = vpop.f32.mrf.mxu0
      %1143 = vmatprep.mubr.bf16.mxu0 0
      %1144 = vmatmul.mubr.bf16.gmra.mxu0 %v1049
      %v1145 = vpop.f32.mrf.mxu0
      %v1146 = vadd.f32 0.0, %v1145
      %v1147 = vpop.f32.mrf.mxu0
      %v1148 = vpop.f32.mrf.mxu0
      %v1149 = vadd.f32 0.0, %v1148
      %v1150 = vpop.f32.mrf.mxu0
      %1151 = vmatprep.mubr.bf16.mxu0 0
      %1152 = vmatmul.mubr.bf16.gmra.mxu0 %v1052
      %v1153 = vpop.f32.mrf.mxu0
      %v1154 = vadd.f32 0.0, %v1153
      %v1155 = vpop.f32.mrf.mxu0
      %v1156 = vpop.f32.mrf.mxu0
      %v1157 = vadd.f32 0.0, %v1156
      %v1158 = vpop.f32.mrf.mxu0
      %1159 = vmatprep.mubr.bf16.mxu0 0
      %1160 = vmatmul.mubr.bf16.gmra.mxu0 %v1055
      %v1161 = vpop.f32.mrf.mxu0
      %v1162 = vadd.f32 0.0, %v1161
      %v1163 = vpop.f32.mrf.mxu0
      %v1164 = vpop.f32.mrf.mxu0
      %v1165 = vadd.f32 0.0, %v1164
      %v1166 = vpop.f32.mrf.mxu0
      %1167 = vmatprep.mubr.bf16.mxu0 0
      %1168 = vmatmul.mubr.bf16.gmra.mxu0 %v1058
      %v1169 = vpop.f32.mrf.mxu0
      %v1170 = vadd.f32 0.0, %v1169
      %v1171 = vpop.f32.mrf.mxu0
      %v1172 = vpop.f32.mrf.mxu0
      %v1173 = vadd.f32 0.0, %v1172
      %v1174 = vpop.f32.mrf.mxu0
      %1175 = vmatprep.mubr.bf16.mxu0 0
      %1176 = vmatmul.mubr.bf16.gmra.mxu0 %v1061
      %v1177 = vpop.f32.mrf.mxu0
      %v1178 = vadd.f32 0.0, %v1177
      %v1179 = vpop.f32.mrf.mxu0
      %v1180 = vpop.f32.mrf.mxu0
      %v1181 = vadd.f32 0.0, %v1180
      %v1182 = vpop.f32.mrf.mxu0
      %1183 = vdwg.mxu0
      %v1184 = vmul.f32 %v1122, 0.25
      %v1185 = vmul.f32 %v1125, 0.25
      %v1186 = vmul.f32 %v1130, 0.25
      %v1187 = vmul.f32 %v1133, 0.25
      %v1188 = vmul.f32 %v1138, 0.25
      %v1189 = vmul.f32 %v1141, 0.25
      %v1190 = vmul.f32 %v1146, 0.25
      %v1191 = vmul.f32 %v1149, 0.25
      %v1192 = vmul.f32 %v1154, 0.25
      %v1193 = vmul.f32 %v1157, 0.25
      %v1194 = vmul.f32 %v1162, 0.25
      %v1195 = vmul.f32 %v1165, 0.25
      %v1196 = vmul.f32 %v1170, 0.25
      %v1197 = vmul.f32 %v1173, 0.25
      %v1198 = vmul.f32 %v1178, 0.25
      %v1199 = vmul.f32 %v1181, 0.25
      %v1200 = vadd.f32 %v1184, %v540
      %v1201 = vadd.f32 %v1185, %v540
      %v1202 = vadd.f32 %v1186, %v540
      %v1203 = vadd.f32 %v1187, %v540
      %v1204 = vadd.f32 %v1188, %v540
      %v1205 = vadd.f32 %v1189, %v540
      %v1206 = vadd.f32 %v1190, %v540
      %v1207 = vadd.f32 %v1191, %v540
      %v1208 = vadd.f32 %v1192, %v540
      %v1209 = vadd.f32 %v1193, %v540
      %v1210 = vadd.f32 %v1194, %v540
      %v1211 = vadd.f32 %v1195, %v540
      %v1212 = vadd.f32 %v1196, %v540
      %v1213 = vadd.f32 %v1197, %v540
      %v1214 = vadd.f32 %v1198, %v540
      %v1215 = vadd.f32 %v1199, %v540
      %1216 = vmax.xlane.f32.xlu0 %v1200
      %v1217 = vpop.xlane.xlu0 %1216
      %1218 = vmax.xlane.f32.xlu0 %v1201
      %v1219 = vpop.xlane.xlu0 %1218
      %1220 = vmax.xlane.f32.xlu0 %v1202
      %v1221 = vpop.xlane.xlu0 %1220
      %1222 = vmax.xlane.f32.xlu0 %v1203
      %v1223 = vpop.xlane.xlu0 %1222
      %1224 = vmax.xlane.f32.xlu0 %v1204
      %v1225 = vpop.xlane.xlu0 %1224
      %1226 = vmax.xlane.f32.xlu0 %v1205
      %v1227 = vpop.xlane.xlu0 %1226
      %1228 = vmax.xlane.f32.xlu0 %v1206
      %v1229 = vpop.xlane.xlu0 %1228
      %1230 = vmax.xlane.f32.xlu0 %v1207
      %v1231 = vpop.xlane.xlu0 %1230
      %1232 = vmax.xlane.f32.xlu0 %v1208
      %v1233 = vpop.xlane.xlu0 %1232
      %1234 = vmax.xlane.f32.xlu0 %v1209
      %v1235 = vpop.xlane.xlu0 %1234
      %1236 = vmax.xlane.f32.xlu0 %v1210
      %v1237 = vpop.xlane.xlu0 %1236
      %1238 = vmax.xlane.f32.xlu0 %v1211
      %v1239 = vpop.xlane.xlu0 %1238
      %1240 = vmax.xlane.f32.xlu0 %v1212
      %v1241 = vpop.xlane.xlu0 %1240
      %1242 = vmax.xlane.f32.xlu0 %v1213
      %v1243 = vpop.xlane.xlu0 %1242
      %1244 = vmax.xlane.f32.xlu0 %v1214
      %v1245 = vpop.xlane.xlu0 %1244
      %1246 = vmax.xlane.f32.xlu0 %v1215
      %v1247 = vpop.xlane.xlu0 %1246
      %v1248 = vsub.f32 %v1200, %v1217
      %v1249 = vsub.f32 %v1201, %v1219
      %v1250 = vsub.f32 %v1202, %v1221
      %v1251 = vsub.f32 %v1203, %v1223
      %v1252 = vsub.f32 %v1204, %v1225
      %v1253 = vsub.f32 %v1205, %v1227
      %v1254 = vsub.f32 %v1206, %v1229
      %v1255 = vsub.f32 %v1207, %v1231
      %v1256 = vsub.f32 %v1208, %v1233
      %v1257 = vsub.f32 %v1209, %v1235
      %v1258 = vsub.f32 %v1210, %v1237
      %v1259 = vsub.f32 %v1211, %v1239
      %v1260 = vsub.f32 %v1212, %v1241
      %v1261 = vsub.f32 %v1213, %v1243
      %v1262 = vsub.f32 %v1214, %v1245
      %v1263 = vsub.f32 %v1215, %v1247
      %v1264 = vmul.f32 %v1248, 1.442695
      %v1265 = vpow.pop %v1264
      %v1266 = vmul.f32 %v1249, 1.442695
      %v1267 = vpow.pop %v1266
      %v1268 = vmul.f32 %v1250, 1.442695
      %v1269 = vpow.pop %v1268
      %v1270 = vmul.f32 %v1251, 1.442695
      %v1271 = vpow.pop %v1270
      %v1272 = vmul.f32 %v1252, 1.442695
      %v1273 = vpow.pop %v1272
      %v1274 = vmul.f32 %v1253, 1.442695
      %v1275 = vpow.pop %v1274
      %v1276 = vmul.f32 %v1254, 1.442695
      %v1277 = vpow.pop %v1276
      %v1278 = vmul.f32 %v1255, 1.442695
      %v1279 = vpow.pop %v1278
      %v1280 = vmul.f32 %v1256, 1.442695
      %v1281 = vpow.pop %v1280
      %v1282 = vmul.f32 %v1257, 1.442695
      %v1283 = vpow.pop %v1282
      %v1284 = vmul.f32 %v1258, 1.442695
      %v1285 = vpow.pop %v1284
      %v1286 = vmul.f32 %v1259, 1.442695
      %v1287 = vpow.pop %v1286
      %v1288 = vmul.f32 %v1260, 1.442695
      %v1289 = vpow.pop %v1288
      %v1290 = vmul.f32 %v1261, 1.442695
      %v1291 = vpow.pop %v1290
      %v1292 = vmul.f32 %v1262, 1.442695
      %v1293 = vpow.pop %v1292
      %v1294 = vmul.f32 %v1263, 1.442695
      %v1295 = vpow.pop %v1294
      %1296 = vadd.xlane.f32.xlu0 %v1265
      %v1297 = vpop.xlane.xlu0 %1296
      %1298 = vadd.xlane.f32.xlu0 %v1267
      %v1299 = vpop.xlane.xlu0 %1298
      %1300 = vadd.xlane.f32.xlu0 %v1269
      %v1301 = vpop.xlane.xlu0 %1300
      %1302 = vadd.xlane.f32.xlu0 %v1271
      %v1303 = vpop.xlane.xlu0 %1302
      %1304 = vadd.xlane.f32.xlu0 %v1273
      %v1305 = vpop.xlane.xlu0 %1304
      %1306 = vadd.xlane.f32.xlu0 %v1275
      %v1307 = vpop.xlane.xlu0 %1306
      %1308 = vadd.xlane.f32.xlu0 %v1277
      %v1309 = vpop.xlane.xlu0 %1308
      %1310 = vadd.xlane.f32.xlu0 %v1279
      %v1311 = vpop.xlane.xlu0 %1310
      %1312 = vadd.xlane.f32.xlu0 %v1281
      %v1313 = vpop.xlane.xlu0 %1312
      %1314 = vadd.xlane.f32.xlu0 %v1283
      %v1315 = vpop.xlane.xlu0 %1314
      %1316 = vadd.xlane.f32.xlu0 %v1285
      %v1317 = vpop.xlane.xlu0 %1316
      %1318 = vadd.xlane.f32.xlu0 %v1287
      %v1319 = vpop.xlane.xlu0 %1318
      %1320 = vadd.xlane.f32.xlu0 %v1289
      %v1321 = vpop.xlane.xlu0 %1320
      %1322 = vadd.xlane.f32.xlu0 %v1291
      %v1323 = vpop.xlane.xlu0 %1322
      %1324 = vadd.xlane.f32.xlu0 %v1293
      %v1325 = vpop.xlane.xlu0 %1324
      %1326 = vadd.xlane.f32.xlu0 %v1295
      %v1327 = vpop.xlane.xlu0 %1326
      %v1328 = vrcp.pop %v1297
      %v1329 = vrcp.pop %v1299
      %v1330 = vrcp.pop %v1301
      %v1331 = vrcp.pop %v1303
      %v1332 = vrcp.pop %v1305
      %v1333 = vrcp.pop %v1307
      %v1334 = vrcp.pop %v1309
      %v1335 = vrcp.pop %v1311
      %v1336 = vrcp.pop %v1313
      %v1337 = vrcp.pop %v1315
      %v1338 = vrcp.pop %v1317
      %v1339 = vrcp.pop %v1319
      %v1340 = vrcp.pop %v1321
      %v1341 = vrcp.pop %v1323
      %v1342 = vrcp.pop %v1325
      %v1343 = vrcp.pop %v1327
      %v1344 = vmul.f32 %v1265, %v1328
      %v1345 = vmul.f32 %v1267, %v1329
      %v1346 = vmul.f32 %v1269, %v1330
      %v1347 = vmul.f32 %v1271, %v1331
      %v1348 = vmul.f32 %v1273, %v1332
      %v1349 = vmul.f32 %v1275, %v1333
      %v1350 = vmul.f32 %v1277, %v1334
      %v1351 = vmul.f32 %v1279, %v1335
      %v1352 = vmul.f32 %v1281, %v1336
      %v1353 = vmul.f32 %v1283, %v1337
      %v1354 = vmul.f32 %v1285, %v1338
      %v1355 = vmul.f32 %v1287, %v1339
      %v1356 = vmul.f32 %v1289, %v1340
      %v1357 = vmul.f32 %v1291, %v1341
      %v1358 = vmul.f32 %v1293, %v1342
      %v1359 = vmul.f32 %v1295, %v1343
      %v1360 = vpack.c.bf16 %v1345, %v1344
      %v1361 = vpack.c.bf16 %v1347, %v1346
      %v1362 = vpack.c.bf16 %v1349, %v1348
      %v1363 = vpack.c.bf16 %v1351, %v1350
      %v1364 = vpack.c.bf16 %v1353, %v1352
      %v1365 = vpack.c.bf16 %v1355, %v1354
      %v1366 = vpack.c.bf16 %v1357, %v1356
      %v1367 = vpack.c.bf16 %v1359, %v1358
      %1368 = vmatprep.subr.bf16.mxu0 0
      %1369 = vmatpush1.bf16.msra.mxu0 %v1037
      %1370 = vmatprep.subr.bf16.mxu0 0
      %1371 = vmatpush1.bf16.msra.mxu0 %v1036
      %1372 = vmatprep.subr.bf16.mxu0 0
      %1373 = vmatpush1.bf16.msra.mxu0 %v1035
      %1374 = vmatprep.subr.bf16.mxu0 0
      %1375 = vmatpush1.bf16.msra.mxu0 %v1034
      %1376 = vmatprep.subr.bf16.mxu0 0
      %1377 = vmatpush1.bf16.msra.mxu0 %v1033
      %1378 = vmatprep.subr.bf16.mxu0 0
      %1379 = vmatpush1.bf16.msra.mxu0 %v1032
      %1380 = vmatprep.subr.bf16.mxu0 0
      %1381 = vmatpush1.bf16.msra.mxu0 %v1031
      %1382 = vmatprep.subr.bf16.mxu0 0
      %1383 = vmatpush1.bf16.msra.mxu0 %v1030
      %1384 = vmatprep.subr.bf16.mxu0 0
      %1385 = vmatpush2.bf16.msra.mxu0 0
      %1386 = vmatprep.subr.bf16.mxu0 0
      %1387 = vmatpush2.bf16.msra.mxu0 0
      %1388 = vmatprep.subr.bf16.mxu0 0
      %1389 = vmatpush2.bf16.msra.mxu0 0
      %1390 = vmatprep.subr.bf16.mxu0 0
      %1391 = vmatpush2.bf16.msra.mxu0 0
      %1392 = vmatprep.subr.bf16.mxu0 0
      %1393 = vmatpush2.bf16.msra.mxu0 0
      %1394 = vmatprep.subr.bf16.mxu0 0
      %1395 = vmatpush2.bf16.msra.mxu0 0
      %1396 = vmatprep.subr.bf16.mxu0 0
      %1397 = vmatpush2.bf16.msra.mxu0 0
      %1398 = vmatprep.subr.bf16.mxu0 0
      %1399 = vmatpush2.bf16.msra.mxu0 0
      %1400 = vmatprep.mubr.bf16.mxu0 0
      %1401 = vmatmul.mubr.bf16.gmra.mxu0 %v1360
      %v1402 = vpop.f32.mrf.mxu0
      %v1403 = vadd.f32 0.0, %v1402
      %v1404 = vpop.f32.mrf.mxu0
      %v1405 = vpop.f32.mrf.mxu0
      %v1406 = vadd.f32 0.0, %v1405
      %v1407 = vpop.f32.mrf.mxu0
      %1408 = vmatprep.mubr.bf16.mxu0 0
      %1409 = vmatmul.mubr.bf16.gmra.mxu0 %v1361
      %v1410 = vpop.f32.mrf.mxu0
      %v1411 = vadd.f32 0.0, %v1410
      %v1412 = vpop.f32.mrf.mxu0
      %v1413 = vpop.f32.mrf.mxu0
      %v1414 = vadd.f32 0.0, %v1413
      %v1415 = vpop.f32.mrf.mxu0
      %1416 = vmatprep.mubr.bf16.mxu0 0
      %1417 = vmatmul.mubr.bf16.gmra.mxu0 %v1362
      %v1418 = vpop.f32.mrf.mxu0
      %v1419 = vadd.f32 0.0, %v1418
      %v1420 = vpop.f32.mrf.mxu0
      %v1421 = vpop.f32.mrf.mxu0
      %v1422 = vadd.f32 0.0, %v1421
      %v1423 = vpop.f32.mrf.mxu0
      %1424 = vmatprep.mubr.bf16.mxu0 0
      %1425 = vmatmul.mubr.bf16.gmra.mxu0 %v1363
      %v1426 = vpop.f32.mrf.mxu0
      %v1427 = vadd.f32 0.0, %v1426
      %v1428 = vpop.f32.mrf.mxu0
      %v1429 = vpop.f32.mrf.mxu0
      %v1430 = vadd.f32 0.0, %v1429
      %v1431 = vpop.f32.mrf.mxu0
      %1432 = vmatprep.mubr.bf16.mxu0 0
      %1433 = vmatmul.mubr.bf16.gmra.mxu0 %v1364
      %v1434 = vpop.f32.mrf.mxu0
      %v1435 = vadd.f32 0.0, %v1434
      %v1436 = vpop.f32.mrf.mxu0
      %v1437 = vpop.f32.mrf.mxu0
      %v1438 = vadd.f32 0.0, %v1437
      %v1439 = vpop.f32.mrf.mxu0
      %1440 = vmatprep.mubr.bf16.mxu0 0
      %1441 = vmatmul.mubr.bf16.gmra.mxu0 %v1365
      %v1442 = vpop.f32.mrf.mxu0
      %v1443 = vadd.f32 0.0, %v1442
      %v1444 = vpop.f32.mrf.mxu0
      %v1445 = vpop.f32.mrf.mxu0
      %v1446 = vadd.f32 0.0, %v1445
      %v1447 = vpop.f32.mrf.mxu0
      %1448 = vmatprep.mubr.bf16.mxu0 0
      %1449 = vmatmul.mubr.bf16.gmra.mxu0 %v1366
      %v1450 = vpop.f32.mrf.mxu0
      %v1451 = vadd.f32 0.0, %v1450
      %v1452 = vpop.f32.mrf.mxu0
      %v1453 = vpop.f32.mrf.mxu0
      %v1454 = vadd.f32 0.0, %v1453
      %v1455 = vpop.f32.mrf.mxu0
      %1456 = vmatprep.mubr.bf16.mxu0 0
      %1457 = vmatmul.mubr.bf16.gmra.mxu0 %v1367
      %v1458 = vpop.f32.mrf.mxu0
      %v1459 = vadd.f32 0.0, %v1458
      %v1460 = vpop.f32.mrf.mxu0
      %v1461 = vpop.f32.mrf.mxu0
      %v1462 = vadd.f32 0.0, %v1461
      %v1463 = vpop.f32.mrf.mxu0
      %1464 = vdwg.mxu0
      %1465 = vst.msk [vmem:[#allocation2] sm:$0xff] %vm1038, %v1403
      %1466 = vst.msk [vmem:[#allocation2 + $0x8] sm:$0xff] %vm1038, %v1406
      %1467 = vst.msk [vmem:[#allocation2 + $0x10] sm:$0xff] %vm1038, %v1411
      %1468 = vst.msk [vmem:[#allocation2 + $0x18] sm:$0xff] %vm1038, %v1414
      %1469 = vst.msk [vmem:[#allocation2 + $0x20] sm:$0xff] %vm1038, %v1419
      %1470 = vst.msk [vmem:[#allocation2 + $0x28] sm:$0xff] %vm1038, %v1422
      %1471 = vst.msk [vmem:[#allocation2 + $0x30] sm:$0xff] %vm1038, %v1427
      %1472 = vst.msk [vmem:[#allocation2 + $0x38] sm:$0xff] %vm1038, %v1430
      %1473 = vst.msk [vmem:[#allocation2 + $0x40] sm:$0xff] %vm1038, %v1435
      %1474 = vst.msk [vmem:[#allocation2 + $0x48] sm:$0xff] %vm1038, %v1438
      %1475 = vst.msk [vmem:[#allocation2 + $0x50] sm:$0xff] %vm1038, %v1443
      %1476 = vst.msk [vmem:[#allocation2 + $0x58] sm:$0xff] %vm1038, %v1446
      %1477 = vst.msk [vmem:[#allocation2 + $0x60] sm:$0xff] %vm1038, %v1451
      %1478 = vst.msk [vmem:[#allocation2 + $0x68] sm:$0xff] %vm1038, %v1454
      %1479 = vst.msk [vmem:[#allocation2 + $0x70] sm:$0xff] %vm1038, %v1459
      %1480 = vst.msk [vmem:[#allocation2 + $0x78] sm:$0xff] %vm1038, %v1462
      %1489 = vrot.lane.b32.xlu0 %v1014, 112
      %v1490 = vpop.permute.xlu0 %1489
      %1491 = vrot.lane.b32.xlu0 %v1015, 112
      %v1492 = vpop.permute.xlu0 %1491
      %1493 = vrot.lane.b32.xlu0 %v1016, 112
      %v1494 = vpop.permute.xlu0 %1493
      %1495 = vrot.lane.b32.xlu0 %v1017, 112
      %v1496 = vpop.permute.xlu0 %1495
      %1497 = vrot.lane.b32.xlu0 %v1018, 112
      %v1498 = vpop.permute.xlu0 %1497
      %1499 = vrot.lane.b32.xlu0 %v1019, 112
      %v1500 = vpop.permute.xlu0 %1499
      %1501 = vrot.lane.b32.xlu0 %v1020, 112
      %v1502 = vpop.permute.xlu0 %1501
      %1503 = vrot.lane.b32.xlu0 %v1021, 112
      %v1504 = vpop.permute.xlu0 %1503
      %1513 = vrot.lane.b32.xlu0 %v1022, 112
      %v1514 = vpop.permute.xlu0 %1513
      %1515 = vrot.lane.b32.xlu0 %v1023, 112
      %v1516 = vpop.permute.xlu0 %1515
      %1517 = vrot.lane.b32.xlu0 %v1024, 112
      %v1518 = vpop.permute.xlu0 %1517
      %1519 = vrot.lane.b32.xlu0 %v1025, 112
      %v1520 = vpop.permute.xlu0 %1519
      %1521 = vrot.lane.b32.xlu0 %v1026, 112
      %v1522 = vpop.permute.xlu0 %1521
      %1523 = vrot.lane.b32.xlu0 %v1027, 112
      %v1524 = vpop.permute.xlu0 %1523
      %1525 = vrot.lane.b32.xlu0 %v1028, 112
      %v1526 = vpop.permute.xlu0 %1525
      %1527 = vrot.lane.b32.xlu0 %v1029, 112
      %v1528 = vpop.permute.xlu0 %1527
      %v1530 = vsel %vm1038, %v1490, 0
      %v1533 = vsel %vm1038, %v1492, 0
      %v1536 = vsel %vm1038, %v1494, 0
      %v1539 = vsel %vm1038, %v1496, 0
      %v1542 = vsel %vm1038, %v1498, 0
      %v1545 = vsel %vm1038, %v1500, 0
      %v1548 = vsel %vm1038, %v1502, 0
      %v1551 = vsel %vm1038, %v1504, 0
      %v1554 = vsel %vm1038, %v1514, 0
      %v1557 = vsel %vm1038, %v1516, 0
      %v1560 = vsel %vm1038, %v1518, 0
      %v1563 = vsel %vm1038, %v1520, 0
      %v1566 = vsel %vm1038, %v1522, 0
      %v1569 = vsel %vm1038, %v1524, 0
      %v1572 = vsel %vm1038, %v1526, 0
      %v1575 = vsel %vm1038, %v1528, 0
      %1577 = vmatprep.subr.bf16.mxu0 0
      %1578 = vmatpush1.bf16.xpose.msra.mxu0 %v1575
      %1579 = vmatprep.subr.bf16.mxu0 0
      %1580 = vmatpush1.bf16.xpose.msra.mxu0 %v1572
      %1581 = vmatprep.subr.bf16.mxu0 0
      %1582 = vmatpush1.bf16.xpose.msra.mxu0 %v1569
      %1583 = vmatprep.subr.bf16.mxu0 0
      %1584 = vmatpush1.bf16.xpose.msra.mxu0 %v1566
      %1585 = vmatprep.subr.bf16.mxu0 0
      %1586 = vmatpush1.bf16.xpose.msra.mxu0 %v1563
      %1587 = vmatprep.subr.bf16.mxu0 0
      %1588 = vmatpush1.bf16.xpose.msra.mxu0 %v1560
      %1589 = vmatprep.subr.bf16.mxu0 0
      %1590 = vmatpush1.bf16.xpose.msra.mxu0 %v1557
      %1591 = vmatprep.subr.bf16.mxu0 0
      %1592 = vmatpush1.bf16.xpose.msra.mxu0 %v1554
      %1593 = vmatprep.subr.bf16.mxu0 0
      %1594 = vmatpush2.bf16.xpose.msra.mxu0 0
      %1595 = vmatprep.subr.bf16.mxu0 0
      %1596 = vmatpush2.bf16.xpose.msra.mxu0 0
      %1597 = vmatprep.subr.bf16.mxu0 0
      %1598 = vmatpush2.bf16.xpose.msra.mxu0 0
      %1599 = vmatprep.subr.bf16.mxu0 0
      %1600 = vmatpush2.bf16.xpose.msra.mxu0 0
      %1601 = vmatprep.subr.bf16.mxu0 0
      %1602 = vmatpush2.bf16.xpose.msra.mxu0 0
      %1603 = vmatprep.subr.bf16.mxu0 0
      %1604 = vmatpush2.bf16.xpose.msra.mxu0 0
      %1605 = vmatprep.subr.bf16.mxu0 0
      %1606 = vmatpush2.bf16.xpose.msra.mxu0 0
      %1607 = vmatprep.subr.bf16.mxu0 0
      %1608 = vmatpush2.bf16.xpose.msra.mxu0 0
      %1609 = vmatprep.mubr.bf16.mxu0 0
      %1610 = vmatmul.mubr.bf16.gmra.mxu0 %v1530
      %v1611 = vpop.f32.mrf.mxu0
      %v1612 = vadd.f32 0.0, %v1611
      %v1613 = vpop.f32.mrf.mxu0
      %v1614 = vpop.f32.mrf.mxu0
      %v1615 = vadd.f32 0.0, %v1614
      %v1616 = vpop.f32.mrf.mxu0
      %1617 = vmatprep.mubr.bf16.mxu0 0
      %1618 = vmatmul.mubr.bf16.gmra.mxu0 %v1533
      %v1619 = vpop.f32.mrf.mxu0
      %v1620 = vadd.f32 0.0, %v1619
      %v1621 = vpop.f32.mrf.mxu0
      %v1622 = vpop.f32.mrf.mxu0
      %v1623 = vadd.f32 0.0, %v1622
      %v1624 = vpop.f32.mrf.mxu0
      %1625 = vmatprep.mubr.bf16.mxu0 0
      %1626 = vmatmul.mubr.bf16.gmra.mxu0 %v1536
      %v1627 = vpop.f32.mrf.mxu0
      %v1628 = vadd.f32 0.0, %v1627
      %v1629 = vpop.f32.mrf.mxu0
      %v1630 = vpop.f32.mrf.mxu0
      %v1631 = vadd.f32 0.0, %v1630
      %v1632 = vpop.f32.mrf.mxu0
      %1633 = vmatprep.mubr.bf16.mxu0 0
      %1634 = vmatmul.mubr.bf16.gmra.mxu0 %v1539
      %v1635 = vpop.f32.mrf.mxu0
      %v1636 = vadd.f32 0.0, %v1635
      %v1637 = vpop.f32.mrf.mxu0
      %v1638 = vpop.f32.mrf.mxu0
      %v1639 = vadd.f32 0.0, %v1638
      %v1640 = vpop.f32.mrf.mxu0
      %1641 = vmatprep.mubr.bf16.mxu0 0
      %1642 = vmatmul.mubr.bf16.gmra.mxu0 %v1542
      %v1643 = vpop.f32.mrf.mxu0
      %v1644 = vadd.f32 0.0, %v1643
      %v1645 = vpop.f32.mrf.mxu0
      %v1646 = vpop.f32.mrf.mxu0
      %v1647 = vadd.f32 0.0, %v1646
      %v1648 = vpop.f32.mrf.mxu0
      %1649 = vmatprep.mubr.bf16.mxu0 0
      %1650 = vmatmul.mubr.bf16.gmra.mxu0 %v1545
      %v1651 = vpop.f32.mrf.mxu0
      %v1652 = vadd.f32 0.0, %v1651
      %v1653 = vpop.f32.mrf.mxu0
      %v1654 = vpop.f32.mrf.mxu0
      %v1655 = vadd.f32 0.0, %v1654
      %v1656 = vpop.f32.mrf.mxu0
      %1657 = vmatprep.mubr.bf16.mxu0 0
      %1658 = vmatmul.mubr.bf16.gmra.mxu0 %v1548
      %v1659 = vpop.f32.mrf.mxu0
      %v1660 = vadd.f32 0.0, %v1659
      %v1661 = vpop.f32.mrf.mxu0
      %v1662 = vpop.f32.mrf.mxu0
      %v1663 = vadd.f32 0.0, %v1662
      %v1664 = vpop.f32.mrf.mxu0
      %1665 = vmatprep.mubr.bf16.mxu0 0
      %1666 = vmatmul.mubr.bf16.gmra.mxu0 %v1551
      %v1667 = vpop.f32.mrf.mxu0
      %v1668 = vadd.f32 0.0, %v1667
      %v1669 = vpop.f32.mrf.mxu0
      %v1670 = vpop.f32.mrf.mxu0
      %v1671 = vadd.f32 0.0, %v1670
      %v1672 = vpop.f32.mrf.mxu0
      %1673 = vdwg.mxu0
      %v1674 = vmul.f32 %v1612, 0.25
      %v1675 = vmul.f32 %v1615, 0.25
      %v1676 = vmul.f32 %v1620, 0.25
      %v1677 = vmul.f32 %v1623, 0.25
      %v1678 = vmul.f32 %v1628, 0.25
      %v1679 = vmul.f32 %v1631, 0.25
      %v1680 = vmul.f32 %v1636, 0.25
      %v1681 = vmul.f32 %v1639, 0.25
      %v1682 = vmul.f32 %v1644, 0.25
      %v1683 = vmul.f32 %v1647, 0.25
      %v1684 = vmul.f32 %v1652, 0.25
      %v1685 = vmul.f32 %v1655, 0.25
      %v1686 = vmul.f32 %v1660, 0.25
      %v1687 = vmul.f32 %v1663, 0.25
      %v1688 = vmul.f32 %v1668, 0.25
      %v1689 = vmul.f32 %v1671, 0.25
      %v1690 = vadd.f32 %v1674, %v540
      %v1691 = vadd.f32 %v1675, %v540
      %v1692 = vadd.f32 %v1676, %v540
      %v1693 = vadd.f32 %v1677, %v540
      %v1694 = vadd.f32 %v1678, %v540
      %v1695 = vadd.f32 %v1679, %v540
      %v1696 = vadd.f32 %v1680, %v540
      %v1697 = vadd.f32 %v1681, %v540
      %v1698 = vadd.f32 %v1682, %v540
      %v1699 = vadd.f32 %v1683, %v540
      %v1700 = vadd.f32 %v1684, %v540
      %v1701 = vadd.f32 %v1685, %v540
      %v1702 = vadd.f32 %v1686, %v540
      %v1703 = vadd.f32 %v1687, %v540
      %v1704 = vadd.f32 %v1688, %v540
      %v1705 = vadd.f32 %v1689, %v540
      %1706 = vmax.xlane.f32.xlu0 %v1690
      %v1707 = vpop.xlane.xlu0 %1706
      %1708 = vmax.xlane.f32.xlu0 %v1691
      %v1709 = vpop.xlane.xlu0 %1708
      %1710 = vmax.xlane.f32.xlu0 %v1692
      %v1711 = vpop.xlane.xlu0 %1710
      %1712 = vmax.xlane.f32.xlu0 %v1693
      %v1713 = vpop.xlane.xlu0 %1712
      %1714 = vmax.xlane.f32.xlu0 %v1694
      %v1715 = vpop.xlane.xlu0 %1714
      %1716 = vmax.xlane.f32.xlu0 %v1695
      %v1717 = vpop.xlane.xlu0 %1716
      %1718 = vmax.xlane.f32.xlu0 %v1696
      %v1719 = vpop.xlane.xlu0 %1718
      %1720 = vmax.xlane.f32.xlu0 %v1697
      %v1721 = vpop.xlane.xlu0 %1720
      %1722 = vmax.xlane.f32.xlu0 %v1698
      %v1723 = vpop.xlane.xlu0 %1722
      %1724 = vmax.xlane.f32.xlu0 %v1699
      %v1725 = vpop.xlane.xlu0 %1724
      %1726 = vmax.xlane.f32.xlu0 %v1700
      %v1727 = vpop.xlane.xlu0 %1726
      %1728 = vmax.xlane.f32.xlu0 %v1701
      %v1729 = vpop.xlane.xlu0 %1728
      %1730 = vmax.xlane.f32.xlu0 %v1702
      %v1731 = vpop.xlane.xlu0 %1730
      %1732 = vmax.xlane.f32.xlu0 %v1703
      %v1733 = vpop.xlane.xlu0 %1732
      %1734 = vmax.xlane.f32.xlu0 %v1704
      %v1735 = vpop.xlane.xlu0 %1734
      %1736 = vmax.xlane.f32.xlu0 %v1705
      %v1737 = vpop.xlane.xlu0 %1736
      %v1738 = vsub.f32 %v1690, %v1707
      %v1739 = vsub.f32 %v1691, %v1709
      %v1740 = vsub.f32 %v1692, %v1711
      %v1741 = vsub.f32 %v1693, %v1713
      %v1742 = vsub.f32 %v1694, %v1715
      %v1743 = vsub.f32 %v1695, %v1717
      %v1744 = vsub.f32 %v1696, %v1719
      %v1745 = vsub.f32 %v1697, %v1721
      %v1746 = vsub.f32 %v1698, %v1723
      %v1747 = vsub.f32 %v1699, %v1725
      %v1748 = vsub.f32 %v1700, %v1727
      %v1749 = vsub.f32 %v1701, %v1729
      %v1750 = vsub.f32 %v1702, %v1731
      %v1751 = vsub.f32 %v1703, %v1733
      %v1752 = vsub.f32 %v1704, %v1735
      %v1753 = vsub.f32 %v1705, %v1737
      %v1754 = vmul.f32 %v1738, 1.442695
      %v1755 = vpow.pop %v1754
      %v1756 = vmul.f32 %v1739, 1.442695
      %v1757 = vpow.pop %v1756
      %v1758 = vmul.f32 %v1740, 1.442695
      %v1759 = vpow.pop %v1758
      %v1760 = vmul.f32 %v1741, 1.442695
      %v1761 = vpow.pop %v1760
      %v1762 = vmul.f32 %v1742, 1.442695
      %v1763 = vpow.pop %v1762
      %v1764 = vmul.f32 %v1743, 1.442695
      %v1765 = vpow.pop %v1764
      %v1766 = vmul.f32 %v1744, 1.442695
      %v1767 = vpow.pop %v1766
      %v1768 = vmul.f32 %v1745, 1.442695
      %v1769 = vpow.pop %v1768
      %v1770 = vmul.f32 %v1746, 1.442695
      %v1771 = vpow.pop %v1770
      %v1772 = vmul.f32 %v1747, 1.442695
      %v1773 = vpow.pop %v1772
      %v1774 = vmul.f32 %v1748, 1.442695
      %v1775 = vpow.pop %v1774
      %v1776 = vmul.f32 %v1749, 1.442695
      %v1777 = vpow.pop %v1776
      %v1778 = vmul.f32 %v1750, 1.442695
      %v1779 = vpow.pop %v1778
      %v1780 = vmul.f32 %v1751, 1.442695
      %v1781 = vpow.pop %v1780
      %v1782 = vmul.f32 %v1752, 1.442695
      %v1783 = vpow.pop %v1782
      %v1784 = vmul.f32 %v1753, 1.442695
      %v1785 = vpow.pop %v1784
      %1786 = vadd.xlane.f32.xlu0 %v1755
      %v1787 = vpop.xlane.xlu0 %1786
      %1788 = vadd.xlane.f32.xlu0 %v1757
      %v1789 = vpop.xlane.xlu0 %1788
      %1790 = vadd.xlane.f32.xlu0 %v1759
      %v1791 = vpop.xlane.xlu0 %1790
      %1792 = vadd.xlane.f32.xlu0 %v1761
      %v1793 = vpop.xlane.xlu0 %1792
      %1794 = vadd.xlane.f32.xlu0 %v1763
      %v1795 = vpop.xlane.xlu0 %1794
      %1796 = vadd.xlane.f32.xlu0 %v1765
      %v1797 = vpop.xlane.xlu0 %1796
      %1798 = vadd.xlane.f32.xlu0 %v1767
      %v1799 = vpop.xlane.xlu0 %1798
      %1800 = vadd.xlane.f32.xlu0 %v1769
      %v1801 = vpop.xlane.xlu0 %1800
      %1802 = vadd.xlane.f32.xlu0 %v1771
      %v1803 = vpop.xlane.xlu0 %1802
      %1804 = vadd.xlane.f32.xlu0 %v1773
      %v1805 = vpop.xlane.xlu0 %1804
      %1806 = vadd.xlane.f32.xlu0 %v1775
      %v1807 = vpop.xlane.xlu0 %1806
      %1808 = vadd.xlane.f32.xlu0 %v1777
      %v1809 = vpop.xlane.xlu0 %1808
      %1810 = vadd.xlane.f32.xlu0 %v1779
      %v1811 = vpop.xlane.xlu0 %1810
      %1812 = vadd.xlane.f32.xlu0 %v1781
      %v1813 = vpop.xlane.xlu0 %1812
      %1814 = vadd.xlane.f32.xlu0 %v1783
      %v1815 = vpop.xlane.xlu0 %1814
      %1816 = vadd.xlane.f32.xlu0 %v1785
      %v1817 = vpop.xlane.xlu0 %1816
      %v1818 = vrcp.pop %v1787
      %v1819 = vrcp.pop %v1789
      %v1820 = vrcp.pop %v1791
      %v1821 = vrcp.pop %v1793
      %v1822 = vrcp.pop %v1795
      %v1823 = vrcp.pop %v1797
      %v1824 = vrcp.pop %v1799
      %v1825 = vrcp.pop %v1801
      %v1826 = vrcp.pop %v1803
      %v1827 = vrcp.pop %v1805
      %v1828 = vrcp.pop %v1807
      %v1829 = vrcp.pop %v1809
      %v1830 = vrcp.pop %v1811
      %v1831 = vrcp.pop %v1813
      %v1832 = vrcp.pop %v1815
      %v1833 = vrcp.pop %v1817
      %v1834 = vmul.f32 %v1755, %v1818
      %v1835 = vmul.f32 %v1757, %v1819
      %v1836 = vmul.f32 %v1759, %v1820
      %v1837 = vmul.f32 %v1761, %v1821
      %v1838 = vmul.f32 %v1763, %v1822
      %v1839 = vmul.f32 %v1765, %v1823
      %v1840 = vmul.f32 %v1767, %v1824
      %v1841 = vmul.f32 %v1769, %v1825
      %v1842 = vmul.f32 %v1771, %v1826
      %v1843 = vmul.f32 %v1773, %v1827
      %v1844 = vmul.f32 %v1775, %v1828
      %v1845 = vmul.f32 %v1777, %v1829
      %v1846 = vmul.f32 %v1779, %v1830
      %v1847 = vmul.f32 %v1781, %v1831
      %v1848 = vmul.f32 %v1783, %v1832
      %v1849 = vmul.f32 %v1785, %v1833
      %v1850 = vpack.c.bf16 %v1835, %v1834
      %v1851 = vpack.c.bf16 %v1837, %v1836
      %v1852 = vpack.c.bf16 %v1839, %v1838
      %v1853 = vpack.c.bf16 %v1841, %v1840
      %v1854 = vpack.c.bf16 %v1843, %v1842
      %v1855 = vpack.c.bf16 %v1845, %v1844
      %v1856 = vpack.c.bf16 %v1847, %v1846
      %v1857 = vpack.c.bf16 %v1849, %v1848
      %1866 = vrot.lane.b32.xlu0 %v1030, 112
      %v1867 = vpop.permute.xlu0 %1866
      %1868 = vrot.lane.b32.xlu0 %v1031, 112
      %v1869 = vpop.permute.xlu0 %1868
      %1870 = vrot.lane.b32.xlu0 %v1032, 112
      %v1871 = vpop.permute.xlu0 %1870
      %1872 = vrot.lane.b32.xlu0 %v1033, 112
      %v1873 = vpop.permute.xlu0 %1872
      %1874 = vrot.lane.b32.xlu0 %v1034, 112
      %v1875 = vpop.permute.xlu0 %1874
      %1876 = vrot.lane.b32.xlu0 %v1035, 112
      %v1877 = vpop.permute.xlu0 %1876
      %1878 = vrot.lane.b32.xlu0 %v1036, 112
      %v1879 = vpop.permute.xlu0 %1878
      %1880 = vrot.lane.b32.xlu0 %v1037, 112
      %v1881 = vpop.permute.xlu0 %1880
      %1890 = vmatprep.subr.bf16.mxu0 0
      %1891 = vmatpush1.bf16.msra.mxu0 %v1881
      %1892 = vmatprep.subr.bf16.mxu0 0
      %1893 = vmatpush1.bf16.msra.mxu0 %v1879
      %1894 = vmatprep.subr.bf16.mxu0 0
      %1895 = vmatpush1.bf16.msra.mxu0 %v1877
      %1896 = vmatprep.subr.bf16.mxu0 0
      %1897 = vmatpush1.bf16.msra.mxu0 %v1875
      %1898 = vmatprep.subr.bf16.mxu0 0
      %1899 = vmatpush1.bf16.msra.mxu0 %v1873
      %1900 = vmatprep.subr.bf16.mxu0 0
      %1901 = vmatpush1.bf16.msra.mxu0 %v1871
      %1902 = vmatprep.subr.bf16.mxu0 0
      %1903 = vmatpush1.bf16.msra.mxu0 %v1869
      %1904 = vmatprep.subr.bf16.mxu0 0
      %1905 = vmatpush1.bf16.msra.mxu0 %v1867
      %1906 = vmatprep.subr.bf16.mxu0 0
      %1907 = vmatpush2.bf16.msra.mxu0 0
      %1908 = vmatprep.subr.bf16.mxu0 0
      %1909 = vmatpush2.bf16.msra.mxu0 0
      %1910 = vmatprep.subr.bf16.mxu0 0
      %1911 = vmatpush2.bf16.msra.mxu0 0
      %1912 = vmatprep.subr.bf16.mxu0 0
      %1913 = vmatpush2.bf16.msra.mxu0 0
      %1914 = vmatprep.subr.bf16.mxu0 0
      %1915 = vmatpush2.bf16.msra.mxu0 0
      %1916 = vmatprep.subr.bf16.mxu0 0
      %1917 = vmatpush2.bf16.msra.mxu0 0
      %1918 = vmatprep.subr.bf16.mxu0 0
      %1919 = vmatpush2.bf16.msra.mxu0 0
      %1920 = vmatprep.subr.bf16.mxu0 0
      %1921 = vmatpush2.bf16.msra.mxu0 0
      %1922 = vmatprep.mubr.bf16.mxu0 0
      %1923 = vmatmul.mubr.bf16.gmra.mxu0 %v1850
      %v1924 = vpop.f32.mrf.mxu0
      %v1925 = vadd.f32 0.0, %v1924
      %v1926 = vpop.f32.mrf.mxu0
      %v1927 = vpop.f32.mrf.mxu0
      %v1928 = vadd.f32 0.0, %v1927
      %v1929 = vpop.f32.mrf.mxu0
      %1930 = vmatprep.mubr.bf16.mxu0 0
      %1931 = vmatmul.mubr.bf16.gmra.mxu0 %v1851
      %v1932 = vpop.f32.mrf.mxu0
      %v1933 = vadd.f32 0.0, %v1932
      %v1934 = vpop.f32.mrf.mxu0
      %v1935 = vpop.f32.mrf.mxu0
      %v1936 = vadd.f32 0.0, %v1935
      %v1937 = vpop.f32.mrf.mxu0
      %1938 = vmatprep.mubr.bf16.mxu0 0
      %1939 = vmatmul.mubr.bf16.gmra.mxu0 %v1852
      %v1940 = vpop.f32.mrf.mxu0
      %v1941 = vadd.f32 0.0, %v1940
      %v1942 = vpop.f32.mrf.mxu0
      %v1943 = vpop.f32.mrf.mxu0
      %v1944 = vadd.f32 0.0, %v1943
      %v1945 = vpop.f32.mrf.mxu0
      %1946 = vmatprep.mubr.bf16.mxu0 0
      %1947 = vmatmul.mubr.bf16.gmra.mxu0 %v1853
      %v1948 = vpop.f32.mrf.mxu0
      %v1949 = vadd.f32 0.0, %v1948
      %v1950 = vpop.f32.mrf.mxu0
      %v1951 = vpop.f32.mrf.mxu0
      %v1952 = vadd.f32 0.0, %v1951
      %v1953 = vpop.f32.mrf.mxu0
      %1954 = vmatprep.mubr.bf16.mxu0 0
      %1955 = vmatmul.mubr.bf16.gmra.mxu0 %v1854
      %v1956 = vpop.f32.mrf.mxu0
      %v1957 = vadd.f32 0.0, %v1956
      %v1958 = vpop.f32.mrf.mxu0
      %v1959 = vpop.f32.mrf.mxu0
      %v1960 = vadd.f32 0.0, %v1959
      %v1961 = vpop.f32.mrf.mxu0
      %1962 = vmatprep.mubr.bf16.mxu0 0
      %1963 = vmatmul.mubr.bf16.gmra.mxu0 %v1855
      %v1964 = vpop.f32.mrf.mxu0
      %v1965 = vadd.f32 0.0, %v1964
      %v1966 = vpop.f32.mrf.mxu0
      %v1967 = vpop.f32.mrf.mxu0
      %v1968 = vadd.f32 0.0, %v1967
      %v1969 = vpop.f32.mrf.mxu0
      %1970 = vmatprep.mubr.bf16.mxu0 0
      %1971 = vmatmul.mubr.bf16.gmra.mxu0 %v1856
      %v1972 = vpop.f32.mrf.mxu0
      %v1973 = vadd.f32 0.0, %v1972
      %v1974 = vpop.f32.mrf.mxu0
      %v1975 = vpop.f32.mrf.mxu0
      %v1976 = vadd.f32 0.0, %v1975
      %v1977 = vpop.f32.mrf.mxu0
      %1978 = vmatprep.mubr.bf16.mxu0 0
      %1979 = vmatmul.mubr.bf16.gmra.mxu0 %v1857
      %v1980 = vpop.f32.mrf.mxu0
      %v1981 = vadd.f32 0.0, %v1980
      %v1982 = vpop.f32.mrf.mxu0
      %v1983 = vpop.f32.mrf.mxu0
      %v1984 = vadd.f32 0.0, %v1983
      %v1985 = vpop.f32.mrf.mxu0
      %1986 = vdwg.mxu0
      %2003 = vrot.lane.b32.xlu0 %v1925, 16
      %v2004 = vpop.permute.xlu0 %2003
      %2005 = vrot.lane.b32.xlu0 %v1928, 16
      %v2006 = vpop.permute.xlu0 %2005
      %2007 = vrot.lane.b32.xlu0 %v1933, 16
      %v2008 = vpop.permute.xlu0 %2007
      %2009 = vrot.lane.b32.xlu0 %v1936, 16
      %v2010 = vpop.permute.xlu0 %2009
      %2011 = vrot.lane.b32.xlu0 %v1941, 16
      %v2012 = vpop.permute.xlu0 %2011
      %2013 = vrot.lane.b32.xlu0 %v1944, 16
      %v2014 = vpop.permute.xlu0 %2013
      %2015 = vrot.lane.b32.xlu0 %v1949, 16
      %v2016 = vpop.permute.xlu0 %2015
      %2017 = vrot.lane.b32.xlu0 %v1952, 16
      %v2018 = vpop.permute.xlu0 %2017
      %2019 = vrot.lane.b32.xlu0 %v1957, 16
      %v2020 = vpop.permute.xlu0 %2019
      %2021 = vrot.lane.b32.xlu0 %v1960, 16
      %v2022 = vpop.permute.xlu0 %2021
      %2023 = vrot.lane.b32.xlu0 %v1965, 16
      %v2024 = vpop.permute.xlu0 %2023
      %2025 = vrot.lane.b32.xlu0 %v1968, 16
      %v2026 = vpop.permute.xlu0 %2025
      %2027 = vrot.lane.b32.xlu0 %v1973, 16
      %v2028 = vpop.permute.xlu0 %2027
      %2029 = vrot.lane.b32.xlu0 %v1976, 16
      %v2030 = vpop.permute.xlu0 %2029
      %2031 = vrot.lane.b32.xlu0 %v1981, 16
      %v2032 = vpop.permute.xlu0 %2031
      %2033 = vrot.lane.b32.xlu0 %v1984, 16
      %v2034 = vpop.permute.xlu0 %2033
      %vm2051 = vcmask 261248
      %2052 = vst.msk [vmem:[#allocation2] sm:$0xff] %vm2051, %v2004
      %2053 = vst.msk [vmem:[#allocation2 + $0x8] sm:$0xff] %vm2051, %v2006
      %2054 = vst.msk [vmem:[#allocation2 + $0x10] sm:$0xff] %vm2051, %v2008
      %2055 = vst.msk [vmem:[#allocation2 + $0x18] sm:$0xff] %vm2051, %v2010
      %2056 = vst.msk [vmem:[#allocation2 + $0x20] sm:$0xff] %vm2051, %v2012
      %2057 = vst.msk [vmem:[#allocation2 + $0x28] sm:$0xff] %vm2051, %v2014
      %2058 = vst.msk [vmem:[#allocation2 + $0x30] sm:$0xff] %vm2051, %v2016
      %2059 = vst.msk [vmem:[#allocation2 + $0x38] sm:$0xff] %vm2051, %v2018
      %2060 = vst.msk [vmem:[#allocation2 + $0x40] sm:$0xff] %vm2051, %v2020
      %2061 = vst.msk [vmem:[#allocation2 + $0x48] sm:$0xff] %vm2051, %v2022
      %2062 = vst.msk [vmem:[#allocation2 + $0x50] sm:$0xff] %vm2051, %v2024
      %2063 = vst.msk [vmem:[#allocation2 + $0x58] sm:$0xff] %vm2051, %v2026
      %2064 = vst.msk [vmem:[#allocation2 + $0x60] sm:$0xff] %vm2051, %v2028
      %2065 = vst.msk [vmem:[#allocation2 + $0x68] sm:$0xff] %vm2051, %v2030
      %2066 = vst.msk [vmem:[#allocation2 + $0x70] sm:$0xff] %vm2051, %v2032
      %2067 = vst.msk [vmem:[#allocation2 + $0x78] sm:$0xff] %vm2051, %v2034
      %2068 = vrot.lane.b32.xlu0 %v1014, 96
      %v2069 = vpop.permute.xlu0 %2068
      %2070 = vrot.lane.b32.xlu0 %v1015, 96
      %v2071 = vpop.permute.xlu0 %2070
      %2072 = vrot.lane.b32.xlu0 %v1016, 96
      %v2073 = vpop.permute.xlu0 %2072
      %2074 = vrot.lane.b32.xlu0 %v1017, 96
      %v2075 = vpop.permute.xlu0 %2074
      %2076 = vrot.lane.b32.xlu0 %v1018, 96
      %v2077 = vpop.permute.xlu0 %2076
      %2078 = vrot.lane.b32.xlu0 %v1019, 96
      %v2079 = vpop.permute.xlu0 %2078
      %2080 = vrot.lane.b32.xlu0 %v1020, 96
      %v2081 = vpop.permute.xlu0 %2080
      %2082 = vrot.lane.b32.xlu0 %v1021, 96
      %v2083 = vpop.permute.xlu0 %2082
      %2084 = vrot.lane.b32.xlu0 %v1022, 96
      %v2085 = vpop.permute.xlu0 %2084
      %2086 = vrot.lane.b32.xlu0 %v1023, 96
      %v2087 = vpop.permute.xlu0 %2086
      %2088 = vrot.lane.b32.xlu0 %v1024, 96
      %v2089 = vpop.permute.xlu0 %2088
      %2090 = vrot.lane.b32.xlu0 %v1025, 96
      %v2091 = vpop.permute.xlu0 %2090
      %2092 = vrot.lane.b32.xlu0 %v1026, 96
      %v2093 = vpop.permute.xlu0 %2092
      %2094 = vrot.lane.b32.xlu0 %v1027, 96
      %v2095 = vpop.permute.xlu0 %2094
      %2096 = vrot.lane.b32.xlu0 %v1028, 96
      %v2097 = vpop.permute.xlu0 %2096
      %2098 = vrot.lane.b32.xlu0 %v1029, 96
      %v2099 = vpop.permute.xlu0 %2098
      %v2101 = vsel %vm1038, %v2069, 0
      %v2104 = vsel %vm1038, %v2071, 0
      %v2107 = vsel %vm1038, %v2073, 0
      %v2110 = vsel %vm1038, %v2075, 0
      %v2113 = vsel %vm1038, %v2077, 0
      %v2116 = vsel %vm1038, %v2079, 0
      %v2119 = vsel %vm1038, %v2081, 0
      %v2122 = vsel %vm1038, %v2083, 0
      %v2125 = vsel %vm1038, %v2085, 0
      %v2128 = vsel %vm1038, %v2087, 0
      %v2131 = vsel %vm1038, %v2089, 0
      %v2134 = vsel %vm1038, %v2091, 0
      %v2137 = vsel %vm1038, %v2093, 0
      %v2140 = vsel %vm1038, %v2095, 0
      %v2143 = vsel %vm1038, %v2097, 0
      %v2146 = vsel %vm1038, %v2099, 0
      %2148 = vmatprep.subr.bf16.mxu0 0
      %2149 = vmatpush1.bf16.xpose.msra.mxu0 %v2146
      %2150 = vmatprep.subr.bf16.mxu0 0
      %2151 = vmatpush1.bf16.xpose.msra.mxu0 %v2143
      %2152 = vmatprep.subr.bf16.mxu0 0
      %2153 = vmatpush1.bf16.xpose.msra.mxu0 %v2140
      %2154 = vmatprep.subr.bf16.mxu0 0
      %2155 = vmatpush1.bf16.xpose.msra.mxu0 %v2137
      %2156 = vmatprep.subr.bf16.mxu0 0
      %2157 = vmatpush1.bf16.xpose.msra.mxu0 %v2134
      %2158 = vmatprep.subr.bf16.mxu0 0
      %2159 = vmatpush1.bf16.xpose.msra.mxu0 %v2131
      %2160 = vmatprep.subr.bf16.mxu0 0
      %2161 = vmatpush1.bf16.xpose.msra.mxu0 %v2128
      %2162 = vmatprep.subr.bf16.mxu0 0
      %2163 = vmatpush1.bf16.xpose.msra.mxu0 %v2125
      %2164 = vmatprep.subr.bf16.mxu0 0
      %2165 = vmatpush2.bf16.xpose.msra.mxu0 0
      %2166 = vmatprep.subr.bf16.mxu0 0
      %2167 = vmatpush2.bf16.xpose.msra.mxu0 0
      %2168 = vmatprep.subr.bf16.mxu0 0
      %2169 = vmatpush2.bf16.xpose.msra.mxu0 0
      %2170 = vmatprep.subr.bf16.mxu0 0
      %2171 = vmatpush2.bf16.xpose.msra.mxu0 0
      %2172 = vmatprep.subr.bf16.mxu0 0
      %2173 = vmatpush2.bf16.xpose.msra.mxu0 0
      %2174 = vmatprep.subr.bf16.mxu0 0
      %2175 = vmatpush2.bf16.xpose.msra.mxu0 0
      %2176 = vmatprep.subr.bf16.mxu0 0
      %2177 = vmatpush2.bf16.xpose.msra.mxu0 0
      %2178 = vmatprep.subr.bf16.mxu0 0
      %2179 = vmatpush2.bf16.xpose.msra.mxu0 0
      %2180 = vmatprep.mubr.bf16.mxu0 0
      %2181 = vmatmul.mubr.bf16.gmra.mxu0 %v2101
      %v2182 = vpop.f32.mrf.mxu0
      %v2183 = vadd.f32 0.0, %v2182
      %v2184 = vpop.f32.mrf.mxu0
      %v2185 = vpop.f32.mrf.mxu0
      %v2186 = vadd.f32 0.0, %v2185
      %v2187 = vpop.f32.mrf.mxu0
      %2188 = vmatprep.mubr.bf16.mxu0 0
      %2189 = vmatmul.mubr.bf16.gmra.mxu0 %v2104
      %v2190 = vpop.f32.mrf.mxu0
      %v2191 = vadd.f32 0.0, %v2190
      %v2192 = vpop.f32.mrf.mxu0
      %v2193 = vpop.f32.mrf.mxu0
      %v2194 = vadd.f32 0.0, %v2193
      %v2195 = vpop.f32.mrf.mxu0
      %2196 = vmatprep.mubr.bf16.mxu0 0
      %2197 = vmatmul.mubr.bf16.gmra.mxu0 %v2107
      %v2198 = vpop.f32.mrf.mxu0
      %v2199 = vadd.f32 0.0, %v2198
      %v2200 = vpop.f32.mrf.mxu0
      %v2201 = vpop.f32.mrf.mxu0
      %v2202 = vadd.f32 0.0, %v2201
      %v2203 = vpop.f32.mrf.mxu0
      %2204 = vmatprep.mubr.bf16.mxu0 0
      %2205 = vmatmul.mubr.bf16.gmra.mxu0 %v2110
      %v2206 = vpop.f32.mrf.mxu0
      %v2207 = vadd.f32 0.0, %v2206
      %v2208 = vpop.f32.mrf.mxu0
      %v2209 = vpop.f32.mrf.mxu0
      %v2210 = vadd.f32 0.0, %v2209
      %v2211 = vpop.f32.mrf.mxu0
      %2212 = vmatprep.mubr.bf16.mxu0 0
      %2213 = vmatmul.mubr.bf16.gmra.mxu0 %v2113
      %v2214 = vpop.f32.mrf.mxu0
      %v2215 = vadd.f32 0.0, %v2214
      %v2216 = vpop.f32.mrf.mxu0
      %v2217 = vpop.f32.mrf.mxu0
      %v2218 = vadd.f32 0.0, %v2217
      %v2219 = vpop.f32.mrf.mxu0
      %2220 = vmatprep.mubr.bf16.mxu0 0
      %2221 = vmatmul.mubr.bf16.gmra.mxu0 %v2116
      %v2222 = vpop.f32.mrf.mxu0
      %v2223 = vadd.f32 0.0, %v2222
      %v2224 = vpop.f32.mrf.mxu0
      %v2225 = vpop.f32.mrf.mxu0
      %v2226 = vadd.f32 0.0, %v2225
      %v2227 = vpop.f32.mrf.mxu0
      %2228 = vmatprep.mubr.bf16.mxu0 0
      %2229 = vmatmul.mubr.bf16.gmra.mxu0 %v2119
      %v2230 = vpop.f32.mrf.mxu0
      %v2231 = vadd.f32 0.0, %v2230
      %v2232 = vpop.f32.mrf.mxu0
      %v2233 = vpop.f32.mrf.mxu0
      %v2234 = vadd.f32 0.0, %v2233
      %v2235 = vpop.f32.mrf.mxu0
      %2236 = vmatprep.mubr.bf16.mxu0 0
      %2237 = vmatmul.mubr.bf16.gmra.mxu0 %v2122
      %v2238 = vpop.f32.mrf.mxu0
      %v2239 = vadd.f32 0.0, %v2238
      %v2240 = vpop.f32.mrf.mxu0
      %v2241 = vpop.f32.mrf.mxu0
      %v2242 = vadd.f32 0.0, %v2241
      %v2243 = vpop.f32.mrf.mxu0
      %2244 = vdwg.mxu0
      %v2245 = vmul.f32 %v2183, 0.25
      %v2246 = vmul.f32 %v2186, 0.25
      %v2247 = vmul.f32 %v2191, 0.25
      %v2248 = vmul.f32 %v2194, 0.25
      %v2249 = vmul.f32 %v2199, 0.25
      %v2250 = vmul.f32 %v2202, 0.25
      %v2251 = vmul.f32 %v2207, 0.25
      %v2252 = vmul.f32 %v2210, 0.25
      %v2253 = vmul.f32 %v2215, 0.25
      %v2254 = vmul.f32 %v2218, 0.25
      %v2255 = vmul.f32 %v2223, 0.25
      %v2256 = vmul.f32 %v2226, 0.25
      %v2257 = vmul.f32 %v2231, 0.25
      %v2258 = vmul.f32 %v2234, 0.25
      %v2259 = vmul.f32 %v2239, 0.25
      %v2260 = vmul.f32 %v2242, 0.25
      %v2261 = vadd.f32 %v2245, %v540
      %v2262 = vadd.f32 %v2246, %v540
      %v2263 = vadd.f32 %v2247, %v540
      %v2264 = vadd.f32 %v2248, %v540
      %v2265 = vadd.f32 %v2249, %v540
      %v2266 = vadd.f32 %v2250, %v540
      %v2267 = vadd.f32 %v2251, %v540
      %v2268 = vadd.f32 %v2252, %v540
      %v2269 = vadd.f32 %v2253, %v540
      %v2270 = vadd.f32 %v2254, %v540
      %v2271 = vadd.f32 %v2255, %v540
      %v2272 = vadd.f32 %v2256, %v540
      %v2273 = vadd.f32 %v2257, %v540
      %v2274 = vadd.f32 %v2258, %v540
      %v2275 = vadd.f32 %v2259, %v540
      %v2276 = vadd.f32 %v2260, %v540
      %2277 = vmax.xlane.f32.xlu0 %v2261
      %v2278 = vpop.xlane.xlu0 %2277
      %2279 = vmax.xlane.f32.xlu0 %v2262
      %v2280 = vpop.xlane.xlu0 %2279
      %2281 = vmax.xlane.f32.xlu0 %v2263
      %v2282 = vpop.xlane.xlu0 %2281
      %2283 = vmax.xlane.f32.xlu0 %v2264
      %v2284 = vpop.xlane.xlu0 %2283
      %2285 = vmax.xlane.f32.xlu0 %v2265
      %v2286 = vpop.xlane.xlu0 %2285
      %2287 = vmax.xlane.f32.xlu0 %v2266
      %v2288 = vpop.xlane.xlu0 %2287
      %2289 = vmax.xlane.f32.xlu0 %v2267
      %v2290 = vpop.xlane.xlu0 %2289
      %2291 = vmax.xlane.f32.xlu0 %v2268
      %v2292 = vpop.xlane.xlu0 %2291
      %2293 = vmax.xlane.f32.xlu0 %v2269
      %v2294 = vpop.xlane.xlu0 %2293
      %2295 = vmax.xlane.f32.xlu0 %v2270
      %v2296 = vpop.xlane.xlu0 %2295
      %2297 = vmax.xlane.f32.xlu0 %v2271
      %v2298 = vpop.xlane.xlu0 %2297
      %2299 = vmax.xlane.f32.xlu0 %v2272
      %v2300 = vpop.xlane.xlu0 %2299
      %2301 = vmax.xlane.f32.xlu0 %v2273
      %v2302 = vpop.xlane.xlu0 %2301
      %2303 = vmax.xlane.f32.xlu0 %v2274
      %v2304 = vpop.xlane.xlu0 %2303
      %2305 = vmax.xlane.f32.xlu0 %v2275
      %v2306 = vpop.xlane.xlu0 %2305
      %2307 = vmax.xlane.f32.xlu0 %v2276
      %v2308 = vpop.xlane.xlu0 %2307
      %v2309 = vsub.f32 %v2261, %v2278
      %v2310 = vsub.f32 %v2262, %v2280
      %v2311 = vsub.f32 %v2263, %v2282
      %v2312 = vsub.f32 %v2264, %v2284
      %v2313 = vsub.f32 %v2265, %v2286
      %v2314 = vsub.f32 %v2266, %v2288
      %v2315 = vsub.f32 %v2267, %v2290
      %v2316 = vsub.f32 %v2268, %v2292
      %v2317 = vsub.f32 %v2269, %v2294
      %v2318 = vsub.f32 %v2270, %v2296
      %v2319 = vsub.f32 %v2271, %v2298
      %v2320 = vsub.f32 %v2272, %v2300
      %v2321 = vsub.f32 %v2273, %v2302
      %v2322 = vsub.f32 %v2274, %v2304
      %v2323 = vsub.f32 %v2275, %v2306
      %v2324 = vsub.f32 %v2276, %v2308
      %v2325 = vmul.f32 %v2309, 1.442695
      %v2326 = vpow.pop %v2325
      %v2327 = vmul.f32 %v2310, 1.442695
      %v2328 = vpow.pop %v2327
      %v2329 = vmul.f32 %v2311, 1.442695
      %v2330 = vpow.pop %v2329
      %v2331 = vmul.f32 %v2312, 1.442695
      %v2332 = vpow.pop %v2331
      %v2333 = vmul.f32 %v2313, 1.442695
      %v2334 = vpow.pop %v2333
      %v2335 = vmul.f32 %v2314, 1.442695
      %v2336 = vpow.pop %v2335
      %v2337 = vmul.f32 %v2315, 1.442695
      %v2338 = vpow.pop %v2337
      %v2339 = vmul.f32 %v2316, 1.442695
      %v2340 = vpow.pop %v2339
      %v2341 = vmul.f32 %v2317, 1.442695
      %v2342 = vpow.pop %v2341
      %v2343 = vmul.f32 %v2318, 1.442695
      %v2344 = vpow.pop %v2343
      %v2345 = vmul.f32 %v2319, 1.442695
      %v2346 = vpow.pop %v2345
      %v2347 = vmul.f32 %v2320, 1.442695
      %v2348 = vpow.pop %v2347
      %v2349 = vmul.f32 %v2321, 1.442695
      %v2350 = vpow.pop %v2349
      %v2351 = vmul.f32 %v2322, 1.442695
      %v2352 = vpow.pop %v2351
      %v2353 = vmul.f32 %v2323, 1.442695
      %v2354 = vpow.pop %v2353
      %v2355 = vmul.f32 %v2324, 1.442695
      %v2356 = vpow.pop %v2355
      %2357 = vadd.xlane.f32.xlu0 %v2326
      %v2358 = vpop.xlane.xlu0 %2357
      %2359 = vadd.xlane.f32.xlu0 %v2328
      %v2360 = vpop.xlane.xlu0 %2359
      %2361 = vadd.xlane.f32.xlu0 %v2330
      %v2362 = vpop.xlane.xlu0 %2361
      %2363 = vadd.xlane.f32.xlu0 %v2332
      %v2364 = vpop.xlane.xlu0 %2363
      %2365 = vadd.xlane.f32.xlu0 %v2334
      %v2366 = vpop.xlane.xlu0 %2365
      %2367 = vadd.xlane.f32.xlu0 %v2336
      %v2368 = vpop.xlane.xlu0 %2367
      %2369 = vadd.xlane.f32.xlu0 %v2338
      %v2370 = vpop.xlane.xlu0 %2369
      %2371 = vadd.xlane.f32.xlu0 %v2340
      %v2372 = vpop.xlane.xlu0 %2371
      %2373 = vadd.xlane.f32.xlu0 %v2342
      %v2374 = vpop.xlane.xlu0 %2373
      %2375 = vadd.xlane.f32.xlu0 %v2344
      %v2376 = vpop.xlane.xlu0 %2375
      %2377 = vadd.xlane.f32.xlu0 %v2346
      %v2378 = vpop.xlane.xlu0 %2377
      %2379 = vadd.xlane.f32.xlu0 %v2348
      %v2380 = vpop.xlane.xlu0 %2379
      %2381 = vadd.xlane.f32.xlu0 %v2350
      %v2382 = vpop.xlane.xlu0 %2381
      %2383 = vadd.xlane.f32.xlu0 %v2352
      %v2384 = vpop.xlane.xlu0 %2383
      %2385 = vadd.xlane.f32.xlu0 %v2354
      %v2386 = vpop.xlane.xlu0 %2385
      %2387 = vadd.xlane.f32.xlu0 %v2356
      %v2388 = vpop.xlane.xlu0 %2387
      %v2389 = vrcp.pop %v2358
      %v2390 = vrcp.pop %v2360
      %v2391 = vrcp.pop %v2362
      %v2392 = vrcp.pop %v2364
      %v2393 = vrcp.pop %v2366
      %v2394 = vrcp.pop %v2368
      %v2395 = vrcp.pop %v2370
      %v2396 = vrcp.pop %v2372
      %v2397 = vrcp.pop %v2374
      %v2398 = vrcp.pop %v2376
      %v2399 = vrcp.pop %v2378
      %v2400 = vrcp.pop %v2380
      %v2401 = vrcp.pop %v2382
      %v2402 = vrcp.pop %v2384
      %v2403 = vrcp.pop %v2386
      %v2404 = vrcp.pop %v2388
      %v2405 = vmul.f32 %v2326, %v2389
      %v2406 = vmul.f32 %v2328, %v2390
      %v2407 = vmul.f32 %v2330, %v2391
      %v2408 = vmul.f32 %v2332, %v2392
      %v2409 = vmul.f32 %v2334, %v2393
      %v2410 = vmul.f32 %v2336, %v2394
      %v2411 = vmul.f32 %v2338, %v2395
      %v2412 = vmul.f32 %v2340, %v2396
      %v2413 = vmul.f32 %v2342, %v2397
      %v2414 = vmul.f32 %v2344, %v2398
      %v2415 = vmul.f32 %v2346, %v2399
      %v2416 = vmul.f32 %v2348, %v2400
      %v2417 = vmul.f32 %v2350, %v2401
      %v2418 = vmul.f32 %v2352, %v2402
      %v2419 = vmul.f32 %v2354, %v2403
      %v2420 = vmul.f32 %v2356, %v2404
      %v2421 = vpack.c.bf16 %v2406, %v2405
      %v2422 = vpack.c.bf16 %v2408, %v2407
      %v2423 = vpack.c.bf16 %v2410, %v2409
      %v2424 = vpack.c.bf16 %v2412, %v2411
      %v2425 = vpack.c.bf16 %v2414, %v2413
      %v2426 = vpack.c.bf16 %v2416, %v2415
      %v2427 = vpack.c.bf16 %v2418, %v2417
      %v2428 = vpack.c.bf16 %v2420, %v2419
      %2429 = vrot.lane.b32.xlu0 %v1030, 96
      %v2430 = vpop.permute.xlu0 %2429
      %2431 = vrot.lane.b32.xlu0 %v1031, 96
      %v2432 = vpop.permute.xlu0 %2431
      %2433 = vrot.lane.b32.xlu0 %v1032, 96
      %v2434 = vpop.permute.xlu0 %2433
      %2435 = vrot.lane.b32.xlu0 %v1033, 96
      %v2436 = vpop.permute.xlu0 %2435
      %2437 = vrot.lane.b32.xlu0 %v1034, 96
      %v2438 = vpop.permute.xlu0 %2437
      %2439 = vrot.lane.b32.xlu0 %v1035, 96
      %v2440 = vpop.permute.xlu0 %2439
      %2441 = vrot.lane.b32.xlu0 %v1036, 96
      %v2442 = vpop.permute.xlu0 %2441
      %2443 = vrot.lane.b32.xlu0 %v1037, 96
      %v2444 = vpop.permute.xlu0 %2443
      %2453 = vmatprep.subr.bf16.mxu0 0
      %2454 = vmatpush1.bf16.msra.mxu0 %v2444
      %2455 = vmatprep.subr.bf16.mxu0 0
      %2456 = vmatpush1.bf16.msra.mxu0 %v2442
      %2457 = vmatprep.subr.bf16.mxu0 0
      %2458 = vmatpush1.bf16.msra.mxu0 %v2440
      %2459 = vmatprep.subr.bf16.mxu0 0
      %2460 = vmatpush1.bf16.msra.mxu0 %v2438
      %2461 = vmatprep.subr.bf16.mxu0 0
      %2462 = vmatpush1.bf16.msra.mxu0 %v2436
      %2463 = vmatprep.subr.bf16.mxu0 0
      %2464 = vmatpush1.bf16.msra.mxu0 %v2434
      %2465 = vmatprep.subr.bf16.mxu0 0
      %2466 = vmatpush1.bf16.msra.mxu0 %v2432
      %2467 = vmatprep.subr.bf16.mxu0 0
      %2468 = vmatpush1.bf16.msra.mxu0 %v2430
      %2469 = vmatprep.subr.bf16.mxu0 0
      %2470 = vmatpush2.bf16.msra.mxu0 0
      %2471 = vmatprep.subr.bf16.mxu0 0
      %2472 = vmatpush2.bf16.msra.mxu0 0
      %2473 = vmatprep.subr.bf16.mxu0 0
      %2474 = vmatpush2.bf16.msra.mxu0 0
      %2475 = vmatprep.subr.bf16.mxu0 0
      %2476 = vmatpush2.bf16.msra.mxu0 0
      %2477 = vmatprep.subr.bf16.mxu0 0
      %2478 = vmatpush2.bf16.msra.mxu0 0
      %2479 = vmatprep.subr.bf16.mxu0 0
      %2480 = vmatpush2.bf16.msra.mxu0 0
      %2481 = vmatprep.subr.bf16.mxu0 0
      %2482 = vmatpush2.bf16.msra.mxu0 0
      %2483 = vmatprep.subr.bf16.mxu0 0
      %2484 = vmatpush2.bf16.msra.mxu0 0
      %2485 = vmatprep.mubr.bf16.mxu0 0
      %2486 = vmatmul.mubr.bf16.gmra.mxu0 %v2421
      %v2487 = vpop.f32.mrf.mxu0
      %v2488 = vadd.f32 0.0, %v2487
      %v2489 = vpop.f32.mrf.mxu0
      %v2490 = vpop.f32.mrf.mxu0
      %v2491 = vadd.f32 0.0, %v2490
      %v2492 = vpop.f32.mrf.mxu0
      %2493 = vmatprep.mubr.bf16.mxu0 0
      %2494 = vmatmul.mubr.bf16.gmra.mxu0 %v2422
      %v2495 = vpop.f32.mrf.mxu0
      %v2496 = vadd.f32 0.0, %v2495
      %v2497 = vpop.f32.mrf.mxu0
      %v2498 = vpop.f32.mrf.mxu0
      %v2499 = vadd.f32 0.0, %v2498
      %v2500 = vpop.f32.mrf.mxu0
      %2501 = vmatprep.mubr.bf16.mxu0 0
      %2502 = vmatmul.mubr.bf16.gmra.mxu0 %v2423
      %v2503 = vpop.f32.mrf.mxu0
      %v2504 = vadd.f32 0.0, %v2503
      %v2505 = vpop.f32.mrf.mxu0
      %v2506 = vpop.f32.mrf.mxu0
      %v2507 = vadd.f32 0.0, %v2506
      %v2508 = vpop.f32.mrf.mxu0
      %2509 = vmatprep.mubr.bf16.mxu0 0
      %2510 = vmatmul.mubr.bf16.gmra.mxu0 %v2424
      %v2511 = vpop.f32.mrf.mxu0
      %v2512 = vadd.f32 0.0, %v2511
      %v2513 = vpop.f32.mrf.mxu0
      %v2514 = vpop.f32.mrf.mxu0
      %v2515 = vadd.f32 0.0, %v2514
      %v2516 = vpop.f32.mrf.mxu0
      %2517 = vmatprep.mubr.bf16.mxu0 0
      %2518 = vmatmul.mubr.bf16.gmra.mxu0 %v2425
      %v2519 = vpop.f32.mrf.mxu0
      %v2520 = vadd.f32 0.0, %v2519
      %v2521 = vpop.f32.mrf.mxu0
      %v2522 = vpop.f32.mrf.mxu0
      %v2523 = vadd.f32 0.0, %v2522
      %v2524 = vpop.f32.mrf.mxu0
      %2525 = vmatprep.mubr.bf16.mxu0 0
      %2526 = vmatmul.mubr.bf16.gmra.mxu0 %v2426
      %v2527 = vpop.f32.mrf.mxu0
      %v2528 = vadd.f32 0.0, %v2527
      %v2529 = vpop.f32.mrf.mxu0
      %v2530 = vpop.f32.mrf.mxu0
      %v2531 = vadd.f32 0.0, %v2530
      %v2532 = vpop.f32.mrf.mxu0
      %2533 = vmatprep.mubr.bf16.mxu0 0
      %2534 = vmatmul.mubr.bf16.gmra.mxu0 %v2427
      %v2535 = vpop.f32.mrf.mxu0
      %v2536 = vadd.f32 0.0, %v2535
      %v2537 = vpop.f32.mrf.mxu0
      %v2538 = vpop.f32.mrf.mxu0
      %v2539 = vadd.f32 0.0, %v2538
      %v2540 = vpop.f32.mrf.mxu0
      %2541 = vmatprep.mubr.bf16.mxu0 0
      %2542 = vmatmul.mubr.bf16.gmra.mxu0 %v2428
      %v2543 = vpop.f32.mrf.mxu0
      %v2544 = vadd.f32 0.0, %v2543
      %v2545 = vpop.f32.mrf.mxu0
      %v2546 = vpop.f32.mrf.mxu0
      %v2547 = vadd.f32 0.0, %v2546
      %v2548 = vpop.f32.mrf.mxu0
      %2549 = vdwg.mxu0
      %2566 = vrot.lane.b32.xlu0 %v2488, 32
      %v2567 = vpop.permute.xlu0 %2566
      %2568 = vrot.lane.b32.xlu0 %v2491, 32
      %v2569 = vpop.permute.xlu0 %2568
      %2570 = vrot.lane.b32.xlu0 %v2496, 32
      %v2571 = vpop.permute.xlu0 %2570
      %2572 = vrot.lane.b32.xlu0 %v2499, 32
      %v2573 = vpop.permute.xlu0 %2572
      %2574 = vrot.lane.b32.xlu0 %v2504, 32
      %v2575 = vpop.permute.xlu0 %2574
      %2576 = vrot.lane.b32.xlu0 %v2507, 32
      %v2577 = vpop.permute.xlu0 %2576
      %2578 = vrot.lane.b32.xlu0 %v2512, 32
      %v2579 = vpop.permute.xlu0 %2578
      %2580 = vrot.lane.b32.xlu0 %v2515, 32
      %v2581 = vpop.permute.xlu0 %2580
      %2582 = vrot.lane.b32.xlu0 %v2520, 32
      %v2583 = vpop.permute.xlu0 %2582
      %2584 = vrot.lane.b32.xlu0 %v2523, 32
      %v2585 = vpop.permute.xlu0 %2584
      %2586 = vrot.lane.b32.xlu0 %v2528, 32
      %v2587 = vpop.permute.xlu0 %2586
      %2588 = vrot.lane.b32.xlu0 %v2531, 32
      %v2589 = vpop.permute.xlu0 %2588
      %2590 = vrot.lane.b32.xlu0 %v2536, 32
      %v2591 = vpop.permute.xlu0 %2590
      %2592 = vrot.lane.b32.xlu0 %v2539, 32
      %v2593 = vpop.permute.xlu0 %2592
      %2594 = vrot.lane.b32.xlu0 %v2544, 32
      %v2595 = vpop.permute.xlu0 %2594
      %2596 = vrot.lane.b32.xlu0 %v2547, 32
      %v2597 = vpop.permute.xlu0 %2596
      %vm2614 = vcmask 392448
      %2615 = vst.msk [vmem:[#allocation2] sm:$0xff] %vm2614, %v2567
      %2616 = vst.msk [vmem:[#allocation2 + $0x8] sm:$0xff] %vm2614, %v2569
      %2617 = vst.msk [vmem:[#allocation2 + $0x10] sm:$0xff] %vm2614, %v2571
      %2618 = vst.msk [vmem:[#allocation2 + $0x18] sm:$0xff] %vm2614, %v2573
      %2619 = vst.msk [vmem:[#allocation2 + $0x20] sm:$0xff] %vm2614, %v2575
      %2620 = vst.msk [vmem:[#allocation2 + $0x28] sm:$0xff] %vm2614, %v2577
      %2621 = vst.msk [vmem:[#allocation2 + $0x30] sm:$0xff] %vm2614, %v2579
      %2622 = vst.msk [vmem:[#allocation2 + $0x38] sm:$0xff] %vm2614, %v2581
      %2623 = vst.msk [vmem:[#allocation2 + $0x40] sm:$0xff] %vm2614, %v2583
      %2624 = vst.msk [vmem:[#allocation2 + $0x48] sm:$0xff] %vm2614, %v2585
      %2625 = vst.msk [vmem:[#allocation2 + $0x50] sm:$0xff] %vm2614, %v2587
      %2626 = vst.msk [vmem:[#allocation2 + $0x58] sm:$0xff] %vm2614, %v2589
      %2627 = vst.msk [vmem:[#allocation2 + $0x60] sm:$0xff] %vm2614, %v2591
      %2628 = vst.msk [vmem:[#allocation2 + $0x68] sm:$0xff] %vm2614, %v2593
      %2629 = vst.msk [vmem:[#allocation2 + $0x70] sm:$0xff] %vm2614, %v2595
      %2630 = vst.msk [vmem:[#allocation2 + $0x78] sm:$0xff] %vm2614, %v2597
      %2631 = vrot.lane.b32.xlu0 %v1014, 80
      %v2632 = vpop.permute.xlu0 %2631
      %2633 = vrot.lane.b32.xlu0 %v1015, 80
      %v2634 = vpop.permute.xlu0 %2633
      %2635 = vrot.lane.b32.xlu0 %v1016, 80
      %v2636 = vpop.permute.xlu0 %2635
      %2637 = vrot.lane.b32.xlu0 %v1017, 80
      %v2638 = vpop.permute.xlu0 %2637
      %2639 = vrot.lane.b32.xlu0 %v1018, 80
      %v2640 = vpop.permute.xlu0 %2639
      %2641 = vrot.lane.b32.xlu0 %v1019, 80
      %v2642 = vpop.permute.xlu0 %2641
      %2643 = vrot.lane.b32.xlu0 %v1020, 80
      %v2644 = vpop.permute.xlu0 %2643
      %2645 = vrot.lane.b32.xlu0 %v1021, 80
      %v2646 = vpop.permute.xlu0 %2645
      %2647 = vrot.lane.b32.xlu0 %v1022, 80
      %v2648 = vpop.permute.xlu0 %2647
      %2649 = vrot.lane.b32.xlu0 %v1023, 80
      %v2650 = vpop.permute.xlu0 %2649
      %2651 = vrot.lane.b32.xlu0 %v1024, 80
      %v2652 = vpop.permute.xlu0 %2651
      %2653 = vrot.lane.b32.xlu0 %v1025, 80
      %v2654 = vpop.permute.xlu0 %2653
      %2655 = vrot.lane.b32.xlu0 %v1026, 80
      %v2656 = vpop.permute.xlu0 %2655
      %2657 = vrot.lane.b32.xlu0 %v1027, 80
      %v2658 = vpop.permute.xlu0 %2657
      %2659 = vrot.lane.b32.xlu0 %v1028, 80
      %v2660 = vpop.permute.xlu0 %2659
      %2661 = vrot.lane.b32.xlu0 %v1029, 80
      %v2662 = vpop.permute.xlu0 %2661
      %v2664 = vsel %vm1038, %v2632, 0
      %v2667 = vsel %vm1038, %v2634, 0
      %v2670 = vsel %vm1038, %v2636, 0
      %v2673 = vsel %vm1038, %v2638, 0
      %v2676 = vsel %vm1038, %v2640, 0
      %v2679 = vsel %vm1038, %v2642, 0
      %v2682 = vsel %vm1038, %v2644, 0
      %v2685 = vsel %vm1038, %v2646, 0
      %v2688 = vsel %vm1038, %v2648, 0
      %v2691 = vsel %vm1038, %v2650, 0
      %v2694 = vsel %vm1038, %v2652, 0
      %v2697 = vsel %vm1038, %v2654, 0
      %v2700 = vsel %vm1038, %v2656, 0
      %v2703 = vsel %vm1038, %v2658, 0
      %v2706 = vsel %vm1038, %v2660, 0
      %v2709 = vsel %vm1038, %v2662, 0
      %2711 = vmatprep.subr.bf16.mxu0 0
      %2712 = vmatpush1.bf16.xpose.msra.mxu0 %v2709
      %2713 = vmatprep.subr.bf16.mxu0 0
      %2714 = vmatpush1.bf16.xpose.msra.mxu0 %v2706
      %2715 = vmatprep.subr.bf16.mxu0 0
      %2716 = vmatpush1.bf16.xpose.msra.mxu0 %v2703
      %2717 = vmatprep.subr.bf16.mxu0 0
      %2718 = vmatpush1.bf16.xpose.msra.mxu0 %v2700
      %2719 = vmatprep.subr.bf16.mxu0 0
      %2720 = vmatpush1.bf16.xpose.msra.mxu0 %v2697
      %2721 = vmatprep.subr.bf16.mxu0 0
      %2722 = vmatpush1.bf16.xpose.msra.mxu0 %v2694
      %2723 = vmatprep.subr.bf16.mxu0 0
      %2724 = vmatpush1.bf16.xpose.msra.mxu0 %v2691
      %2725 = vmatprep.subr.bf16.mxu0 0
      %2726 = vmatpush1.bf16.xpose.msra.mxu0 %v2688
      %2727 = vmatprep.subr.bf16.mxu0 0
      %2728 = vmatpush2.bf16.xpose.msra.mxu0 0
      %2729 = vmatprep.subr.bf16.mxu0 0
      %2730 = vmatpush2.bf16.xpose.msra.mxu0 0
      %2731 = vmatprep.subr.bf16.mxu0 0
      %2732 = vmatpush2.bf16.xpose.msra.mxu0 0
      %2733 = vmatprep.subr.bf16.mxu0 0
      %2734 = vmatpush2.bf16.xpose.msra.mxu0 0
      %2735 = vmatprep.subr.bf16.mxu0 0
      %2736 = vmatpush2.bf16.xpose.msra.mxu0 0
      %2737 = vmatprep.subr.bf16.mxu0 0
      %2738 = vmatpush2.bf16.xpose.msra.mxu0 0
      %2739 = vmatprep.subr.bf16.mxu0 0
      %2740 = vmatpush2.bf16.xpose.msra.mxu0 0
      %2741 = vmatprep.subr.bf16.mxu0 0
      %2742 = vmatpush2.bf16.xpose.msra.mxu0 0
      %2743 = vmatprep.mubr.bf16.mxu0 0
      %2744 = vmatmul.mubr.bf16.gmra.mxu0 %v2664
      %v2745 = vpop.f32.mrf.mxu0
      %v2746 = vadd.f32 0.0, %v2745
      %v2747 = vpop.f32.mrf.mxu0
      %v2748 = vpop.f32.mrf.mxu0
      %v2749 = vadd.f32 0.0, %v2748
      %v2750 = vpop.f32.mrf.mxu0
      %2751 = vmatprep.mubr.bf16.mxu0 0
      %2752 = vmatmul.mubr.bf16.gmra.mxu0 %v2667
      %v2753 = vpop.f32.mrf.mxu0
      %v2754 = vadd.f32 0.0, %v2753
      %v2755 = vpop.f32.mrf.mxu0
      %v2756 = vpop.f32.mrf.mxu0
      %v2757 = vadd.f32 0.0, %v2756
      %v2758 = vpop.f32.mrf.mxu0
      %2759 = vmatprep.mubr.bf16.mxu0 0
      %2760 = vmatmul.mubr.bf16.gmra.mxu0 %v2670
      %v2761 = vpop.f32.mrf.mxu0
      %v2762 = vadd.f32 0.0, %v2761
      %v2763 = vpop.f32.mrf.mxu0
      %v2764 = vpop.f32.mrf.mxu0
      %v2765 = vadd.f32 0.0, %v2764
      %v2766 = vpop.f32.mrf.mxu0
      %2767 = vmatprep.mubr.bf16.mxu0 0
      %2768 = vmatmul.mubr.bf16.gmra.mxu0 %v2673
      %v2769 = vpop.f32.mrf.mxu0
      %v2770 = vadd.f32 0.0, %v2769
      %v2771 = vpop.f32.mrf.mxu0
      %v2772 = vpop.f32.mrf.mxu0
      %v2773 = vadd.f32 0.0, %v2772
      %v2774 = vpop.f32.mrf.mxu0
      %2775 = vmatprep.mubr.bf16.mxu0 0
      %2776 = vmatmul.mubr.bf16.gmra.mxu0 %v2676
      %v2777 = vpop.f32.mrf.mxu0
      %v2778 = vadd.f32 0.0, %v2777
      %v2779 = vpop.f32.mrf.mxu0
      %v2780 = vpop.f32.mrf.mxu0
      %v2781 = vadd.f32 0.0, %v2780
      %v2782 = vpop.f32.mrf.mxu0
      %2783 = vmatprep.mubr.bf16.mxu0 0
      %2784 = vmatmul.mubr.bf16.gmra.mxu0 %v2679
      %v2785 = vpop.f32.mrf.mxu0
      %v2786 = vadd.f32 0.0, %v2785
      %v2787 = vpop.f32.mrf.mxu0
      %v2788 = vpop.f32.mrf.mxu0
      %v2789 = vadd.f32 0.0, %v2788
      %v2790 = vpop.f32.mrf.mxu0
      %2791 = vmatprep.mubr.bf16.mxu0 0
      %2792 = vmatmul.mubr.bf16.gmra.mxu0 %v2682
      %v2793 = vpop.f32.mrf.mxu0
      %v2794 = vadd.f32 0.0, %v2793
      %v2795 = vpop.f32.mrf.mxu0
      %v2796 = vpop.f32.mrf.mxu0
      %v2797 = vadd.f32 0.0, %v2796
      %v2798 = vpop.f32.mrf.mxu0
      %2799 = vmatprep.mubr.bf16.mxu0 0
      %2800 = vmatmul.mubr.bf16.gmra.mxu0 %v2685
      %v2801 = vpop.f32.mrf.mxu0
      %v2802 = vadd.f32 0.0, %v2801
      %v2803 = vpop.f32.mrf.mxu0
      %v2804 = vpop.f32.mrf.mxu0
      %v2805 = vadd.f32 0.0, %v2804
      %v2806 = vpop.f32.mrf.mxu0
      %2807 = vdwg.mxu0
      %v2808 = vmul.f32 %v2746, 0.25
      %v2809 = vmul.f32 %v2749, 0.25
      %v2810 = vmul.f32 %v2754, 0.25
      %v2811 = vmul.f32 %v2757, 0.25
      %v2812 = vmul.f32 %v2762, 0.25
      %v2813 = vmul.f32 %v2765, 0.25
      %v2814 = vmul.f32 %v2770, 0.25
      %v2815 = vmul.f32 %v2773, 0.25
      %v2816 = vmul.f32 %v2778, 0.25
      %v2817 = vmul.f32 %v2781, 0.25
      %v2818 = vmul.f32 %v2786, 0.25
      %v2819 = vmul.f32 %v2789, 0.25
      %v2820 = vmul.f32 %v2794, 0.25
      %v2821 = vmul.f32 %v2797, 0.25
      %v2822 = vmul.f32 %v2802, 0.25
      %v2823 = vmul.f32 %v2805, 0.25
      %v2824 = vadd.f32 %v2808, %v540
      %v2825 = vadd.f32 %v2809, %v540
      %v2826 = vadd.f32 %v2810, %v540
      %v2827 = vadd.f32 %v2811, %v540
      %v2828 = vadd.f32 %v2812, %v540
      %v2829 = vadd.f32 %v2813, %v540
      %v2830 = vadd.f32 %v2814, %v540
      %v2831 = vadd.f32 %v2815, %v540
      %v2832 = vadd.f32 %v2816, %v540
      %v2833 = vadd.f32 %v2817, %v540
      %v2834 = vadd.f32 %v2818, %v540
      %v2835 = vadd.f32 %v2819, %v540
      %v2836 = vadd.f32 %v2820, %v540
      %v2837 = vadd.f32 %v2821, %v540
      %v2838 = vadd.f32 %v2822, %v540
      %v2839 = vadd.f32 %v2823, %v540
      %2840 = vmax.xlane.f32.xlu0 %v2824
      %v2841 = vpop.xlane.xlu0 %2840
      %2842 = vmax.xlane.f32.xlu0 %v2825
      %v2843 = vpop.xlane.xlu0 %2842
      %2844 = vmax.xlane.f32.xlu0 %v2826
      %v2845 = vpop.xlane.xlu0 %2844
      %2846 = vmax.xlane.f32.xlu0 %v2827
      %v2847 = vpop.xlane.xlu0 %2846
      %2848 = vmax.xlane.f32.xlu0 %v2828
      %v2849 = vpop.xlane.xlu0 %2848
      %2850 = vmax.xlane.f32.xlu0 %v2829
      %v2851 = vpop.xlane.xlu0 %2850
      %2852 = vmax.xlane.f32.xlu0 %v2830
      %v2853 = vpop.xlane.xlu0 %2852
      %2854 = vmax.xlane.f32.xlu0 %v2831
      %v2855 = vpop.xlane.xlu0 %2854
      %2856 = vmax.xlane.f32.xlu0 %v2832
      %v2857 = vpop.xlane.xlu0 %2856
      %2858 = vmax.xlane.f32.xlu0 %v2833
      %v2859 = vpop.xlane.xlu0 %2858
      %2860 = vmax.xlane.f32.xlu0 %v2834
      %v2861 = vpop.xlane.xlu0 %2860
      %2862 = vmax.xlane.f32.xlu0 %v2835
      %v2863 = vpop.xlane.xlu0 %2862
      %2864 = vmax.xlane.f32.xlu0 %v2836
      %v2865 = vpop.xlane.xlu0 %2864
      %2866 = vmax.xlane.f32.xlu0 %v2837
      %v2867 = vpop.xlane.xlu0 %2866
      %2868 = vmax.xlane.f32.xlu0 %v2838
      %v2869 = vpop.xlane.xlu0 %2868
      %2870 = vmax.xlane.f32.xlu0 %v2839
      %v2871 = vpop.xlane.xlu0 %2870
      %v2872 = vsub.f32 %v2824, %v2841
      %v2873 = vsub.f32 %v2825, %v2843
      %v2874 = vsub.f32 %v2826, %v2845
      %v2875 = vsub.f32 %v2827, %v2847
      %v2876 = vsub.f32 %v2828, %v2849
      %v2877 = vsub.f32 %v2829, %v2851
      %v2878 = vsub.f32 %v2830, %v2853
      %v2879 = vsub.f32 %v2831, %v2855
      %v2880 = vsub.f32 %v2832, %v2857
      %v2881 = vsub.f32 %v2833, %v2859
      %v2882 = vsub.f32 %v2834, %v2861
      %v2883 = vsub.f32 %v2835, %v2863
      %v2884 = vsub.f32 %v2836, %v2865
      %v2885 = vsub.f32 %v2837, %v2867
      %v2886 = vsub.f32 %v2838, %v2869
      %v2887 = vsub.f32 %v2839, %v2871
      %v2888 = vmul.f32 %v2872, 1.442695
      %v2889 = vpow.pop %v2888
      %v2890 = vmul.f32 %v2873, 1.442695
      %v2891 = vpow.pop %v2890
      %v2892 = vmul.f32 %v2874, 1.442695
      %v2893 = vpow.pop %v2892
      %v2894 = vmul.f32 %v2875, 1.442695
      %v2895 = vpow.pop %v2894
      %v2896 = vmul.f32 %v2876, 1.442695
      %v2897 = vpow.pop %v2896
      %v2898 = vmul.f32 %v2877, 1.442695
      %v2899 = vpow.pop %v2898
      %v2900 = vmul.f32 %v2878, 1.442695
      %v2901 = vpow.pop %v2900
      %v2902 = vmul.f32 %v2879, 1.442695
      %v2903 = vpow.pop %v2902
      %v2904 = vmul.f32 %v2880, 1.442695
      %v2905 = vpow.pop %v2904
      %v2906 = vmul.f32 %v2881, 1.442695
      %v2907 = vpow.pop %v2906
      %v2908 = vmul.f32 %v2882, 1.442695
      %v2909 = vpow.pop %v2908
      %v2910 = vmul.f32 %v2883, 1.442695
      %v2911 = vpow.pop %v2910
      %v2912 = vmul.f32 %v2884, 1.442695
      %v2913 = vpow.pop %v2912
      %v2914 = vmul.f32 %v2885, 1.442695
      %v2915 = vpow.pop %v2914
      %v2916 = vmul.f32 %v2886, 1.442695
      %v2917 = vpow.pop %v2916
      %v2918 = vmul.f32 %v2887, 1.442695
      %v2919 = vpow.pop %v2918
      %2920 = vadd.xlane.f32.xlu0 %v2889
      %v2921 = vpop.xlane.xlu0 %2920
      %2922 = vadd.xlane.f32.xlu0 %v2891
      %v2923 = vpop.xlane.xlu0 %2922
      %2924 = vadd.xlane.f32.xlu0 %v2893
      %v2925 = vpop.xlane.xlu0 %2924
      %2926 = vadd.xlane.f32.xlu0 %v2895
      %v2927 = vpop.xlane.xlu0 %2926
      %2928 = vadd.xlane.f32.xlu0 %v2897
      %v2929 = vpop.xlane.xlu0 %2928
      %2930 = vadd.xlane.f32.xlu0 %v2899
      %v2931 = vpop.xlane.xlu0 %2930
      %2932 = vadd.xlane.f32.xlu0 %v2901
      %v2933 = vpop.xlane.xlu0 %2932
      %2934 = vadd.xlane.f32.xlu0 %v2903
      %v2935 = vpop.xlane.xlu0 %2934
      %2936 = vadd.xlane.f32.xlu0 %v2905
      %v2937 = vpop.xlane.xlu0 %2936
      %2938 = vadd.xlane.f32.xlu0 %v2907
      %v2939 = vpop.xlane.xlu0 %2938
      %2940 = vadd.xlane.f32.xlu0 %v2909
      %v2941 = vpop.xlane.xlu0 %2940
      %2942 = vadd.xlane.f32.xlu0 %v2911
      %v2943 = vpop.xlane.xlu0 %2942
      %2944 = vadd.xlane.f32.xlu0 %v2913
      %v2945 = vpop.xlane.xlu0 %2944
      %2946 = vadd.xlane.f32.xlu0 %v2915
      %v2947 = vpop.xlane.xlu0 %2946
      %2948 = vadd.xlane.f32.xlu0 %v2917
      %v2949 = vpop.xlane.xlu0 %2948
      %2950 = vadd.xlane.f32.xlu0 %v2919
      %v2951 = vpop.xlane.xlu0 %2950
      %v2952 = vrcp.pop %v2921
      %v2953 = vrcp.pop %v2923
      %v2954 = vrcp.pop %v2925
      %v2955 = vrcp.pop %v2927
      %v2956 = vrcp.pop %v2929
      %v2957 = vrcp.pop %v2931
      %v2958 = vrcp.pop %v2933
      %v2959 = vrcp.pop %v2935
      %v2960 = vrcp.pop %v2937
      %v2961 = vrcp.pop %v2939
      %v2962 = vrcp.pop %v2941
      %v2963 = vrcp.pop %v2943
      %v2964 = vrcp.pop %v2945
      %v2965 = vrcp.pop %v2947
      %v2966 = vrcp.pop %v2949
      %v2967 = vrcp.pop %v2951
      %v2968 = vmul.f32 %v2889, %v2952
      %v2969 = vmul.f32 %v2891, %v2953
      %v2970 = vmul.f32 %v2893, %v2954
      %v2971 = vmul.f32 %v2895, %v2955
      %v2972 = vmul.f32 %v2897, %v2956
      %v2973 = vmul.f32 %v2899, %v2957
      %v2974 = vmul.f32 %v2901, %v2958
      %v2975 = vmul.f32 %v2903, %v2959
      %v2976 = vmul.f32 %v2905, %v2960
      %v2977 = vmul.f32 %v2907, %v2961
      %v2978 = vmul.f32 %v2909, %v2962
      %v2979 = vmul.f32 %v2911, %v2963
      %v2980 = vmul.f32 %v2913, %v2964
      %v2981 = vmul.f32 %v2915, %v2965
      %v2982 = vmul.f32 %v2917, %v2966
      %v2983 = vmul.f32 %v2919, %v2967
      %v2984 = vpack.c.bf16 %v2969, %v2968
      %v2985 = vpack.c.bf16 %v2971, %v2970
      %v2986 = vpack.c.bf16 %v2973, %v2972
      %v2987 = vpack.c.bf16 %v2975, %v2974
      %v2988 = vpack.c.bf16 %v2977, %v2976
      %v2989 = vpack.c.bf16 %v2979, %v2978
      %v2990 = vpack.c.bf16 %v2981, %v2980
      %v2991 = vpack.c.bf16 %v2983, %v2982
      %2992 = vrot.lane.b32.xlu0 %v1030, 80
      %v2993 = vpop.permute.xlu0 %2992
      %2994 = vrot.lane.b32.xlu0 %v1031, 80
      %v2995 = vpop.permute.xlu0 %2994
      %2996 = vrot.lane.b32.xlu0 %v1032, 80
      %v2997 = vpop.permute.xlu0 %2996
      %2998 = vrot.lane.b32.xlu0 %v1033, 80
      %v2999 = vpop.permute.xlu0 %2998
      %3000 = vrot.lane.b32.xlu0 %v1034, 80
      %v3001 = vpop.permute.xlu0 %3000
      %3002 = vrot.lane.b32.xlu0 %v1035, 80
      %v3003 = vpop.permute.xlu0 %3002
      %3004 = vrot.lane.b32.xlu0 %v1036, 80
      %v3005 = vpop.permute.xlu0 %3004
      %3006 = vrot.lane.b32.xlu0 %v1037, 80
      %v3007 = vpop.permute.xlu0 %3006
      %3016 = vmatprep.subr.bf16.mxu0 0
      %3017 = vmatpush1.bf16.msra.mxu0 %v3007
      %3018 = vmatprep.subr.bf16.mxu0 0
      %3019 = vmatpush1.bf16.msra.mxu0 %v3005
      %3020 = vmatprep.subr.bf16.mxu0 0
      %3021 = vmatpush1.bf16.msra.mxu0 %v3003
      %3022 = vmatprep.subr.bf16.mxu0 0
      %3023 = vmatpush1.bf16.msra.mxu0 %v3001
      %3024 = vmatprep.subr.bf16.mxu0 0
      %3025 = vmatpush1.bf16.msra.mxu0 %v2999
      %3026 = vmatprep.subr.bf16.mxu0 0
      %3027 = vmatpush1.bf16.msra.mxu0 %v2997
      %3028 = vmatprep.subr.bf16.mxu0 0
      %3029 = vmatpush1.bf16.msra.mxu0 %v2995
      %3030 = vmatprep.subr.bf16.mxu0 0
      %3031 = vmatpush1.bf16.msra.mxu0 %v2993
      %3032 = vmatprep.subr.bf16.mxu0 0
      %3033 = vmatpush2.bf16.msra.mxu0 0
      %3034 = vmatprep.subr.bf16.mxu0 0
      %3035 = vmatpush2.bf16.msra.mxu0 0
      %3036 = vmatprep.subr.bf16.mxu0 0
      %3037 = vmatpush2.bf16.msra.mxu0 0
      %3038 = vmatprep.subr.bf16.mxu0 0
      %3039 = vmatpush2.bf16.msra.mxu0 0
      %3040 = vmatprep.subr.bf16.mxu0 0
      %3041 = vmatpush2.bf16.msra.mxu0 0
      %3042 = vmatprep.subr.bf16.mxu0 0
      %3043 = vmatpush2.bf16.msra.mxu0 0
      %3044 = vmatprep.subr.bf16.mxu0 0
      %3045 = vmatpush2.bf16.msra.mxu0 0
      %3046 = vmatprep.subr.bf16.mxu0 0
      %3047 = vmatpush2.bf16.msra.mxu0 0
      %3048 = vmatprep.mubr.bf16.mxu0 0
      %3049 = vmatmul.mubr.bf16.gmra.mxu0 %v2984
      %v3050 = vpop.f32.mrf.mxu0
      %v3051 = vadd.f32 0.0, %v3050
      %v3052 = vpop.f32.mrf.mxu0
      %v3053 = vpop.f32.mrf.mxu0
      %v3054 = vadd.f32 0.0, %v3053
      %v3055 = vpop.f32.mrf.mxu0
      %3056 = vmatprep.mubr.bf16.mxu0 0
      %3057 = vmatmul.mubr.bf16.gmra.mxu0 %v2985
      %v3058 = vpop.f32.mrf.mxu0
      %v3059 = vadd.f32 0.0, %v3058
      %v3060 = vpop.f32.mrf.mxu0
      %v3061 = vpop.f32.mrf.mxu0
      %v3062 = vadd.f32 0.0, %v3061
      %v3063 = vpop.f32.mrf.mxu0
      %3064 = vmatprep.mubr.bf16.mxu0 0
      %3065 = vmatmul.mubr.bf16.gmra.mxu0 %v2986
      %v3066 = vpop.f32.mrf.mxu0
      %v3067 = vadd.f32 0.0, %v3066
      %v3068 = vpop.f32.mrf.mxu0
      %v3069 = vpop.f32.mrf.mxu0
      %v3070 = vadd.f32 0.0, %v3069
      %v3071 = vpop.f32.mrf.mxu0
      %3072 = vmatprep.mubr.bf16.mxu0 0
      %3073 = vmatmul.mubr.bf16.gmra.mxu0 %v2987
      %v3074 = vpop.f32.mrf.mxu0
      %v3075 = vadd.f32 0.0, %v3074
      %v3076 = vpop.f32.mrf.mxu0
      %v3077 = vpop.f32.mrf.mxu0
      %v3078 = vadd.f32 0.0, %v3077
      %v3079 = vpop.f32.mrf.mxu0
      %3080 = vmatprep.mubr.bf16.mxu0 0
      %3081 = vmatmul.mubr.bf16.gmra.mxu0 %v2988
      %v3082 = vpop.f32.mrf.mxu0
      %v3083 = vadd.f32 0.0, %v3082
      %v3084 = vpop.f32.mrf.mxu0
      %v3085 = vpop.f32.mrf.mxu0
      %v3086 = vadd.f32 0.0, %v3085
      %v3087 = vpop.f32.mrf.mxu0
      %3088 = vmatprep.mubr.bf16.mxu0 0
      %3089 = vmatmul.mubr.bf16.gmra.mxu0 %v2989
      %v3090 = vpop.f32.mrf.mxu0
      %v3091 = vadd.f32 0.0, %v3090
      %v3092 = vpop.f32.mrf.mxu0
      %v3093 = vpop.f32.mrf.mxu0
      %v3094 = vadd.f32 0.0, %v3093
      %v3095 = vpop.f32.mrf.mxu0
      %3096 = vmatprep.mubr.bf16.mxu0 0
      %3097 = vmatmul.mubr.bf16.gmra.mxu0 %v2990
      %v3098 = vpop.f32.mrf.mxu0
      %v3099 = vadd.f32 0.0, %v3098
      %v3100 = vpop.f32.mrf.mxu0
      %v3101 = vpop.f32.mrf.mxu0
      %v3102 = vadd.f32 0.0, %v3101
      %v3103 = vpop.f32.mrf.mxu0
      %3104 = vmatprep.mubr.bf16.mxu0 0
      %3105 = vmatmul.mubr.bf16.gmra.mxu0 %v2991
      %v3106 = vpop.f32.mrf.mxu0
      %v3107 = vadd.f32 0.0, %v3106
      %v3108 = vpop.f32.mrf.mxu0
      %v3109 = vpop.f32.mrf.mxu0
      %v3110 = vadd.f32 0.0, %v3109
      %v3111 = vpop.f32.mrf.mxu0
      %3112 = vdwg.mxu0
      %3129 = vrot.lane.b32.xlu0 %v3051, 48
      %v3130 = vpop.permute.xlu0 %3129
      %3131 = vrot.lane.b32.xlu0 %v3054, 48
      %v3132 = vpop.permute.xlu0 %3131
      %3133 = vrot.lane.b32.xlu0 %v3059, 48
      %v3134 = vpop.permute.xlu0 %3133
      %3135 = vrot.lane.b32.xlu0 %v3062, 48
      %v3136 = vpop.permute.xlu0 %3135
      %3137 = vrot.lane.b32.xlu0 %v3067, 48
      %v3138 = vpop.permute.xlu0 %3137
      %3139 = vrot.lane.b32.xlu0 %v3070, 48
      %v3140 = vpop.permute.xlu0 %3139
      %3141 = vrot.lane.b32.xlu0 %v3075, 48
      %v3142 = vpop.permute.xlu0 %3141
      %3143 = vrot.lane.b32.xlu0 %v3078, 48
      %v3144 = vpop.permute.xlu0 %3143
      %3145 = vrot.lane.b32.xlu0 %v3083, 48
      %v3146 = vpop.permute.xlu0 %3145
      %3147 = vrot.lane.b32.xlu0 %v3086, 48
      %v3148 = vpop.permute.xlu0 %3147
      %3149 = vrot.lane.b32.xlu0 %v3091, 48
      %v3150 = vpop.permute.xlu0 %3149
      %3151 = vrot.lane.b32.xlu0 %v3094, 48
      %v3152 = vpop.permute.xlu0 %3151
      %3153 = vrot.lane.b32.xlu0 %v3099, 48
      %v3154 = vpop.permute.xlu0 %3153
      %3155 = vrot.lane.b32.xlu0 %v3102, 48
      %v3156 = vpop.permute.xlu0 %3155
      %3157 = vrot.lane.b32.xlu0 %v3107, 48
      %v3158 = vpop.permute.xlu0 %3157
      %3159 = vrot.lane.b32.xlu0 %v3110, 48
      %v3160 = vpop.permute.xlu0 %3159
      %vm3177 = vcmask 523648
      %3178 = vst.msk [vmem:[#allocation2] sm:$0xff] %vm3177, %v3130
      %3179 = vst.msk [vmem:[#allocation2 + $0x8] sm:$0xff] %vm3177, %v3132
      %3180 = vst.msk [vmem:[#allocation2 + $0x10] sm:$0xff] %vm3177, %v3134
      %3181 = vst.msk [vmem:[#allocation2 + $0x18] sm:$0xff] %vm3177, %v3136
      %3182 = vst.msk [vmem:[#allocation2 + $0x20] sm:$0xff] %vm3177, %v3138
      %3183 = vst.msk [vmem:[#allocation2 + $0x28] sm:$0xff] %vm3177, %v3140
      %3184 = vst.msk [vmem:[#allocation2 + $0x30] sm:$0xff] %vm3177, %v3142
      %3185 = vst.msk [vmem:[#allocation2 + $0x38] sm:$0xff] %vm3177, %v3144
      %3186 = vst.msk [vmem:[#allocation2 + $0x40] sm:$0xff] %vm3177, %v3146
      %3187 = vst.msk [vmem:[#allocation2 + $0x48] sm:$0xff] %vm3177, %v3148
      %3188 = vst.msk [vmem:[#allocation2 + $0x50] sm:$0xff] %vm3177, %v3150
      %3189 = vst.msk [vmem:[#allocation2 + $0x58] sm:$0xff] %vm3177, %v3152
      %3190 = vst.msk [vmem:[#allocation2 + $0x60] sm:$0xff] %vm3177, %v3154
      %3191 = vst.msk [vmem:[#allocation2 + $0x68] sm:$0xff] %vm3177, %v3156
      %3192 = vst.msk [vmem:[#allocation2 + $0x70] sm:$0xff] %vm3177, %v3158
      %3193 = vst.msk [vmem:[#allocation2 + $0x78] sm:$0xff] %vm3177, %v3160
      %v3194 = vld [vmem:[#allocation2] sm:$0xff]
      %v3195 = vld [vmem:[#allocation2 + $0x8] sm:$0xff]
      %v3196 = vld [vmem:[#allocation2 + $0x10] sm:$0xff]
      %v3197 = vld [vmem:[#allocation2 + $0x18] sm:$0xff]
      %v3198 = vld [vmem:[#allocation2 + $0x20] sm:$0xff]
      %v3199 = vld [vmem:[#allocation2 + $0x28] sm:$0xff]
      %v3200 = vld [vmem:[#allocation2 + $0x30] sm:$0xff]
      %v3201 = vld [vmem:[#allocation2 + $0x38] sm:$0xff]
      %v3202 = vld [vmem:[#allocation2 + $0x40] sm:$0xff]
      %v3203 = vld [vmem:[#allocation2 + $0x48] sm:$0xff]
      %v3204 = vld [vmem:[#allocation2 + $0x50] sm:$0xff]
      %v3205 = vld [vmem:[#allocation2 + $0x58] sm:$0xff]
      %v3206 = vld [vmem:[#allocation2 + $0x60] sm:$0xff]
      %v3207 = vld [vmem:[#allocation2 + $0x68] sm:$0xff]
      %v3208 = vld [vmem:[#allocation2 + $0x70] sm:$0xff]
      %v3209 = vld [vmem:[#allocation2 + $0x78] sm:$0xff]
      %v3210 = vpack.c.bf16 %v3195, %v3194
      %v3211 = vpack.c.bf16 %v3197, %v3196
      %v3212 = vpack.c.bf16 %v3199, %v3198
      %v3213 = vpack.c.bf16 %v3201, %v3200
      %v3214 = vpack.c.bf16 %v3203, %v3202
      %v3215 = vpack.c.bf16 %v3205, %v3204
      %v3216 = vpack.c.bf16 %v3207, %v3206
      %v3217 = vpack.c.bf16 %v3209, %v3208
      %v3218 = vld [vmem:[%s8] sm:$0xf]
      %v3219 = vld [vmem:[%s8 + $0x4] sm:$0xf]
      %v3220 = vld [vmem:[%s8 + $0x8] sm:$0xf]
      %v3221 = vld [vmem:[%s8 + $0xc] sm:$0xf]
      %v3222 = vld [vmem:[%s8 + $0x10] sm:$0xf]
      %v3223 = vld [vmem:[%s8 + $0x14] sm:$0xf]
      %v3224 = vld [vmem:[%s8 + $0x18] sm:$0xf]
      %v3225 = vld [vmem:[%s8 + $0x1c] sm:$0xf]
      %v3226 = vld [vmem:[%s9] sm:$0x1]
      %v3228 = vlaneseq
      %v3229 = vshrl.u32 %v3228, 7
      %v3230 = vsub.s32 0, %v3229
      %v3231 = vrot.slane %v3226, %v3230
      %v3241 = vunpack.c.l.b16 %v3218
      %v3242 = vunpack.c.l.b16 %v3219
      %v3243 = vunpack.c.l.b16 %v3220
      %v3244 = vunpack.c.l.b16 %v3221
      %v3245 = vunpack.c.l.b16 %v3222
      %v3246 = vunpack.c.l.b16 %v3223
      %v3247 = vunpack.c.l.b16 %v3224
      %v3248 = vunpack.c.l.b16 %v3225
      %v3249 = vpack.c.b16 %v3242, %v3241
      %v3250 = vpack.c.b16 %v3244, %v3243
      %v3251 = vpack.c.b16 %v3246, %v3245
      %v3252 = vpack.c.b16 %v3248, %v3247
      %v3258 = vsel %vm588, %v3210, 0
      %v3261 = vsel %vm588, %v3211, 0
      %v3264 = vsel %vm588, %v3212, 0
      %v3267 = vsel %vm588, %v3213, 0
      %v3270 = vsel %vm588, %v3214, 0
      %v3273 = vsel %vm588, %v3215, 0
      %v3276 = vsel %vm588, %v3216, 0
      %v3279 = vsel %vm588, %v3217, 0
      %3281 = vmatprep.subr.bf16.mxu0 0
      %3282 = vmatpush1.bf16.msra.mxu0 0
      %3283 = vmatprep.subr.bf16.mxu0 0
      %3284 = vmatpush1.bf16.msra.mxu0 0
      %3285 = vmatprep.subr.bf16.mxu0 0
      %3286 = vmatpush1.bf16.msra.mxu0 0
      %3287 = vmatprep.subr.bf16.mxu0 0
      %3288 = vmatpush1.bf16.msra.mxu0 0
      %3289 = vmatprep.subr.bf16.mxu0 0
      %3290 = vmatpush1.bf16.msra.mxu0 %v3252
      %3291 = vmatprep.subr.bf16.mxu0 0
      %3292 = vmatpush1.bf16.msra.mxu0 %v3251
      %3293 = vmatprep.subr.bf16.mxu0 0
      %3294 = vmatpush1.bf16.msra.mxu0 %v3250
      %3295 = vmatprep.subr.bf16.mxu0 0
      %3296 = vmatpush1.bf16.msra.mxu0 %v3249
      %3297 = vmatprep.subr.bf16.mxu0 0
      %3298 = vmatpush2.bf16.msra.mxu0 0
      %3299 = vmatprep.subr.bf16.mxu0 0
      %3300 = vmatpush2.bf16.msra.mxu0 0
      %3301 = vmatprep.subr.bf16.mxu0 0
      %3302 = vmatpush2.bf16.msra.mxu0 0
      %3303 = vmatprep.subr.bf16.mxu0 0
      %3304 = vmatpush2.bf16.msra.mxu0 0
      %3305 = vmatprep.subr.bf16.mxu0 0
      %3306 = vmatpush2.bf16.msra.mxu0 0
      %3307 = vmatprep.subr.bf16.mxu0 0
      %3308 = vmatpush2.bf16.msra.mxu0 0
      %3309 = vmatprep.subr.bf16.mxu0 0
      %3310 = vmatpush2.bf16.msra.mxu0 0
      %3311 = vmatprep.subr.bf16.mxu0 0
      %3312 = vmatpush2.bf16.msra.mxu0 0
      %3313 = vmatprep.mubr.bf16.mxu0 0
      %3314 = vmatmul.mubr.bf16.gmra.mxu0 %v3258
      %v3315 = vpop.f32.mrf.mxu0
      %v3316 = vadd.f32 %v3231, %v3315
      %v3317 = vpop.f32.mrf.mxu0
      %v3318 = vpop.f32.mrf.mxu0
      %v3319 = vadd.f32 %v3231, %v3318
      %v3320 = vpop.f32.mrf.mxu0
      %3321 = vmatprep.mubr.bf16.mxu0 0
      %3322 = vmatmul.mubr.bf16.gmra.mxu0 %v3261
      %v3323 = vpop.f32.mrf.mxu0
      %v3324 = vadd.f32 %v3231, %v3323
      %v3325 = vpop.f32.mrf.mxu0
      %v3326 = vpop.f32.mrf.mxu0
      %v3327 = vadd.f32 %v3231, %v3326
      %v3328 = vpop.f32.mrf.mxu0
      %3329 = vmatprep.mubr.bf16.mxu0 0
      %3330 = vmatmul.mubr.bf16.gmra.mxu0 %v3264
      %v3331 = vpop.f32.mrf.mxu0
      %v3332 = vadd.f32 %v3231, %v3331
      %v3333 = vpop.f32.mrf.mxu0
      %v3334 = vpop.f32.mrf.mxu0
      %v3335 = vadd.f32 %v3231, %v3334
      %v3336 = vpop.f32.mrf.mxu0
      %3337 = vmatprep.mubr.bf16.mxu0 0
      %3338 = vmatmul.mubr.bf16.gmra.mxu0 %v3267
      %v3339 = vpop.f32.mrf.mxu0
      %v3340 = vadd.f32 %v3231, %v3339
      %v3341 = vpop.f32.mrf.mxu0
      %v3342 = vpop.f32.mrf.mxu0
      %v3343 = vadd.f32 %v3231, %v3342
      %v3344 = vpop.f32.mrf.mxu0
      %3345 = vmatprep.mubr.bf16.mxu0 0
      %3346 = vmatmul.mubr.bf16.gmra.mxu0 %v3270
      %v3347 = vpop.f32.mrf.mxu0
      %v3348 = vadd.f32 %v3231, %v3347
      %v3349 = vpop.f32.mrf.mxu0
      %v3350 = vpop.f32.mrf.mxu0
      %v3351 = vadd.f32 %v3231, %v3350
      %v3352 = vpop.f32.mrf.mxu0
      %3353 = vmatprep.mubr.bf16.mxu0 0
      %3354 = vmatmul.mubr.bf16.gmra.mxu0 %v3273
      %v3355 = vpop.f32.mrf.mxu0
      %v3356 = vadd.f32 %v3231, %v3355
      %v3357 = vpop.f32.mrf.mxu0
      %v3358 = vpop.f32.mrf.mxu0
      %v3359 = vadd.f32 %v3231, %v3358
      %v3360 = vpop.f32.mrf.mxu0
      %3361 = vmatprep.mubr.bf16.mxu0 0
      %3362 = vmatmul.mubr.bf16.gmra.mxu0 %v3276
      %v3363 = vpop.f32.mrf.mxu0
      %v3364 = vadd.f32 %v3231, %v3363
      %v3365 = vpop.f32.mrf.mxu0
      %v3366 = vpop.f32.mrf.mxu0
      %v3367 = vadd.f32 %v3231, %v3366
      %v3368 = vpop.f32.mrf.mxu0
      %3369 = vmatprep.mubr.bf16.mxu0 0
      %3370 = vmatmul.mubr.bf16.gmra.mxu0 %v3279
      %v3371 = vpop.f32.mrf.mxu0
      %v3372 = vadd.f32 %v3231, %v3371
      %v3373 = vpop.f32.mrf.mxu0
      %v3374 = vpop.f32.mrf.mxu0
      %v3375 = vadd.f32 %v3231, %v3374
      %v3376 = vpop.f32.mrf.mxu0
      %3377 = vdwg.mxu0
      %v3378 = vadd.f32 %v521, %v3316
      %v3379 = vadd.f32 %v522, %v3319
      %v3380 = vadd.f32 %v523, %v3324
      %v3381 = vadd.f32 %v524, %v3327
      %v3382 = vadd.f32 %v525, %v3332
      %v3383 = vadd.f32 %v526, %v3335
      %v3384 = vadd.f32 %v527, %v3340
      %v3385 = vadd.f32 %v528, %v3343
      %v3386 = vadd.f32 %v529, %v3348
      %v3387 = vadd.f32 %v530, %v3351
      %v3388 = vadd.f32 %v531, %v3356
      %v3389 = vadd.f32 %v532, %v3359
      %v3390 = vadd.f32 %v533, %v3364
      %v3391 = vadd.f32 %v534, %v3367
      %v3392 = vadd.f32 %v535, %v3372
      %v3393 = vadd.f32 %v536, %v3375
      %v3394 = vld [vmem:[%s10] sm:$0x1]
      %v3395 = vld [vmem:[%s11] sm:$0x1]
      %v3396 = vsel %vm588, %v3378, 0.0
      %3397 = vadd.xlane.f32.xlu0 %v3396
      %v3398 = vpop.xlane.xlu0 %3397
      %v3399 = vsel %vm588, %v3379, 0.0
      %3400 = vadd.xlane.f32.xlu0 %v3399
      %v3401 = vpop.xlane.xlu0 %3400
      %v3402 = vsel %vm588, %v3380, 0.0
      %3403 = vadd.xlane.f32.xlu0 %v3402
      %v3404 = vpop.xlane.xlu0 %3403
      %v3405 = vsel %vm588, %v3381, 0.0
      %3406 = vadd.xlane.f32.xlu0 %v3405
      %v3407 = vpop.xlane.xlu0 %3406
      %v3408 = vsel %vm588, %v3382, 0.0
      %3409 = vadd.xlane.f32.xlu0 %v3408
      %v3410 = vpop.xlane.xlu0 %3409
      %v3411 = vsel %vm588, %v3383, 0.0
      %3412 = vadd.xlane.f32.xlu0 %v3411
      %v3413 = vpop.xlane.xlu0 %3412
      %v3414 = vsel %vm588, %v3384, 0.0
      %3415 = vadd.xlane.f32.xlu0 %v3414
      %v3416 = vpop.xlane.xlu0 %3415
      %v3417 = vsel %vm588, %v3385, 0.0
      %3418 = vadd.xlane.f32.xlu0 %v3417
      %v3419 = vpop.xlane.xlu0 %3418
      %v3420 = vsel %vm588, %v3386, 0.0
      %3421 = vadd.xlane.f32.xlu0 %v3420
      %v3422 = vpop.xlane.xlu0 %3421
      %v3423 = vsel %vm588, %v3387, 0.0
      %3424 = vadd.xlane.f32.xlu0 %v3423
      %v3425 = vpop.xlane.xlu0 %3424
      %v3426 = vsel %vm588, %v3388, 0.0
      %3427 = vadd.xlane.f32.xlu0 %v3426
      %v3428 = vpop.xlane.xlu0 %3427
      %v3429 = vsel %vm588, %v3389, 0.0
      %3430 = vadd.xlane.f32.xlu0 %v3429
      %v3431 = vpop.xlane.xlu0 %3430
      %v3432 = vsel %vm588, %v3390, 0.0
      %3433 = vadd.xlane.f32.xlu0 %v3432
      %v3434 = vpop.xlane.xlu0 %3433
      %v3435 = vsel %vm588, %v3391, 0.0
      %3436 = vadd.xlane.f32.xlu0 %v3435
      %v3437 = vpop.xlane.xlu0 %3436
      %v3438 = vsel %vm588, %v3392, 0.0
      %3439 = vadd.xlane.f32.xlu0 %v3438
      %v3440 = vpop.xlane.xlu0 %3439
      %v3441 = vsel %vm588, %v3393, 0.0
      %3442 = vadd.xlane.f32.xlu0 %v3441
      %v3443 = vpop.xlane.xlu0 %3442
      %v3444 = vmul.f32 %v3398, 0.015625
      %v3445 = vmul.f32 %v3401, 0.015625
      %v3446 = vmul.f32 %v3404, 0.015625
      %v3447 = vmul.f32 %v3407, 0.015625
      %v3448 = vmul.f32 %v3410, 0.015625
      %v3449 = vmul.f32 %v3413, 0.015625
      %v3450 = vmul.f32 %v3416, 0.015625
      %v3451 = vmul.f32 %v3419, 0.015625
      %v3452 = vmul.f32 %v3422, 0.015625
      %v3453 = vmul.f32 %v3425, 0.015625
      %v3454 = vmul.f32 %v3428, 0.015625
      %v3455 = vmul.f32 %v3431, 0.015625
      %v3456 = vmul.f32 %v3434, 0.015625
      %v3457 = vmul.f32 %v3437, 0.015625
      %v3458 = vmul.f32 %v3440, 0.015625
      %v3459 = vmul.f32 %v3443, 0.015625
      %v3460 = vsub.f32 %v3378, %v3444
      %v3461 = vsub.f32 %v3379, %v3445
      %v3462 = vsub.f32 %v3380, %v3446
      %v3463 = vsub.f32 %v3381, %v3447
      %v3464 = vsub.f32 %v3382, %v3448
      %v3465 = vsub.f32 %v3383, %v3449
      %v3466 = vsub.f32 %v3384, %v3450
      %v3467 = vsub.f32 %v3385, %v3451
      %v3468 = vsub.f32 %v3386, %v3452
      %v3469 = vsub.f32 %v3387, %v3453
      %v3470 = vsub.f32 %v3388, %v3454
      %v3471 = vsub.f32 %v3389, %v3455
      %v3472 = vsub.f32 %v3390, %v3456
      %v3473 = vsub.f32 %v3391, %v3457
      %v3474 = vsub.f32 %v3392, %v3458
      %v3475 = vsub.f32 %v3393, %v3459
      %v3476 = vmul.f32 %v3460, %v3460
      %v3477 = vmul.f32 %v3461, %v3461
      %v3478 = vmul.f32 %v3462, %v3462
      %v3479 = vmul.f32 %v3463, %v3463
      %v3480 = vmul.f32 %v3464, %v3464
      %v3481 = vmul.f32 %v3465, %v3465
      %v3482 = vmul.f32 %v3466, %v3466
      %v3483 = vmul.f32 %v3467, %v3467
      %v3484 = vmul.f32 %v3468, %v3468
      %v3485 = vmul.f32 %v3469, %v3469
      %v3486 = vmul.f32 %v3470, %v3470
      %v3487 = vmul.f32 %v3471, %v3471
      %v3488 = vmul.f32 %v3472, %v3472
      %v3489 = vmul.f32 %v3473, %v3473
      %v3490 = vmul.f32 %v3474, %v3474
      %v3491 = vmul.f32 %v3475, %v3475
      %v3492 = vsel %vm588, %v3476, 0.0
      %3493 = vadd.xlane.f32.xlu0 %v3492
      %v3494 = vpop.xlane.xlu0 %3493
      %v3495 = vsel %vm588, %v3477, 0.0
      %3496 = vadd.xlane.f32.xlu0 %v3495
      %v3497 = vpop.xlane.xlu0 %3496
      %v3498 = vsel %vm588, %v3478, 0.0
      %3499 = vadd.xlane.f32.xlu0 %v3498
      %v3500 = vpop.xlane.xlu0 %3499
      %v3501 = vsel %vm588, %v3479, 0.0
      %3502 = vadd.xlane.f32.xlu0 %v3501
      %v3503 = vpop.xlane.xlu0 %3502
      %v3504 = vsel %vm588, %v3480, 0.0
      %3505 = vadd.xlane.f32.xlu0 %v3504
      %v3506 = vpop.xlane.xlu0 %3505
      %v3507 = vsel %vm588, %v3481, 0.0
      %3508 = vadd.xlane.f32.xlu0 %v3507
      %v3509 = vpop.xlane.xlu0 %3508
      %v3510 = vsel %vm588, %v3482, 0.0
      %3511 = vadd.xlane.f32.xlu0 %v3510
      %v3512 = vpop.xlane.xlu0 %3511
      %v3513 = vsel %vm588, %v3483, 0.0
      %3514 = vadd.xlane.f32.xlu0 %v3513
      %v3515 = vpop.xlane.xlu0 %3514
      %v3516 = vsel %vm588, %v3484, 0.0
      %3517 = vadd.xlane.f32.xlu0 %v3516
      %v3518 = vpop.xlane.xlu0 %3517
      %v3519 = vsel %vm588, %v3485, 0.0
      %3520 = vadd.xlane.f32.xlu0 %v3519
      %v3521 = vpop.xlane.xlu0 %3520
      %v3522 = vsel %vm588, %v3486, 0.0
      %3523 = vadd.xlane.f32.xlu0 %v3522
      %v3524 = vpop.xlane.xlu0 %3523
      %v3525 = vsel %vm588, %v3487, 0.0
      %3526 = vadd.xlane.f32.xlu0 %v3525
      %v3527 = vpop.xlane.xlu0 %3526
      %v3528 = vsel %vm588, %v3488, 0.0
      %3529 = vadd.xlane.f32.xlu0 %v3528
      %v3530 = vpop.xlane.xlu0 %3529
      %v3531 = vsel %vm588, %v3489, 0.0
      %3532 = vadd.xlane.f32.xlu0 %v3531
      %v3533 = vpop.xlane.xlu0 %3532
      %v3534 = vsel %vm588, %v3490, 0.0
      %3535 = vadd.xlane.f32.xlu0 %v3534
      %v3536 = vpop.xlane.xlu0 %3535
      %v3537 = vsel %vm588, %v3491, 0.0
      %3538 = vadd.xlane.f32.xlu0 %v3537
      %v3539 = vpop.xlane.xlu0 %3538
      %v3540 = vmul.f32 %v3494, 0.015625
      %v3541 = vmul.f32 %v3497, 0.015625
      %v3542 = vmul.f32 %v3500, 0.015625
      %v3543 = vmul.f32 %v3503, 0.015625
      %v3544 = vmul.f32 %v3506, 0.015625
      %v3545 = vmul.f32 %v3509, 0.015625
      %v3546 = vmul.f32 %v3512, 0.015625
      %v3547 = vmul.f32 %v3515, 0.015625
      %v3548 = vmul.f32 %v3518, 0.015625
      %v3549 = vmul.f32 %v3521, 0.015625
      %v3550 = vmul.f32 %v3524, 0.015625
      %v3551 = vmul.f32 %v3527, 0.015625
      %v3552 = vmul.f32 %v3530, 0.015625
      %v3553 = vmul.f32 %v3533, 0.015625
      %v3554 = vmul.f32 %v3536, 0.015625
      %v3555 = vmul.f32 %v3539, 0.015625
      %v3556 = vadd.f32 %v3540, 1e-05
      %v3557 = vadd.f32 %v3541, 1e-05
      %v3558 = vadd.f32 %v3542, 1e-05
      %v3559 = vadd.f32 %v3543, 1e-05
      %v3560 = vadd.f32 %v3544, 1e-05
      %v3561 = vadd.f32 %v3545, 1e-05
      %v3562 = vadd.f32 %v3546, 1e-05
      %v3563 = vadd.f32 %v3547, 1e-05
      %v3564 = vadd.f32 %v3548, 1e-05
      %v3565 = vadd.f32 %v3549, 1e-05
      %v3566 = vadd.f32 %v3550, 1e-05
      %v3567 = vadd.f32 %v3551, 1e-05
      %v3568 = vadd.f32 %v3552, 1e-05
      %v3569 = vadd.f32 %v3553, 1e-05
      %v3570 = vadd.f32 %v3554, 1e-05
      %v3571 = vadd.f32 %v3555, 1e-05
      %v3572 = vrsqrt.pop %v3556
      %v3573 = vrsqrt.pop %v3557
      %v3574 = vrsqrt.pop %v3558
      %v3575 = vrsqrt.pop %v3559
      %v3576 = vrsqrt.pop %v3560
      %v3577 = vrsqrt.pop %v3561
      %v3578 = vrsqrt.pop %v3562
      %v3579 = vrsqrt.pop %v3563
      %v3580 = vrsqrt.pop %v3564
      %v3581 = vrsqrt.pop %v3565
      %v3582 = vrsqrt.pop %v3566
      %v3583 = vrsqrt.pop %v3567
      %v3584 = vrsqrt.pop %v3568
      %v3585 = vrsqrt.pop %v3569
      %v3586 = vrsqrt.pop %v3570
      %v3587 = vrsqrt.pop %v3571
      %v3588 = vmul.f32 %v3460, %v3572
      %v3589 = vmul.f32 %v3461, %v3573
      %v3590 = vmul.f32 %v3462, %v3574
      %v3591 = vmul.f32 %v3463, %v3575
      %v3592 = vmul.f32 %v3464, %v3576
      %v3593 = vmul.f32 %v3465, %v3577
      %v3594 = vmul.f32 %v3466, %v3578
      %v3595 = vmul.f32 %v3467, %v3579
      %v3596 = vmul.f32 %v3468, %v3580
      %v3597 = vmul.f32 %v3469, %v3581
      %v3598 = vmul.f32 %v3470, %v3582
      %v3599 = vmul.f32 %v3471, %v3583
      %v3600 = vmul.f32 %v3472, %v3584
      %v3601 = vmul.f32 %v3473, %v3585
      %v3602 = vmul.f32 %v3474, %v3586
      %v3603 = vmul.f32 %v3475, %v3587
      %v3605 = vlaneseq
      %v3606 = vshrl.u32 %v3605, 7
      %v3607 = vsub.s32 0, %v3606
      %v3608 = vrot.slane %v3394, %v3607
      %v3610 = vmul.f32 %v3588, %v3608
      %v3611 = vmul.f32 %v3589, %v3608
      %v3612 = vmul.f32 %v3590, %v3608
      %v3613 = vmul.f32 %v3591, %v3608
      %v3614 = vmul.f32 %v3592, %v3608
      %v3615 = vmul.f32 %v3593, %v3608
      %v3616 = vmul.f32 %v3594, %v3608
      %v3617 = vmul.f32 %v3595, %v3608
      %v3618 = vmul.f32 %v3596, %v3608
      %v3619 = vmul.f32 %v3597, %v3608
      %v3620 = vmul.f32 %v3598, %v3608
      %v3621 = vmul.f32 %v3599, %v3608
      %v3622 = vmul.f32 %v3600, %v3608
      %v3623 = vmul.f32 %v3601, %v3608
      %v3624 = vmul.f32 %v3602, %v3608
      %v3625 = vmul.f32 %v3603, %v3608
      %v3627 = vlaneseq
      %v3628 = vshrl.u32 %v3627, 7
      %v3629 = vsub.s32 0, %v3628
      %v3630 = vrot.slane %v3395, %v3629
      %v3632 = vadd.f32 %v3610, %v3630
      %v3633 = vadd.f32 %v3611, %v3630
      %v3634 = vadd.f32 %v3612, %v3630
      %v3635 = vadd.f32 %v3613, %v3630
      %v3636 = vadd.f32 %v3614, %v3630
      %v3637 = vadd.f32 %v3615, %v3630
      %v3638 = vadd.f32 %v3616, %v3630
      %v3639 = vadd.f32 %v3617, %v3630
      %v3640 = vadd.f32 %v3618, %v3630
      %v3641 = vadd.f32 %v3619, %v3630
      %v3642 = vadd.f32 %v3620, %v3630
      %v3643 = vadd.f32 %v3621, %v3630
      %v3644 = vadd.f32 %v3622, %v3630
      %v3645 = vadd.f32 %v3623, %v3630
      %v3646 = vadd.f32 %v3624, %v3630
      %v3647 = vadd.f32 %v3625, %v3630
      %v3648 = vadd.f32 %v489, %v3632
      %v3649 = vadd.f32 %v490, %v3633
      %v3650 = vadd.f32 %v491, %v3634
      %v3651 = vadd.f32 %v492, %v3635
      %v3652 = vadd.f32 %v493, %v3636
      %v3653 = vadd.f32 %v494, %v3637
      %v3654 = vadd.f32 %v495, %v3638
      %v3655 = vadd.f32 %v496, %v3639
      %v3656 = vadd.f32 %v497, %v3640
      %v3657 = vadd.f32 %v498, %v3641
      %v3658 = vadd.f32 %v499, %v3642
      %v3659 = vadd.f32 %v500, %v3643
      %v3660 = vadd.f32 %v501, %v3644
      %v3661 = vadd.f32 %v502, %v3645
      %v3662 = vadd.f32 %v503, %v3646
      %v3663 = vadd.f32 %v504, %v3647
      %v3664 = vld [vmem:[%s12] sm:$0x1]
      %v3665 = vld [vmem:[%s13] sm:$0x1]
      %v3666 = vsel %vm588, %v3648, 0.0
      %3667 = vadd.xlane.f32.xlu0 %v3666
      %v3668 = vpop.xlane.xlu0 %3667
      %v3669 = vsel %vm588, %v3649, 0.0
      %3670 = vadd.xlane.f32.xlu0 %v3669
      %v3671 = vpop.xlane.xlu0 %3670
      %v3672 = vsel %vm588, %v3650, 0.0
      %3673 = vadd.xlane.f32.xlu0 %v3672
      %v3674 = vpop.xlane.xlu0 %3673
      %v3675 = vsel %vm588, %v3651, 0.0
      %3676 = vadd.xlane.f32.xlu0 %v3675
      %v3677 = vpop.xlane.xlu0 %3676
      %v3678 = vsel %vm588, %v3652, 0.0
      %3679 = vadd.xlane.f32.xlu0 %v3678
      %v3680 = vpop.xlane.xlu0 %3679
      %v3681 = vsel %vm588, %v3653, 0.0
      %3682 = vadd.xlane.f32.xlu0 %v3681
      %v3683 = vpop.xlane.xlu0 %3682
      %v3684 = vsel %vm588, %v3654, 0.0
      %3685 = vadd.xlane.f32.xlu0 %v3684
      %v3686 = vpop.xlane.xlu0 %3685
      %v3687 = vsel %vm588, %v3655, 0.0
      %3688 = vadd.xlane.f32.xlu0 %v3687
      %v3689 = vpop.xlane.xlu0 %3688
      %v3690 = vsel %vm588, %v3656, 0.0
      %3691 = vadd.xlane.f32.xlu0 %v3690
      %v3692 = vpop.xlane.xlu0 %3691
      %v3693 = vsel %vm588, %v3657, 0.0
      %3694 = vadd.xlane.f32.xlu0 %v3693
      %v3695 = vpop.xlane.xlu0 %3694
      %v3696 = vsel %vm588, %v3658, 0.0
      %3697 = vadd.xlane.f32.xlu0 %v3696
      %v3698 = vpop.xlane.xlu0 %3697
      %v3699 = vsel %vm588, %v3659, 0.0
      %3700 = vadd.xlane.f32.xlu0 %v3699
      %v3701 = vpop.xlane.xlu0 %3700
      %v3702 = vsel %vm588, %v3660, 0.0
      %3703 = vadd.xlane.f32.xlu0 %v3702
      %v3704 = vpop.xlane.xlu0 %3703
      %v3705 = vsel %vm588, %v3661, 0.0
      %3706 = vadd.xlane.f32.xlu0 %v3705
      %v3707 = vpop.xlane.xlu0 %3706
      %v3708 = vsel %vm588, %v3662, 0.0
      %3709 = vadd.xlane.f32.xlu0 %v3708
      %v3710 = vpop.xlane.xlu0 %3709
      %v3711 = vsel %vm588, %v3663, 0.0
      %3712 = vadd.xlane.f32.xlu0 %v3711
      %v3713 = vpop.xlane.xlu0 %3712
      %v3714 = vmul.f32 %v3668, 0.015625
      %v3715 = vmul.f32 %v3671, 0.015625
      %v3716 = vmul.f32 %v3674, 0.015625
      %v3717 = vmul.f32 %v3677, 0.015625
      %v3718 = vmul.f32 %v3680, 0.015625
      %v3719 = vmul.f32 %v3683, 0.015625
      %v3720 = vmul.f32 %v3686, 0.015625
      %v3721 = vmul.f32 %v3689, 0.015625
      %v3722 = vmul.f32 %v3692, 0.015625
      %v3723 = vmul.f32 %v3695, 0.015625
      %v3724 = vmul.f32 %v3698, 0.015625
      %v3725 = vmul.f32 %v3701, 0.015625
      %v3726 = vmul.f32 %v3704, 0.015625
      %v3727 = vmul.f32 %v3707, 0.015625
      %v3728 = vmul.f32 %v3710, 0.015625
      %v3729 = vmul.f32 %v3713, 0.015625
      %v3730 = vsub.f32 %v3648, %v3714
      %v3731 = vsub.f32 %v3649, %v3715
      %v3732 = vsub.f32 %v3650, %v3716
      %v3733 = vsub.f32 %v3651, %v3717
      %v3734 = vsub.f32 %v3652, %v3718
      %v3735 = vsub.f32 %v3653, %v3719
      %v3736 = vsub.f32 %v3654, %v3720
      %v3737 = vsub.f32 %v3655, %v3721
      %v3738 = vsub.f32 %v3656, %v3722
      %v3739 = vsub.f32 %v3657, %v3723
      %v3740 = vsub.f32 %v3658, %v3724
      %v3741 = vsub.f32 %v3659, %v3725
      %v3742 = vsub.f32 %v3660, %v3726
      %v3743 = vsub.f32 %v3661, %v3727
      %v3744 = vsub.f32 %v3662, %v3728
      %v3745 = vsub.f32 %v3663, %v3729
      %v3746 = vmul.f32 %v3730, %v3730
      %v3747 = vmul.f32 %v3731, %v3731
      %v3748 = vmul.f32 %v3732, %v3732
      %v3749 = vmul.f32 %v3733, %v3733
      %v3750 = vmul.f32 %v3734, %v3734
      %v3751 = vmul.f32 %v3735, %v3735
      %v3752 = vmul.f32 %v3736, %v3736
      %v3753 = vmul.f32 %v3737, %v3737
      %v3754 = vmul.f32 %v3738, %v3738
      %v3755 = vmul.f32 %v3739, %v3739
      %v3756 = vmul.f32 %v3740, %v3740
      %v3757 = vmul.f32 %v3741, %v3741
      %v3758 = vmul.f32 %v3742, %v3742
      %v3759 = vmul.f32 %v3743, %v3743
      %v3760 = vmul.f32 %v3744, %v3744
      %v3761 = vmul.f32 %v3745, %v3745
      %v3762 = vsel %vm588, %v3746, 0.0
      %3763 = vadd.xlane.f32.xlu0 %v3762
      %v3764 = vpop.xlane.xlu0 %3763
      %v3765 = vsel %vm588, %v3747, 0.0
      %3766 = vadd.xlane.f32.xlu0 %v3765
      %v3767 = vpop.xlane.xlu0 %3766
      %v3768 = vsel %vm588, %v3748, 0.0
      %3769 = vadd.xlane.f32.xlu0 %v3768
      %v3770 = vpop.xlane.xlu0 %3769
      %v3771 = vsel %vm588, %v3749, 0.0
      %3772 = vadd.xlane.f32.xlu0 %v3771
      %v3773 = vpop.xlane.xlu0 %3772
      %v3774 = vsel %vm588, %v3750, 0.0
      %3775 = vadd.xlane.f32.xlu0 %v3774
      %v3776 = vpop.xlane.xlu0 %3775
      %v3777 = vsel %vm588, %v3751, 0.0
      %3778 = vadd.xlane.f32.xlu0 %v3777
      %v3779 = vpop.xlane.xlu0 %3778
      %v3780 = vsel %vm588, %v3752, 0.0
      %3781 = vadd.xlane.f32.xlu0 %v3780
      %v3782 = vpop.xlane.xlu0 %3781
      %v3783 = vsel %vm588, %v3753, 0.0
      %3784 = vadd.xlane.f32.xlu0 %v3783
      %v3785 = vpop.xlane.xlu0 %3784
      %v3786 = vsel %vm588, %v3754, 0.0
      %3787 = vadd.xlane.f32.xlu0 %v3786
      %v3788 = vpop.xlane.xlu0 %3787
      %v3789 = vsel %vm588, %v3755, 0.0
      %3790 = vadd.xlane.f32.xlu0 %v3789
      %v3791 = vpop.xlane.xlu0 %3790
      %v3792 = vsel %vm588, %v3756, 0.0
      %3793 = vadd.xlane.f32.xlu0 %v3792
      %v3794 = vpop.xlane.xlu0 %3793
      %v3795 = vsel %vm588, %v3757, 0.0
      %3796 = vadd.xlane.f32.xlu0 %v3795
      %v3797 = vpop.xlane.xlu0 %3796
      %v3798 = vsel %vm588, %v3758, 0.0
      %3799 = vadd.xlane.f32.xlu0 %v3798
      %v3800 = vpop.xlane.xlu0 %3799
      %v3801 = vsel %vm588, %v3759, 0.0
      %3802 = vadd.xlane.f32.xlu0 %v3801
      %v3803 = vpop.xlane.xlu0 %3802
      %v3804 = vsel %vm588, %v3760, 0.0
      %3805 = vadd.xlane.f32.xlu0 %v3804
      %v3806 = vpop.xlane.xlu0 %3805
      %v3807 = vsel %vm588, %v3761, 0.0
      %3808 = vadd.xlane.f32.xlu0 %v3807
      %v3809 = vpop.xlane.xlu0 %3808
      %v3810 = vmul.f32 %v3764, 0.015625
      %v3811 = vmul.f32 %v3767, 0.015625
      %v3812 = vmul.f32 %v3770, 0.015625
      %v3813 = vmul.f32 %v3773, 0.015625
      %v3814 = vmul.f32 %v3776, 0.015625
      %v3815 = vmul.f32 %v3779, 0.015625
      %v3816 = vmul.f32 %v3782, 0.015625
      %v3817 = vmul.f32 %v3785, 0.015625
      %v3818 = vmul.f32 %v3788, 0.015625
      %v3819 = vmul.f32 %v3791, 0.015625
      %v3820 = vmul.f32 %v3794, 0.015625
      %v3821 = vmul.f32 %v3797, 0.015625
      %v3822 = vmul.f32 %v3800, 0.015625
      %v3823 = vmul.f32 %v3803, 0.015625
      %v3824 = vmul.f32 %v3806, 0.015625
      %v3825 = vmul.f32 %v3809, 0.015625
      %v3826 = vadd.f32 %v3810, 1e-05
      %v3827 = vadd.f32 %v3811, 1e-05
      %v3828 = vadd.f32 %v3812, 1e-05
      %v3829 = vadd.f32 %v3813, 1e-05
      %v3830 = vadd.f32 %v3814, 1e-05
      %v3831 = vadd.f32 %v3815, 1e-05
      %v3832 = vadd.f32 %v3816, 1e-05
      %v3833 = vadd.f32 %v3817, 1e-05
      %v3834 = vadd.f32 %v3818, 1e-05
      %v3835 = vadd.f32 %v3819, 1e-05
      %v3836 = vadd.f32 %v3820, 1e-05
      %v3837 = vadd.f32 %v3821, 1e-05
      %v3838 = vadd.f32 %v3822, 1e-05
      %v3839 = vadd.f32 %v3823, 1e-05
      %v3840 = vadd.f32 %v3824, 1e-05
      %v3841 = vadd.f32 %v3825, 1e-05
      %v3842 = vrsqrt.pop %v3826
      %v3843 = vrsqrt.pop %v3827
      %v3844 = vrsqrt.pop %v3828
      %v3845 = vrsqrt.pop %v3829
      %v3846 = vrsqrt.pop %v3830
      %v3847 = vrsqrt.pop %v3831
      %v3848 = vrsqrt.pop %v3832
      %v3849 = vrsqrt.pop %v3833
      %v3850 = vrsqrt.pop %v3834
      %v3851 = vrsqrt.pop %v3835
      %v3852 = vrsqrt.pop %v3836
      %v3853 = vrsqrt.pop %v3837
      %v3854 = vrsqrt.pop %v3838
      %v3855 = vrsqrt.pop %v3839
      %v3856 = vrsqrt.pop %v3840
      %v3857 = vrsqrt.pop %v3841
      %v3858 = vmul.f32 %v3730, %v3842
      %v3859 = vmul.f32 %v3731, %v3843
      %v3860 = vmul.f32 %v3732, %v3844
      %v3861 = vmul.f32 %v3733, %v3845
      %v3862 = vmul.f32 %v3734, %v3846
      %v3863 = vmul.f32 %v3735, %v3847
      %v3864 = vmul.f32 %v3736, %v3848
      %v3865 = vmul.f32 %v3737, %v3849
      %v3866 = vmul.f32 %v3738, %v3850
      %v3867 = vmul.f32 %v3739, %v3851
      %v3868 = vmul.f32 %v3740, %v3852
      %v3869 = vmul.f32 %v3741, %v3853
      %v3870 = vmul.f32 %v3742, %v3854
      %v3871 = vmul.f32 %v3743, %v3855
      %v3872 = vmul.f32 %v3744, %v3856
      %v3873 = vmul.f32 %v3745, %v3857
      %v3875 = vlaneseq
      %v3876 = vshrl.u32 %v3875, 7
      %v3877 = vsub.s32 0, %v3876
      %v3878 = vrot.slane %v3664, %v3877
      %v3880 = vmul.f32 %v3858, %v3878
      %v3881 = vmul.f32 %v3859, %v3878
      %v3882 = vmul.f32 %v3860, %v3878
      %v3883 = vmul.f32 %v3861, %v3878
      %v3884 = vmul.f32 %v3862, %v3878
      %v3885 = vmul.f32 %v3863, %v3878
      %v3886 = vmul.f32 %v3864, %v3878
      %v3887 = vmul.f32 %v3865, %v3878
      %v3888 = vmul.f32 %v3866, %v3878
      %v3889 = vmul.f32 %v3867, %v3878
      %v3890 = vmul.f32 %v3868, %v3878
      %v3891 = vmul.f32 %v3869, %v3878
      %v3892 = vmul.f32 %v3870, %v3878
      %v3893 = vmul.f32 %v3871, %v3878
      %v3894 = vmul.f32 %v3872, %v3878
      %v3895 = vmul.f32 %v3873, %v3878
      %v3897 = vlaneseq
      %v3898 = vshrl.u32 %v3897, 7
      %v3899 = vsub.s32 0, %v3898
      %v3900 = vrot.slane %v3665, %v3899
      %v3902 = vadd.f32 %v3880, %v3900
      %v3903 = vadd.f32 %v3881, %v3900
      %v3904 = vadd.f32 %v3882, %v3900
      %v3905 = vadd.f32 %v3883, %v3900
      %v3906 = vadd.f32 %v3884, %v3900
      %v3907 = vadd.f32 %v3885, %v3900
      %v3908 = vadd.f32 %v3886, %v3900
      %v3909 = vadd.f32 %v3887, %v3900
      %v3910 = vadd.f32 %v3888, %v3900
      %v3911 = vadd.f32 %v3889, %v3900
      %v3912 = vadd.f32 %v3890, %v3900
      %v3913 = vadd.f32 %v3891, %v3900
      %v3914 = vadd.f32 %v3892, %v3900
      %v3915 = vadd.f32 %v3893, %v3900
      %v3916 = vadd.f32 %v3894, %v3900
      %v3917 = vadd.f32 %v3895, %v3900
      %3918 = vst.msk [vmem:[%s487] sm:$0xff] %vm588, %v3902
      %3919 = vst.msk [vmem:[%s487 + $0x8] sm:$0xff] %vm588, %v3903
      %3920 = vst.msk [vmem:[%s487 + $0x10] sm:$0xff] %vm588, %v3904
      %3921 = vst.msk [vmem:[%s487 + $0x18] sm:$0xff] %vm588, %v3905
      %3922 = vst.msk [vmem:[%s487 + $0x20] sm:$0xff] %vm588, %v3906
      %3923 = vst.msk [vmem:[%s487 + $0x28] sm:$0xff] %vm588, %v3907
      %3924 = vst.msk [vmem:[%s487 + $0x30] sm:$0xff] %vm588, %v3908
      %3925 = vst.msk [vmem:[%s487 + $0x38] sm:$0xff] %vm588, %v3909
      %3926 = vst.msk [vmem:[%s487 + $0x40] sm:$0xff] %vm588, %v3910
      %3927 = vst.msk [vmem:[%s487 + $0x48] sm:$0xff] %vm588, %v3911
      %3928 = vst.msk [vmem:[%s487 + $0x50] sm:$0xff] %vm588, %v3912
      %3929 = vst.msk [vmem:[%s487 + $0x58] sm:$0xff] %vm588, %v3913
      %3930 = vst.msk [vmem:[%s487 + $0x60] sm:$0xff] %vm588, %v3914
      %3931 = vst.msk [vmem:[%s487 + $0x68] sm:$0xff] %vm588, %v3915
      %3932 = vst.msk [vmem:[%s487 + $0x70] sm:$0xff] %vm588, %v3916
      %3933 = vst.msk [vmem:[%s487 + $0x78] sm:$0xff] %vm588, %v3917
      %p3934 = scmp.lt.s32.totalorder %s25, 1
      %s3935 = scalar_select %p3934, %s25, 1
      %s3936 = smul.addr %s3935, 16
      %s3937 = smul.addr %s3936, 8
      %s3938 = scalar_lea.vmem %s14, %s3937
      // Predicated region
      $region77: #{tpu_custom_call.1} parent=75 // pred_check
        %p3939 = pneg %p347
      $region78: #{tpu_custom_call.1} parent=75 // pred_check_branch
        %3941 = sbr.rel (%p3939) target = $region80
      $region79: #{tpu_custom_call.1} parent=75 // pred_region
        _
      $region80: #{tpu_custom_call.1} parent=75 // pred_fallthru
        _
    $region76: #{tpu_custom_call.1} parent=5 // pred_fallthru
      _
    %p3942 = scmp.le.s32.totalorder 2, %s20
    // Predicated region
    $region81: #{tpu_custom_call.1} parent=5 // pred_check
      %p3943 = pneg %p3942
    $region82: #{tpu_custom_call.1} parent=5 // pred_check_branch
      %3945 = sbr.rel (%p3943) target = $region84
    $region83: #{tpu_custom_call.1} parent=5 // pred_region
      %s3946 = ssub.s32 %s20, 2
      // Predicated region
      $region85: #{tpu_custom_call.1} parent=83 // pred_check
        %p3947 = pneg %p353
      $region86: #{tpu_custom_call.1} parent=83 // pred_check_branch
        %3949 = sbr.rel (%p3947) target = $region88
      $region87: #{tpu_custom_call.1} parent=83 // pred_region
        %p3950 = scmp.lt.s32.totalorder %s26, 1
        %s3951 = scalar_select %p3950, %s26, 1
        %s3952 = smul.addr %s3951, 16
        %s3953 = smul.addr %s3952, 8
        %s3954 = scalar_lea.vmem %s14, %s3953
      $region88: #{tpu_custom_call.1} parent=83 // pred_fallthru
        _
    $region84: #{tpu_custom_call.1} parent=5 // pred_fallthru
      _
  $region6: #{tpu_custom_call.1} parent=0 // loop_footer
    %s24 = sadd.s32 1, %s20
  $region7: #{tpu_custom_call.1} parent=0 // loop_footer_branch
    %19 = sbr.rel target = $region3
  $region8: #{tpu_custom_call.1} parent=0 // loop_exit
    _

</llo_original>
